<compile_context>
chip_gen: v7x
topology: tpu7x:2x2x1
jax: 0.10.0
libtpu: 0.0.40
codegen_flags: <defaults>
</compile_context>

<pallas_src>
import functools

import jax
import jax.numpy as jnp
from jax import lax
from jax.experimental import pallas as pl
from jax.experimental.pallas import tpu as pltpu

LEAK = 0.2      # LeakyReLU negative slope
BN_EPS = 1e-3   # BatchNorm2d eps=0.001


def _vmem_limit(live_bytes):
    # Explicit scoped-VMEM budget: 2x for double-buffering + headroom,
    # floored at 32 MiB, capped at 64 MiB (v7x physical VMEM per TensorCore).
    return int(min(max(2 * live_bytes + (4 << 20), 32 << 20), 64 << 20))


# ---------------------------------------------------------------------------
# Kernel A: per-channel sum / sum-of-squares reduction for BN1 statistics.
# Accumulator outputs stay VMEM-resident across the image grid.
# ---------------------------------------------------------------------------
def _bn_stats_kernel(x_ref, sum_ref, sq_ref):
    @pl.when(pl.program_id(0) == 0)
    def _():
        sum_ref[...] = jnp.zeros_like(sum_ref)
        sq_ref[...] = jnp.zeros_like(sq_ref)

    x = x_ref[0]                                          # (H, W, C)
    s1 = jnp.sum(x, axis=0)                               # (W, C)
    s2 = jnp.sum(x * x, axis=0)                           # (W, C)
    sum_ref[...] += jnp.sum(s1, axis=0, keepdims=True)    # (1, C)
    sq_ref[...] += jnp.sum(s2, axis=0, keepdims=True)     # (1, C)


def _bn_stats(x_nhwc):
    n, h, w, c = x_nhwc.shape
    vmem = _vmem_limit(4 * h * w * c * 2 + (1 << 20))
    return pl.pallas_call(
        _bn_stats_kernel,
        out_shape=(jax.ShapeDtypeStruct((1, c), jnp.float32),
                   jax.ShapeDtypeStruct((1, c), jnp.float32)),
        grid=(n,),
        in_specs=[pl.BlockSpec((1, h, w, c), lambda i: (i, 0, 0, 0))],
        out_specs=(pl.BlockSpec((1, c), lambda i: (0, 0)),
                   pl.BlockSpec((1, c), lambda i: (0, 0))),
        compiler_params=pltpu.CompilerParams(
            dimension_semantics=("arbitrary",),       # accumulators across grid
            vmem_limit_bytes=vmem),
    )(x_nhwc)


def _bn_fold(ssum, ssq, count, gamma, beta):
    """Training-mode BatchNorm2d batch stats (biased var) folded to scale/shift."""
    mean = ssum / count
    var = jnp.maximum(ssq / count - mean * mean, 0.0)
    scale = gamma * lax.rsqrt(var + BN_EPS)
    shift = beta - mean * scale
    return scale, shift


# ---------------------------------------------------------------------------
# Shared compute core: BN(scale/shift) -> LeakyReLU(0.2) -> zero-pad -> im2col
# -> one (H*W, 9*Cin) @ (9*Cin, Cout) MXU matmul + bias.
# ---------------------------------------------------------------------------
def _bn_lrelu_conv3x3_core(x, scale, shift, w_ref, b_ref, *, h, w, mm_dtype):
    cin = x.shape[-1]
    a = x * scale + shift                                 # BN (pre-folded)
    a = jnp.where(a >= 0, a, LEAK * a)                    # LeakyReLU(0.2)

    # Zero-pad the post-activation map: (H, W) -> (H+2, W+2)  (exact Conv2d pad)
    zrow = jnp.zeros((1, w, cin), jnp.float32)
    ap = jnp.concatenate([zrow, a, zrow], axis=0)         # (H+2, W,   Cin)
    zcol = jnp.zeros((h + 2, 1, cin), jnp.float32)
    ap = jnp.concatenate([zcol, ap, zcol], axis=1)        # (H+2, W+2, Cin)

    # im2col: 9 static tap slices -> single K = 9*Cin matmul on the MXU.
    cols = [ap[ki:ki + h, kj:kj + w, :] for ki in range(3) for kj in range(3)]
    patch = jnp.concatenate(cols, axis=2).reshape(h * w, 9 * cin)
    y = jnp.dot(patch.astype(mm_dtype), w_ref[...].astype(mm_dtype),
                preferred_element_type=jnp.float32)
    return y + b_ref[...]                                 # (H*W, Cout), f32


# ---------------------------------------------------------------------------
# Kernel B: conv1 with fused BN2 statistics of its own output (saves a full
# HBM pass over x1 and an extra kernel launch).
# ---------------------------------------------------------------------------
def _conv1_kernel(x_ref, scale_ref, shift_ref, w_ref, b_ref,
                  o_ref, sum_ref, sq_ref, *, h, w, mm_dtype):
    @pl.when(pl.program_id(0) == 0)
    def _():
        sum_ref[...] = jnp.zeros_like(sum_ref)
        sq_ref[...] = jnp.zeros_like(sq_ref)

    cout = o_ref.shape[-1]
    y = _bn_lrelu_conv3x3_core(x_ref[0], scale_ref[...], shift_ref[...],
                               w_ref, b_ref, h=h, w=w, mm_dtype=mm_dtype)
    o_ref[0] = y.reshape(h, w, cout).astype(o_ref.dtype)
    # BN2 batch statistics of the conv1 output, accumulated across the grid.
    sum_ref[...] += jnp.sum(y, axis=0, keepdims=True)
    sq_ref[...] += jnp.sum(y * y, axis=0, keepdims=True)


def _conv1_with_stats(x_nhwc, scale, shift, w_mat, b, *, mm_dtype=jnp.float32):
    n, h, w, cin = x_nhwc.shape
    cout = w_mat.shape[-1]
    hw = h * w
    live = 4 * hw * (2 * (cin + cout) + 12 * cin + 2 * cout)
    kern = functools.partial(_conv1_kernel, h=h, w=w, mm_dtype=mm_dtype)
    return pl.pallas_call(
        kern,
        out_shape=(jax.ShapeDtypeStruct((n, h, w, cout), jnp.float32),
                   jax.ShapeDtypeStruct((1, cout), jnp.float32),
                   jax.ShapeDtypeStruct((1, cout), jnp.float32)),
        grid=(n,),
        in_specs=[pl.BlockSpec((1, h, w, cin), lambda i: (i, 0, 0, 0)),  # x
                  pl.BlockSpec((1, cin), lambda i: (0, 0)),              # BN scale
                  pl.BlockSpec((1, cin), lambda i: (0, 0)),              # BN shift
                  pl.BlockSpec(w_mat.shape, lambda i: (0, 0)),           # (9*Cin, Cout)
                  pl.BlockSpec((1, cout), lambda i: (0, 0))],            # bias
        out_specs=(pl.BlockSpec((1, h, w, cout), lambda i: (i, 0, 0, 0)),
                   pl.BlockSpec((1, cout), lambda i: (0, 0)),            # sum acc
                   pl.BlockSpec((1, cout), lambda i: (0, 0))),           # sumsq acc
        compiler_params=pltpu.CompilerParams(
            dimension_semantics=("arbitrary",),       # accumulator outputs
            vmem_limit_bytes=_vmem_limit(live)),
    )(x_nhwc, scale, shift, w_mat, b)


# ---------------------------------------------------------------------------
# Kernel C: conv2 with the residual shortcut fused into the epilogue
# (identity add or 1x1 projection conv) -- no extra HBM round trip.
# ---------------------------------------------------------------------------
def _conv2_kernel(x_ref, scale_ref, shift_ref, w_ref, b_ref, *rest,
                  h, w, shortcut, mm_dtype):
    o_ref = rest[-1]
    cout = o_ref.shape[-1]
    y = _bn_lrelu_conv3x3_core(x_ref[0], scale_ref[...], shift_ref[...],
                               w_ref, b_ref, h=h, w=w, mm_dtype=mm_dtype)

    if shortcut == "project":                             # 1x1 conv projection of x0
        xs_ref, ws_ref, bs_ref = rest[0], rest[1], rest[2]
        xs = xs_ref[0].reshape(h * w, xs_ref.shape[-1])
        y = y + jnp.dot(xs.astype(mm_dtype), ws_ref[...].astype(mm_dtype),
                        preferred_element_type=jnp.float32) + bs_ref[...]
        o_ref[0] = y.reshape(h, w, cout).astype(o_ref.dtype)
    elif shortcut == "identity":                          # x0 + y
        o_ref[0] = (y.reshape(h, w, cout) + rest[0][0]).astype(o_ref.dtype)
    else:
        o_ref[0] = y.reshape(h, w, cout).astype(o_ref.dtype)


def _conv2_with_shortcut(x_nhwc, scale, shift, w_mat, b, *, shortcut="none",
                         x_sc=None, ws=None, bs=None, mm_dtype=jnp.float32):
    n, h, w, cin = x_nhwc.shape
    cout = w_mat.shape[-1]

    in_specs = [
        pl.BlockSpec((1, h, w, cin), lambda i: (i, 0, 0, 0)),   # x1 (per-image)
        pl.BlockSpec((1, cin), lambda i: (0, 0)),               # BN scale
        pl.BlockSpec((1, cin), lambda i: (0, 0)),               # BN shift
        pl.BlockSpec(w_mat.shape, lambda i: (0, 0)),            # (9*Cin, Cout)
        pl.BlockSpec((1, cout), lambda i: (0, 0)),              # bias
    ]
    args = [x_nhwc, scale, shift, w_mat, b]
    cin_sc = 0
    if shortcut == "project":
        cin_sc = x_sc.shape[-1]
        in_specs += [pl.BlockSpec((1, h, w, cin_sc), lambda i: (i, 0, 0, 0)),
                     pl.BlockSpec(ws.shape, lambda i: (0, 0)),
                     pl.BlockSpec((1, cout), lambda i: (0, 0))]
        args += [x_sc, ws, bs]
    elif shortcut == "identity":
        cin_sc = x_sc.shape[-1]
        in_specs += [pl.BlockSpec((1, h, w, cin_sc), lambda i: (i, 0, 0, 0))]
        args += [x_sc]

    hw = h * w
    live = 4 * hw * (2 * (cin + cout + cin_sc) + 12 * cin + 2 * cout + cin_sc)
    kern = functools.partial(_conv2_kernel, h=h, w=w,
                             shortcut=shortcut, mm_dtype=mm_dtype)
    return pl.pallas_call(
        kern,
        out_shape=jax.ShapeDtypeStruct((n, h, w, cout), jnp.float32),
        grid=(n,),
        in_specs=in_specs,
        out_specs=pl.BlockSpec((1, h, w, cout), lambda i: (i, 0, 0, 0)),
        compiler_params=pltpu.CompilerParams(
            dimension_semantics=("parallel",),        # shard images across TCs
            vmem_limit_bytes=_vmem_limit(live)),
    )(*args)


# ---------------------------------------------------------------------------
# Parameters / layout glue / forward
# ---------------------------------------------------------------------------
def init_basic_block_params(key, in_filters, nb_filters, init_subsample=1):
    ks = jax.random.split(key, 8)

    def conv_w(k, cout, cin, kh, kw):   # PyTorch Conv2d weight layout (Cout, Cin, kh, kw)
        return 0.1 * jax.random.normal(k, (cout, cin, kh, kw), jnp.float32)

    params = {
        "bn1_gamma": 1.0 + 0.1 * jax.random.normal(ks[0], (1, in_filters), jnp.float32),
        "bn1_beta": 0.1 * jax.random.normal(ks[1], (1, in_filters), jnp.float32),
        "w1": conv_w(ks[2], nb_filters, in_filters, 3, 3),
        "b1": 0.1 * jax.random.normal(ks[3], (1, nb_filters), jnp.float32),
        "bn2_gamma": 1.0 + 0.1 * jax.random.normal(ks[4], (1, nb_filters), jnp.float32),
        "bn2_beta": 0.1 * jax.random.normal(ks[5], (1, nb_filters), jnp.float32),
        "w2": conv_w(ks[6], nb_filters, nb_filters, 3, 3),
        "b2": 0.1 * jax.random.normal(ks[7], (1, nb_filters), jnp.float32),
    }
    if in_filters != nb_filters or init_subsample != 1:
        ks2 = jax.random.split(jax.random.fold_in(key, 123), 2)
        params["ws"] = conv_w(ks2[0], nb_filters, in_filters, 1, 1)
        params["bs"] = 0.1 * jax.random.normal(ks2[1], (1, nb_filters), jnp.float32)
    return params


def _conv3x3_to_mat(w):
    # (Cout, Cin, 3, 3) -> (9*Cin, Cout); row index = (ki*3 + kj)*Cin + ci,
    # matching the im2col column order built in the kernel.
    cout, cin = w.shape[0], w.shape[1]
    return jnp.transpose(w, (2, 3, 1, 0)).reshape(9 * cin, cout)


def basic_block_forward(x_nchw, params, in_filters, nb_filters,
                        init_subsample=1, mm_dtype=jnp.float32):
    if init_subsample != 1:
        # TODO(synk): strided (init_subsample > 1) conv path not implemented in the kernels.
        raise NotImplementedError("init_subsample != 1 not supported")
    n, c, h, w = x_nchw.shape
    assert c == in_filters
    nhw = n * h * w

    x = jnp.transpose(x_nchw, (0, 2, 3, 1)).astype(jnp.float32)   # NCHW -> NHWC

    # conv1: BN(x) -> LeakyReLU -> Conv3x3, with BN2 stats fused in its epilogue.
    s1, q1 = _bn_stats(x)
    scale1, shift1 = _bn_fold(s1, q1, nhw, params["bn1_gamma"], params["bn1_beta"])
    x1, s2, q2 = _conv1_with_stats(x, scale1, shift1, _conv3x3_to_mat(params["w1"]),
                                   params["b1"], mm_dtype=mm_dtype)

    # conv2: BN(x1) -> LeakyReLU -> Conv3x3, with the shortcut fused in.
    scale2, shift2 = _bn_fold(s2, q2, nhw, params["bn2_gamma"], params["bn2_beta"])
    if in_filters != nb_filters or init_subsample != 1:
        ws = jnp.transpose(params["ws"][:, :, 0, 0], (1, 0))      # (Cin, Cout)
        out = _conv2_with_shortcut(x1, scale2, shift2, _conv3x3_to_mat(params["w2"]),
                                   params["b2"], shortcut="project",
                                   x_sc=x, ws=ws, bs=params["bs"], mm_dtype=mm_dtype)
    else:
        out = _conv2_with_shortcut(x1, scale2, shift2, _conv3x3_to_mat(params["w2"]),
                                   params["b2"], shortcut="identity",
                                   x_sc=x, mm_dtype=mm_dtype)

    return jnp.transpose(out, (0, 3, 1, 2))                       # NHWC -> NCHW


# Pure-JAX reference (training-mode BN batch stats), for a numerical check.
def _reference_forward(x_nchw, params):
    def bn_lrelu_conv(x, gamma, beta, w, b):
        mean = jnp.mean(x, axis=(0, 2, 3), keepdims=True)
        var = jnp.mean((x - mean) ** 2, axis=(0, 2, 3), keepdims=True)
        g = gamma.reshape(1, -1, 1, 1)
        bt = beta.reshape(1, -1, 1, 1)
        a = (x - mean) * lax.rsqrt(var + BN_EPS) * g + bt
        a = jnp.where(a >= 0, a, LEAK * a)
        y = lax.conv_general_dilated(a, w, (1, 1), ((1, 1), (1, 1)),
                                     dimension_numbers=("NCHW", "OIHW", "NCHW"))
        return y + b.reshape(1, -1, 1, 1)

    x1 = bn_lrelu_conv(x_nchw, params["bn1_gamma"], params["bn1_beta"],
                       params["w1"], params["b1"])
    x2 = bn_lrelu_conv(x1, params["bn2_gamma"], params["bn2_beta"],
                       params["w2"], params["b2"])
    if "ws" in params:
        y0 = lax.conv_general_dilated(x_nchw, params["ws"], (1, 1), ((0, 0), (0, 0)),
                                      dimension_numbers=("NCHW", "OIHW", "NCHW"))
        return y0 + params["bs"].reshape(1, -1, 1, 1) + x2
    return x_nchw + x2


if __name__ == "__main__":
    key = jax.random.PRNGKey(0)
    in_filters, nb_filters = 4, 8
    n, h, w = 2, 16, 16
    kx, kp = jax.random.split(key)
    x = jax.random.normal(kx, (n, in_filters, h, w), jnp.float32)
    params = init_basic_block_params(kp, in_filters, nb_filters, init_subsample=1)

    fwd = jax.jit(functools.partial(basic_block_forward, in_filters=in_filters,
                                    nb_filters=nb_filters, init_subsample=1))
    out = jax.block_until_ready(fwd(x, params))
    assert out.shape == (n, nb_filters, h, w)
    assert bool(jnp.all(jnp.isfinite(out)))

    ref = _reference_forward(x, params)
    err = float(jnp.max(jnp.abs(out - ref)))
    assert err < 1e-3, f"max abs error vs reference: {err}"
    print("KERNEL_OK")
</pallas_src>

<mosaic_0001>
module attributes {stable_mosaic.version = 11 : i64} {
  func.func @_bn_stats_kernel(%arg0: i32, %arg1: memref<1x16x16x4xf32, #tpu.memory_space<vmem>>, %arg2: memref<1x4xf32, #tpu.memory_space<vmem>>, %arg3: memref<1x4xf32, #tpu.memory_space<vmem>>) attributes {dimension_semantics = [#tpu.dimension_semantics<arbitrary>], iteration_bounds = array<i64: 2>, scalar_prefetch = 0 : i64, scratch_operands = 0 : i64, tpu.core_type = #tpu.core_type<tc>, window_params = [{transform_indices = @transform_0, window_bounds = array<i64: 1, 16, 16, 4>}, {pipeline_mode = #tpu.pipeline_mode<synchronous>, transform_indices = @transform_1, window_bounds = array<i64: 1, 4>}, {pipeline_mode = #tpu.pipeline_mode<synchronous>, transform_indices = @transform_2, window_bounds = array<i64: 1, 4>}]} {
    %c0_i32 = arith.constant 0 : i32
    %0 = arith.cmpi eq, %arg0, %c0_i32 : i32
    %1 = arith.extui %0 : i1 to i32
    %c0_i32_0 = arith.constant 0 : i32
    %2 = arith.cmpi ne, %1, %c0_i32_0 : i32
    scf.if %2 {
      %cst_15 = arith.constant 0.000000e+00 : f32
      %18 = vector.broadcast %cst_15 : f32 to vector<1x4xf32>
      %c0_16 = arith.constant 0 : index
      %c0_17 = arith.constant 0 : index
      %19 = vector.load %arg2[%c0_16, %c0_17] : memref<1x4xf32, #tpu.memory_space<vmem>>, vector<1x4xf32>
      tpu.vector_store %arg2[%c0_16, %c0_17], %18 {strides = array<i32>} : memref<1x4xf32, #tpu.memory_space<vmem>>, vector<1x4xf32>,
      %cst_18 = arith.constant 0.000000e+00 : f32
      %20 = vector.broadcast %cst_18 : f32 to vector<1x4xf32>
      %c0_19 = arith.constant 0 : index
      %c0_20 = arith.constant 0 : index
      %21 = vector.load %arg3[%c0_19, %c0_20] : memref<1x4xf32, #tpu.memory_space<vmem>>, vector<1x4xf32>
      tpu.vector_store %arg3[%c0_19, %c0_20], %20 {strides = array<i32>} : memref<1x4xf32, #tpu.memory_space<vmem>>, vector<1x4xf32>,
    } else {
    }
    %c0 = arith.constant 0 : index
    %c0_1 = arith.constant 0 : index
    %c0_2 = arith.constant 0 : index
    %c0_3 = arith.constant 0 : index
    %3 = vector.load %arg1[%c0, %c0_1, %c0_2, %c0_3] : memref<1x16x16x4xf32, #tpu.memory_space<vmem>>, vector<1x16x16x4xf32>
    %4 = vector.shape_cast %3 : vector<1x16x16x4xf32> to vector<16x16x4xf32>
    %cst = arith.constant dense<0.000000e+00> : vector<16x4xf32>
    %5 = vector.multi_reduction <add>, %4, %cst [0] : vector<16x16x4xf32> to vector<16x4xf32>
    %6 = arith.mulf %4, %4 : vector<16x16x4xf32>
    %cst_4 = arith.constant dense<0.000000e+00> : vector<16x4xf32>
    %7 = vector.multi_reduction <add>, %6, %cst_4 [0] : vector<16x16x4xf32> to vector<16x4xf32>
    %c0_5 = arith.constant 0 : index
    %c0_6 = arith.constant 0 : index
    %8 = vector.load %arg2[%c0_5, %c0_6] : memref<1x4xf32, #tpu.memory_space<vmem>>, vector<1x4xf32>
    %cst_7 = arith.constant dense<0.000000e+00> : vector<4xf32>
    %9 = vector.multi_reduction <add>, %5, %cst_7 [0] : vector<16x4xf32> to vector<4xf32>
    %10 = vector.shape_cast %9 : vector<4xf32> to vector<1x4xf32>
    %11 = arith.addf %8, %10 : vector<1x4xf32>
    %c0_8 = arith.constant 0 : index
    %c0_9 = arith.constant 0 : index
    %12 = vector.load %arg2[%c0_8, %c0_9] : memref<1x4xf32, #tpu.memory_space<vmem>>, vector<1x4xf32>
    tpu.vector_store %arg2[%c0_8, %c0_9], %11 {strides = array<i32>} : memref<1x4xf32, #tpu.memory_space<vmem>>, vector<1x4xf32>,
    %c0_10 = arith.constant 0 : index
    %c0_11 = arith.constant 0 : index
    %13 = vector.load %arg3[%c0_10, %c0_11] : memref<1x4xf32, #tpu.memory_space<vmem>>, vector<1x4xf32>
    %cst_12 = arith.constant dense<0.000000e+00> : vector<4xf32>
    %14 = vector.multi_reduction <add>, %7, %cst_12 [0] : vector<16x4xf32> to vector<4xf32>
    %15 = vector.shape_cast %14 : vector<4xf32> to vector<1x4xf32>
    %16 = arith.addf %13, %15 : vector<1x4xf32>
    %c0_13 = arith.constant 0 : index
    %c0_14 = arith.constant 0 : index
    %17 = vector.load %arg3[%c0_13, %c0_14] : memref<1x4xf32, #tpu.memory_space<vmem>>, vector<1x4xf32>
    tpu.vector_store %arg3[%c0_13, %c0_14], %16 {strides = array<i32>} : memref<1x4xf32, #tpu.memory_space<vmem>>, vector<1x4xf32>,
    return
  }
  func.func @transform_0(%arg0: i32) -> (i32, i32, i32, i32) {
    %c0_i32 = arith.constant 0 : i32
    %c0_i32_0 = arith.constant 0 : i32
    %c0_i32_1 = arith.constant 0 : i32
    %c0_i32_2 = arith.constant 0 : i32
    return %arg0, %c0_i32, %c0_i32_0, %c0_i32_1 : i32, i32, i32, i32
  }
  func.func @transform_1(%arg0: i32) -> (i32, i32) {
    %c0_i32 = arith.constant 0 : i32
    %c0_i32_0 = arith.constant 0 : i32
    %c0_i32_1 = arith.constant 0 : i32
    return %c0_i32, %c0_i32_0 : i32, i32
  }
  func.func @transform_2(%arg0: i32) -> (i32, i32) {
    %c0_i32 = arith.constant 0 : i32
    %c0_i32_0 = arith.constant 0 : i32
    %c0_i32_1 = arith.constant 0 : i32
    return %c0_i32, %c0_i32_0 : i32, i32
  }
}

module attributes {stable_mosaic.version = 11 : i64} {
  func.func @_conv1_kernel(%arg0: i32, %arg1: memref<1x16x16x4xf32, #tpu.memory_space<vmem>>, %arg2: memref<1x4xf32, #tpu.memory_space<vmem>>, %arg3: memref<1x4xf32, #tpu.memory_space<vmem>>, %arg4: memref<36x8xf32, #tpu.memory_space<vmem>>, %arg5: memref<1x8xf32, #tpu.memory_space<vmem>>, %arg6: memref<1x16x16x8xf32, #tpu.memory_space<vmem>>, %arg7: memref<1x8xf32, #tpu.memory_space<vmem>>, %arg8: memref<1x8xf32, #tpu.memory_space<vmem>>) attributes {dimension_semantics = [#tpu.dimension_semantics<arbitrary>], iteration_bounds = array<i64: 2>, scalar_prefetch = 0 : i64, scratch_operands = 0 : i64, tpu.core_type = #tpu.core_type<tc>, window_params = [{transform_indices = @transform_0, window_bounds = array<i64: 1, 16, 16, 4>}, {pipeline_mode = #tpu.pipeline_mode<synchronous>, transform_indices = @transform_1, window_bounds = array<i64: 1, 4>}, {pipeline_mode = #tpu.pipeline_mode<synchronous>, transform_indices = @transform_2, window_bounds = array<i64: 1, 4>}, {pipeline_mode = #tpu.pipeline_mode<synchronous>, transform_indices = @transform_3, window_bounds = array<i64: 36, 8>}, {pipeline_mode = #tpu.pipeline_mode<synchronous>, transform_indices = @transform_4, window_bounds = array<i64: 1, 8>}, {transform_indices = @transform_5, window_bounds = array<i64: 1, 16, 16, 8>}, {pipeline_mode = #tpu.pipeline_mode<synchronous>, transform_indices = @transform_6, window_bounds = array<i64: 1, 8>}, {pipeline_mode = #tpu.pipeline_mode<synchronous>, transform_indices = @transform_7, window_bounds = array<i64: 1, 8>}]} {
    %c0_i32 = arith.constant 0 : i32
    %0 = arith.cmpi eq, %arg0, %c0_i32 : i32
    %1 = arith.extui %0 : i1 to i32
    %c0_i32_0 = arith.constant 0 : i32
    %2 = arith.cmpi ne, %1, %c0_i32_0 : i32
    scf.if %2 {
      %cst_30 = arith.constant 0.000000e+00 : f32
      %53 = vector.broadcast %cst_30 : f32 to vector<1x8xf32>
      %c0_31 = arith.constant 0 : index
      %c0_32 = arith.constant 0 : index
      %54 = vector.load %arg7[%c0_31, %c0_32] : memref<1x8xf32, #tpu.memory_space<vmem>>, vector<1x8xf32>
      tpu.vector_store %arg7[%c0_31, %c0_32], %53 {strides = array<i32>} : memref<1x8xf32, #tpu.memory_space<vmem>>, vector<1x8xf32>,
      %cst_33 = arith.constant 0.000000e+00 : f32
      %55 = vector.broadcast %cst_33 : f32 to vector<1x8xf32>
      %c0_34 = arith.constant 0 : index
      %c0_35 = arith.constant 0 : index
      %56 = vector.load %arg8[%c0_34, %c0_35] : memref<1x8xf32, #tpu.memory_space<vmem>>, vector<1x8xf32>
      tpu.vector_store %arg8[%c0_34, %c0_35], %55 {strides = array<i32>} : memref<1x8xf32, #tpu.memory_space<vmem>>, vector<1x8xf32>,
    } else {
    }
    %c0 = arith.constant 0 : index
    %c0_1 = arith.constant 0 : index
    %c0_2 = arith.constant 0 : index
    %c0_3 = arith.constant 0 : index
    %3 = vector.load %arg1[%c0, %c0_1, %c0_2, %c0_3] : memref<1x16x16x4xf32, #tpu.memory_space<vmem>>, vector<1x16x16x4xf32>
    %4 = vector.shape_cast %3 : vector<1x16x16x4xf32> to vector<16x16x4xf32>
    %c0_4 = arith.constant 0 : index
    %c0_5 = arith.constant 0 : index
    %5 = vector.load %arg2[%c0_4, %c0_5] : memref<1x4xf32, #tpu.memory_space<vmem>>, vector<1x4xf32>
    %c0_6 = arith.constant 0 : index
    %c0_7 = arith.constant 0 : index
    %6 = vector.load %arg3[%c0_6, %c0_7] : memref<1x4xf32, #tpu.memory_space<vmem>>, vector<1x4xf32>
    %7 = vector.shape_cast %5 : vector<1x4xf32> to vector<1x1x4xf32>
    %8 = vector.broadcast %7 : vector<1x1x4xf32> to vector<16x16x4xf32>
    %9 = arith.mulf %4, %8 : vector<16x16x4xf32>
    %10 = vector.shape_cast %6 : vector<1x4xf32> to vector<1x1x4xf32>
    %11 = vector.broadcast %10 : vector<1x1x4xf32> to vector<16x16x4xf32>
    %12 = arith.addf %9, %11 : vector<16x16x4xf32>
    %cst = arith.constant 0.000000e+00 : f32
    %13 = vector.broadcast %cst : f32 to vector<16x16x4xf32>
    %14 = arith.cmpf oge, %12, %13 : vector<16x16x4xf32>
    %cst_8 = arith.constant 2.000000e-01 : f32
    %15 = vector.broadcast %cst_8 : f32 to vector<16x16x4xf32>
    %16 = arith.mulf %15, %12 : vector<16x16x4xf32>
    %17 = arith.select %14, %12, %16 : vector<16x16x4xi1>, vector<16x16x4xf32>
    %cst_9 = arith.constant 0.000000e+00 : f32
    %18 = vector.broadcast %cst_9 : f32 to vector<1x16x4xf32>
    %19 = tpu.concatenate %18, %17, %18 in 0 : vector<1x16x4xf32>, vector<16x16x4xf32>, vector<1x16x4xf32> -> vector<18x16x4xf32>
    %cst_10 = arith.constant 0.000000e+00 : f32
    %20 = vector.broadcast %cst_10 : f32 to vector<18x1x4xf32>
    %21 = tpu.concatenate %20, %19, %20 in 1 : vector<18x1x4xf32>, vector<18x16x4xf32>, vector<18x1x4xf32> -> vector<18x18x4xf32>
    %22 = vector.extract_strided_slice %21 {offsets = [0, 0, 0], sizes = [16, 16, 4], strides = [1, 1, 1]} : vector<18x18x4xf32> to vector<16x16x4xf32>
    %23 = vector.extract_strided_slice %21 {offsets = [0, 1, 0], sizes = [16, 16, 4], strides = [1, 1, 1]} : vector<18x18x4xf32> to vector<16x16x4xf32>
    %24 = vector.extract_strided_slice %21 {offsets = [0, 2, 0], sizes = [16, 16, 4], strides = [1, 1, 1]} : vector<18x18x4xf32> to vector<16x16x4xf32>
    %25 = vector.extract_strided_slice %21 {offsets = [1, 0, 0], sizes = [16, 16, 4], strides = [1, 1, 1]} : vector<18x18x4xf32> to vector<16x16x4xf32>
    %26 = vector.extract_strided_slice %21 {offsets = [1, 1, 0], sizes = [16, 16, 4], strides = [1, 1, 1]} : vector<18x18x4xf32> to vector<16x16x4xf32>
    %27 = vector.extract_strided_slice %21 {offsets = [1, 2, 0], sizes = [16, 16, 4], strides = [1, 1, 1]} : vector<18x18x4xf32> to vector<16x16x4xf32>
    %28 = vector.extract_strided_slice %21 {offsets = [2, 0, 0], sizes = [16, 16, 4], strides = [1, 1, 1]} : vector<18x18x4xf32> to vector<16x16x4xf32>
    %29 = vector.extract_strided_slice %21 {offsets = [2, 1, 0], sizes = [16, 16, 4], strides = [1, 1, 1]} : vector<18x18x4xf32> to vector<16x16x4xf32>
    %30 = vector.extract_strided_slice %21 {offsets = [2, 2, 0], sizes = [16, 16, 4], strides = [1, 1, 1]} : vector<18x18x4xf32> to vector<16x16x4xf32>
    %31 = tpu.concatenate %22, %23, %24, %25, %26, %27, %28, %29, %30 in 2 : vector<16x16x4xf32>, vector<16x16x4xf32>, vector<16x16x4xf32>, vector<16x16x4xf32>, vector<16x16x4xf32>, vector<16x16x4xf32>, vector<16x16x4xf32>, vector<16x16x4xf32>, vector<16x16x4xf32> -> vector<16x16x36xf32>
    %32 = vector.shape_cast %31 : vector<16x16x36xf32> to vector<256x36xf32>
    %c0_11 = arith.constant 0 : index
    %c0_12 = arith.constant 0 : index
    %33 = vector.load %arg4[%c0_11, %c0_12] : memref<36x8xf32, #tpu.memory_space<vmem>>, vector<36x8xf32>
    %cst_13 = arith.constant dense<0.000000e+00> : vector<256x8xf32>
    %34 = tpu.matmul %32, %33, %cst_13 {dimension_numbers = #tpu.dot_dimension_numbers<[1], [0], [0], [1], [0, 0, 1, 1], [], []>} : vector<256x36xf32>, vector<36x8xf32>, vector<256x8xf32> -> vector<256x8xf32>
    %c0_14 = arith.constant 0 : index
    %c0_15 = arith.constant 0 : index
    %35 = vector.load %arg5[%c0_14, %c0_15] : memref<1x8xf32, #tpu.memory_space<vmem>>, vector<1x8xf32>
    %36 = vector.broadcast %35 : vector<1x8xf32> to vector<256x8xf32>
    %37 = arith.addf %34, %36 : vector<256x8xf32>
    %38 = vector.shape_cast %37 : vector<256x8xf32> to vector<16x16x8xf32>
    %c0_16 = arith.constant 0 : index
    %c0_17 = arith.constant 0 : index
    %c0_18 = arith.constant 0 : index
    %c0_19 = arith.constant 0 : index
    %39 = vector.load %arg6[%c0_16, %c0_17, %c0_18, %c0_19] : memref<1x16x16x8xf32, #tpu.memory_space<vmem>>, vector<1x16x16x8xf32>
    %40 = vector.shape_cast %39 : vector<1x16x16x8xf32> to vector<16x16x8xf32>
    %41 = vector.shape_cast %38 : vector<16x16x8xf32> to vector<1x16x16x8xf32>
    tpu.vector_store %arg6[%c0_16, %c0_17, %c0_18, %c0_19], %41 {strides = array<i32>} : memref<1x16x16x8xf32, #tpu.memory_space<vmem>>, vector<1x16x16x8xf32>,
    %c0_20 = arith.constant 0 : index
    %c0_21 = arith.constant 0 : index
    %42 = vector.load %arg7[%c0_20, %c0_21] : memref<1x8xf32, #tpu.memory_space<vmem>>, vector<1x8xf32>
    %cst_22 = arith.constant dense<0.000000e+00> : vector<8xf32>
    %43 = vector.multi_reduction <add>, %37, %cst_22 [0] : vector<256x8xf32> to vector<8xf32>
    %44 = vector.shape_cast %43 : vector<8xf32> to vector<1x8xf32>
    %45 = arith.addf %42, %44 : vector<1x8xf32>
    %c0_23 = arith.constant 0 : index
    %c0_24 = arith.constant 0 : index
    %46 = vector.load %arg7[%c0_23, %c0_24] : memref<1x8xf32, #tpu.memory_space<vmem>>, vector<1x8xf32>
    tpu.vector_store %arg7[%c0_23, %c0_24], %45 {strides = array<i32>} : memref<1x8xf32, #tpu.memory_space<vmem>>, vector<1x8xf32>,
    %c0_25 = arith.constant 0 : index
    %c0_26 = arith.constant 0 : index
    %47 = vector.load %arg8[%c0_25, %c0_26] : memref<1x8xf32, #tpu.memory_space<vmem>>, vector<1x8xf32>
    %48 = arith.mulf %37, %37 : vector<256x8xf32>
    %cst_27 = arith.constant dense<0.000000e+00> : vector<8xf32>
    %49 = vector.multi_reduction <add>, %48, %cst_27 [0] : vector<256x8xf32> to vector<8xf32>
    %50 = vector.shape_cast %49 : vector<8xf32> to vector<1x8xf32>
    %51 = arith.addf %47, %50 : vector<1x8xf32>
    %c0_28 = arith.constant 0 : index
    %c0_29 = arith.constant 0 : index
    %52 = vector.load %arg8[%c0_28, %c0_29] : memref<1x8xf32, #tpu.memory_space<vmem>>, vector<1x8xf32>
    tpu.vector_store %arg8[%c0_28, %c0_29], %51 {strides = array<i32>} : memref<1x8xf32, #tpu.memory_space<vmem>>, vector<1x8xf32>,
    return
  }
  func.func @transform_0(%arg0: i32) -> (i32, i32, i32, i32) {
    %c0_i32 = arith.constant 0 : i32
    %c0_i32_0 = arith.constant 0 : i32
    %c0_i32_1 = arith.constant 0 : i32
    %c0_i32_2 = arith.constant 0 : i32
    return %arg0, %c0_i32, %c0_i32_0, %c0_i32_1 : i32, i32, i32, i32
  }
  func.func @transform_1(%arg0: i32) -> (i32, i32) {
    %c0_i32 = arith.constant 0 : i32
    %c0_i32_0 = arith.constant 0 : i32
    %c0_i32_1 = arith.constant 0 : i32
    return %c0_i32, %c0_i32_0 : i32, i32
  }
  func.func @transform_2(%arg0: i32) -> (i32, i32) {
    %c0_i32 = arith.constant 0 : i32
    %c0_i32_0 = arith.constant 0 : i32
    %c0_i32_1 = arith.constant 0 : i32
    return %c0_i32, %c0_i32_0 : i32, i32
  }
  func.func @transform_3(%arg0: i32) -> (i32, i32) {
    %c0_i32 = arith.constant 0 : i32
    %c0_i32_0 = arith.constant 0 : i32
    %c0_i32_1 = arith.constant 0 : i32
    return %c0_i32, %c0_i32_0 : i32, i32
  }
  func.func @transform_4(%arg0: i32) -> (i32, i32) {
    %c0_i32 = arith.constant 0 : i32
    %c0_i32_0 = arith.constant 0 : i32
    %c0_i32_1 = arith.constant 0 : i32
    return %c0_i32, %c0_i32_0 : i32, i32
  }
  func.func @transform_5(%arg0: i32) -> (i32, i32, i32, i32) {
    %c0_i32 = arith.constant 0 : i32
    %c0_i32_0 = arith.constant 0 : i32
    %c0_i32_1 = arith.constant 0 : i32
    %c0_i32_2 = arith.constant 0 : i32
    return %arg0, %c0_i32, %c0_i32_0, %c0_i32_1 : i32, i32, i32, i32
  }
  func.func @transform_6(%arg0: i32) -> (i32, i32) {
    %c0_i32 = arith.constant 0 : i32
    %c0_i32_0 = arith.constant 0 : i32
    %c0_i32_1 = arith.constant 0 : i32
    return %c0_i32, %c0_i32_0 : i32, i32
  }
  func.func @transform_7(%arg0: i32) -> (i32, i32) {
    %c0_i32 = arith.constant 0 : i32
    %c0_i32_0 = arith.constant 0 : i32
    %c0_i32_1 = arith.constant 0 : i32
    return %c0_i32, %c0_i32_0 : i32, i32
  }
}

module attributes {stable_mosaic.version = 11 : i64} {
  func.func @_conv2_kernel(%arg0: i32, %arg1: memref<1x16x16x8xf32, #tpu.memory_space<vmem>>, %arg2: memref<1x8xf32, #tpu.memory_space<vmem>>, %arg3: memref<1x8xf32, #tpu.memory_space<vmem>>, %arg4: memref<72x8xf32, #tpu.memory_space<vmem>>, %arg5: memref<1x8xf32, #tpu.memory_space<vmem>>, %arg6: memref<1x16x16x4xf32, #tpu.memory_space<vmem>>, %arg7: memref<4x8xf32, #tpu.memory_space<vmem>>, %arg8: memref<1x8xf32, #tpu.memory_space<vmem>>, %arg9: memref<1x16x16x8xf32, #tpu.memory_space<vmem>>) attributes {dimension_semantics = [#tpu.dimension_semantics<parallel>], iteration_bounds = array<i64: 2>, scalar_prefetch = 0 : i64, scratch_operands = 0 : i64, tpu.core_type = #tpu.core_type<tc>, window_params = [{transform_indices = @transform_0, window_bounds = array<i64: 1, 16, 16, 8>}, {pipeline_mode = #tpu.pipeline_mode<synchronous>, transform_indices = @transform_1, window_bounds = array<i64: 1, 8>}, {pipeline_mode = #tpu.pipeline_mode<synchronous>, transform_indices = @transform_2, window_bounds = array<i64: 1, 8>}, {pipeline_mode = #tpu.pipeline_mode<synchronous>, transform_indices = @transform_3, window_bounds = array<i64: 72, 8>}, {pipeline_mode = #tpu.pipeline_mode<synchronous>, transform_indices = @transform_4, window_bounds = array<i64: 1, 8>}, {transform_indices = @transform_5, window_bounds = array<i64: 1, 16, 16, 4>}, {pipeline_mode = #tpu.pipeline_mode<synchronous>, transform_indices = @transform_6, window_bounds = array<i64: 4, 8>}, {pipeline_mode = #tpu.pipeline_mode<synchronous>, transform_indices = @transform_7, window_bounds = array<i64: 1, 8>}, {transform_indices = @transform_8, window_bounds = array<i64: 1, 16, 16, 8>}]} {
    %c0 = arith.constant 0 : index
    %c0_0 = arith.constant 0 : index
    %c0_1 = arith.constant 0 : index
    %c0_2 = arith.constant 0 : index
    %0 = vector.load %arg1[%c0, %c0_0, %c0_1, %c0_2] : memref<1x16x16x8xf32, #tpu.memory_space<vmem>>, vector<1x16x16x8xf32>
    %1 = vector.shape_cast %0 : vector<1x16x16x8xf32> to vector<16x16x8xf32>
    %c0_3 = arith.constant 0 : index
    %c0_4 = arith.constant 0 : index
    %2 = vector.load %arg2[%c0_3, %c0_4] : memref<1x8xf32, #tpu.memory_space<vmem>>, vector<1x8xf32>
    %c0_5 = arith.constant 0 : index
    %c0_6 = arith.constant 0 : index
    %3 = vector.load %arg3[%c0_5, %c0_6] : memref<1x8xf32, #tpu.memory_space<vmem>>, vector<1x8xf32>
    %4 = vector.shape_cast %2 : vector<1x8xf32> to vector<1x1x8xf32>
    %5 = vector.broadcast %4 : vector<1x1x8xf32> to vector<16x16x8xf32>
    %6 = arith.mulf %1, %5 : vector<16x16x8xf32>
    %7 = vector.shape_cast %3 : vector<1x8xf32> to vector<1x1x8xf32>
    %8 = vector.broadcast %7 : vector<1x1x8xf32> to vector<16x16x8xf32>
    %9 = arith.addf %6, %8 : vector<16x16x8xf32>
    %cst = arith.constant 0.000000e+00 : f32
    %10 = vector.broadcast %cst : f32 to vector<16x16x8xf32>
    %11 = arith.cmpf oge, %9, %10 : vector<16x16x8xf32>
    %cst_7 = arith.constant 2.000000e-01 : f32
    %12 = vector.broadcast %cst_7 : f32 to vector<16x16x8xf32>
    %13 = arith.mulf %12, %9 : vector<16x16x8xf32>
    %14 = arith.select %11, %9, %13 : vector<16x16x8xi1>, vector<16x16x8xf32>
    %cst_8 = arith.constant 0.000000e+00 : f32
    %15 = vector.broadcast %cst_8 : f32 to vector<1x16x8xf32>
    %16 = tpu.concatenate %15, %14, %15 in 0 : vector<1x16x8xf32>, vector<16x16x8xf32>, vector<1x16x8xf32> -> vector<18x16x8xf32>
    %cst_9 = arith.constant 0.000000e+00 : f32
    %17 = vector.broadcast %cst_9 : f32 to vector<18x1x8xf32>
    %18 = tpu.concatenate %17, %16, %17 in 1 : vector<18x1x8xf32>, vector<18x16x8xf32>, vector<18x1x8xf32> -> vector<18x18x8xf32>
    %19 = vector.extract_strided_slice %18 {offsets = [0, 0, 0], sizes = [16, 16, 8], strides = [1, 1, 1]} : vector<18x18x8xf32> to vector<16x16x8xf32>
    %20 = vector.extract_strided_slice %18 {offsets = [0, 1, 0], sizes = [16, 16, 8], strides = [1, 1, 1]} : vector<18x18x8xf32> to vector<16x16x8xf32>
    %21 = vector.extract_strided_slice %18 {offsets = [0, 2, 0], sizes = [16, 16, 8], strides = [1, 1, 1]} : vector<18x18x8xf32> to vector<16x16x8xf32>
    %22 = vector.extract_strided_slice %18 {offsets = [1, 0, 0], sizes = [16, 16, 8], strides = [1, 1, 1]} : vector<18x18x8xf32> to vector<16x16x8xf32>
    %23 = vector.extract_strided_slice %18 {offsets = [1, 1, 0], sizes = [16, 16, 8], strides = [1, 1, 1]} : vector<18x18x8xf32> to vector<16x16x8xf32>
    %24 = vector.extract_strided_slice %18 {offsets = [1, 2, 0], sizes = [16, 16, 8], strides = [1, 1, 1]} : vector<18x18x8xf32> to vector<16x16x8xf32>
    %25 = vector.extract_strided_slice %18 {offsets = [2, 0, 0], sizes = [16, 16, 8], strides = [1, 1, 1]} : vector<18x18x8xf32> to vector<16x16x8xf32>
    %26 = vector.extract_strided_slice %18 {offsets = [2, 1, 0], sizes = [16, 16, 8], strides = [1, 1, 1]} : vector<18x18x8xf32> to vector<16x16x8xf32>
    %27 = vector.extract_strided_slice %18 {offsets = [2, 2, 0], sizes = [16, 16, 8], strides = [1, 1, 1]} : vector<18x18x8xf32> to vector<16x16x8xf32>
    %28 = tpu.concatenate %19, %20, %21, %22, %23, %24, %25, %26, %27 in 2 : vector<16x16x8xf32>, vector<16x16x8xf32>, vector<16x16x8xf32>, vector<16x16x8xf32>, vector<16x16x8xf32>, vector<16x16x8xf32>, vector<16x16x8xf32>, vector<16x16x8xf32>, vector<16x16x8xf32> -> vector<16x16x72xf32>
    %29 = vector.shape_cast %28 : vector<16x16x72xf32> to vector<256x72xf32>
    %c0_10 = arith.constant 0 : index
    %c0_11 = arith.constant 0 : index
    %30 = vector.load %arg4[%c0_10, %c0_11] : memref<72x8xf32, #tpu.memory_space<vmem>>, vector<72x8xf32>
    %cst_12 = arith.constant dense<0.000000e+00> : vector<256x8xf32>
    %31 = tpu.matmul %29, %30, %cst_12 {dimension_numbers = #tpu.dot_dimension_numbers<[1], [0], [0], [1], [0, 0, 1, 1], [], []>} : vector<256x72xf32>, vector<72x8xf32>, vector<256x8xf32> -> vector<256x8xf32>
    %c0_13 = arith.constant 0 : index
    %c0_14 = arith.constant 0 : index
    %32 = vector.load %arg5[%c0_13, %c0_14] : memref<1x8xf32, #tpu.memory_space<vmem>>, vector<1x8xf32>
    %33 = vector.broadcast %32 : vector<1x8xf32> to vector<256x8xf32>
    %34 = arith.addf %31, %33 : vector<256x8xf32>
    %c0_15 = arith.constant 0 : index
    %c0_16 = arith.constant 0 : index
    %c0_17 = arith.constant 0 : index
    %c0_18 = arith.constant 0 : index
    %35 = vector.load %arg6[%c0_15, %c0_16, %c0_17, %c0_18] : memref<1x16x16x4xf32, #tpu.memory_space<vmem>>, vector<1x16x16x4xf32>
    %36 = vector.shape_cast %35 : vector<1x16x16x4xf32> to vector<16x16x4xf32>
    %37 = vector.shape_cast %36 : vector<16x16x4xf32> to vector<256x4xf32>
    %c0_19 = arith.constant 0 : index
    %c0_20 = arith.constant 0 : index
    %38 = vector.load %arg7[%c0_19, %c0_20] : memref<4x8xf32, #tpu.memory_space<vmem>>, vector<4x8xf32>
    %cst_21 = arith.constant dense<0.000000e+00> : vector<256x8xf32>
    %39 = tpu.matmul %37, %38, %cst_21 {dimension_numbers = #tpu.dot_dimension_numbers<[1], [0], [0], [1], [0, 0, 1, 1], [], []>} : vector<256x4xf32>, vector<4x8xf32>, vector<256x8xf32> -> vector<256x8xf32>
    %40 = arith.addf %34, %39 : vector<256x8xf32>
    %c0_22 = arith.constant 0 : index
    %c0_23 = arith.constant 0 : index
    %41 = vector.load %arg8[%c0_22, %c0_23] : memref<1x8xf32, #tpu.memory_space<vmem>>, vector<1x8xf32>
    %42 = vector.broadcast %41 : vector<1x8xf32> to vector<256x8xf32>
    %43 = arith.addf %40, %42 : vector<256x8xf32>
    %44 = vector.shape_cast %43 : vector<256x8xf32> to vector<16x16x8xf32>
    %c0_24 = arith.constant 0 : index
    %c0_25 = arith.constant 0 : index
    %c0_26 = arith.constant 0 : index
    %c0_27 = arith.constant 0 : index
    %45 = vector.load %arg9[%c0_24, %c0_25, %c0_26, %c0_27] : memref<1x16x16x8xf32, #tpu.memory_space<vmem>>, vector<1x16x16x8xf32>
    %46 = vector.shape_cast %45 : vector<1x16x16x8xf32> to vector<16x16x8xf32>
    %47 = vector.shape_cast %44 : vector<16x16x8xf32> to vector<1x16x16x8xf32>
    tpu.vector_store %arg9[%c0_24, %c0_25, %c0_26, %c0_27], %47 {strides = array<i32>} : memref<1x16x16x8xf32, #tpu.memory_space<vmem>>, vector<1x16x16x8xf32>,
    return
  }
  func.func @transform_0(%arg0: i32) -> (i32, i32, i32, i32) {
    %c0_i32 = arith.constant 0 : i32
    %c0_i32_0 = arith.constant 0 : i32
    %c0_i32_1 = arith.constant 0 : i32
    %c0_i32_2 = arith.constant 0 : i32
    return %arg0, %c0_i32, %c0_i32_0, %c0_i32_1 : i32, i32, i32, i32
  }
  func.func @transform_1(%arg0: i32) -> (i32, i32) {
    %c0_i32 = arith.constant 0 : i32
    %c0_i32_0 = arith.constant 0 : i32
    %c0_i32_1 = arith.constant 0 : i32
    return %c0_i32, %c0_i32_0 : i32, i32
  }
  func.func @transform_2(%arg0: i32) -> (i32, i32) {
    %c0_i32 = arith.constant 0 : i32
    %c0_i32_0 = arith.constant 0 : i32
    %c0_i32_1 = arith.constant 0 : i32
    return %c0_i32, %c0_i32_0 : i32, i32
  }
  func.func @transform_3(%arg0: i32) -> (i32, i32) {
    %c0_i32 = arith.constant 0 : i32
    %c0_i32_0 = arith.constant 0 : i32
    %c0_i32_1 = arith.constant 0 : i32
    return %c0_i32, %c0_i32_0 : i32, i32
  }
  func.func @transform_4(%arg0: i32) -> (i32, i32) {
    %c0_i32 = arith.constant 0 : i32
    %c0_i32_0 = arith.constant 0 : i32
    %c0_i32_1 = arith.constant 0 : i32
    return %c0_i32, %c0_i32_0 : i32, i32
  }
  func.func @transform_5(%arg0: i32) -> (i32, i32, i32, i32) {
    %c0_i32 = arith.constant 0 : i32
    %c0_i32_0 = arith.constant 0 : i32
    %c0_i32_1 = arith.constant 0 : i32
    %c0_i32_2 = arith.constant 0 : i32
    return %arg0, %c0_i32, %c0_i32_0, %c0_i32_1 : i32, i32, i32, i32
  }
  func.func @transform_6(%arg0: i32) -> (i32, i32) {
    %c0_i32 = arith.constant 0 : i32
    %c0_i32_0 = arith.constant 0 : i32
    %c0_i32_1 = arith.constant 0 : i32
    return %c0_i32, %c0_i32_0 : i32, i32
  }
  func.func @transform_7(%arg0: i32) -> (i32, i32) {
    %c0_i32 = arith.constant 0 : i32
    %c0_i32_0 = arith.constant 0 : i32
    %c0_i32_1 = arith.constant 0 : i32
    return %c0_i32, %c0_i32_0 : i32, i32
  }
  func.func @transform_8(%arg0: i32) -> (i32, i32, i32, i32) {
    %c0_i32 = arith.constant 0 : i32
    %c0_i32_0 = arith.constant 0 : i32
    %c0_i32_1 = arith.constant 0 : i32
    %c0_i32_2 = arith.constant 0 : i32
    return %arg0, %c0_i32, %c0_i32_0, %c0_i32_1 : i32, i32, i32, i32
  }
}

</mosaic_0001>

<llo_original>
// kernel: basic_block_forward.3
$region0: #{basic_block_forward.3}
  #allocation0 [shape = 'u32[]', space=smem, size = 0x4, offset = 0x4, fixed_abs, tag = 'smem constant byte address 0x4 - core index']
  #allocation1 [shape = 'u32[144,128]{1,0:T(1,128)}', space=vmem, size = 0x12000, scoped, tag = 'internal scratch']
  %s0 = inlined_call_operand.vmem [shape: f32[2,16,16,4], index: 0, kind: input, shape index: {}]
  %s1 = inlined_call_operand.vmem [shape: f32[1,4], index: 1, kind: output, shape index: {0}]
  %s2 = inlined_call_operand.vmem [shape: f32[1,4], index: 2, kind: output, shape index: {1}]
  %3 = xla_tuple %s1, %s2
  %s4 = sld [smem:[#allocation0]]
  $region49: #{basic_block_forward.3} parent=0
    _
  %s6 = ssub.s32 1, %s4
  %s7 = scalar_select 0, %s6, %s4
  loop: start=0, step=1, limit=4
  $region2: #{basic_block_forward.3} parent=0 // loop_pre_header
    _
  $region3: #{basic_block_forward.3} parent=0 // loop_header
    %s9 = sphi 0, %s13
    %p10 = scmp.ge.s32.totalorder %s9, 4
    %s19 = sphi 0, %s21
    %s22 = sphi 0, %s19
    %s23 = sphi 0, %s22
    %s39 = sphi 0, %s23
    %s43 = sphi 0, %s43
    %s45 = sphi 0, %s43
    %s46 = sphi 0, %s45
    %s60 = sphi 0, %s46
    %s64 = sphi 0, %s64
    %s66 = sphi 0, %s64
    %s67 = sphi 0, %s66
    %s81 = sphi 0, %s67
  $region4: #{basic_block_forward.3} parent=0 // loop_header_branch
    %12 = sbr.rel (%p10) target = $region8
  $region5: #{basic_block_forward.3} parent=0 // loop_body
    %s14 = ssub.s32 %s9, 1
    %s15 = ssub.s32 %s9, 2
    %s16 = sadd.s32 %s9, 1
    %s17 = ssub.s32 %s9, %s16
    %p18 = scmp.eq.s32.totalorder %s17, 0
    %s20 = sadd.s32 %s19, 1
    %s21 = scalar_select %p18, %s19, %s20
    %p24 = pneg %p18
    %p25 = scmp.eq.s32.totalorder %s9, 1
    %p26 = por %p24, %p25
    %p27 = scmp.ne.s32.totalorder %s19, %s22
    %p28 = scmp.eq.s32.totalorder %s9, 0
    %p29 = por %p27, %p28
    %p30 = scmp.ne.s32.totalorder %s19, %s22
    %p31 = scmp.eq.s32.totalorder %s14, 1
    %p32 = por %p30, %p31
    %p33 = scmp.ne.s32.totalorder %s22, %s23
    %p34 = scmp.eq.s32.totalorder %s14, 0
    %p35 = por %p33, %p34
    %p36 = scmp.ne.s32.totalorder %s22, %s23
    %p37 = scmp.eq.s32.totalorder %s15, 1
    %p38 = por %p36, %p37
    %p40 = scmp.ne.s32.totalorder %s23, %s39
    %p41 = scmp.eq.s32.totalorder %s15, 0
    %p42 = por %p40, %p41
    %s44 = sadd.s32 %s43, 1
    %p47 = scmp.eq.s32.totalorder %s9, 1
    %p48 = scmp.ne.s32.totalorder %s43, %s45
    %p49 = scmp.eq.s32.totalorder %s9, 0
    %p50 = por %p48, %p49
    %p51 = scmp.ne.s32.totalorder %s43, %s45
    %p52 = scmp.eq.s32.totalorder %s14, 1
    %p53 = por %p51, %p52
    %p54 = scmp.ne.s32.totalorder %s45, %s46
    %p55 = scmp.eq.s32.totalorder %s14, 0
    %p56 = por %p54, %p55
    %p57 = scmp.ne.s32.totalorder %s45, %s46
    %p58 = scmp.eq.s32.totalorder %s15, 1
    %p59 = por %p57, %p58
    %p61 = scmp.ne.s32.totalorder %s46, %s60
    %p62 = scmp.eq.s32.totalorder %s15, 0
    %p63 = por %p61, %p62
    %s65 = sadd.s32 %s64, 1
    %p68 = scmp.eq.s32.totalorder %s9, 1
    %p69 = scmp.ne.s32.totalorder %s64, %s66
    %p70 = scmp.eq.s32.totalorder %s9, 0
    %p71 = por %p69, %p70
    %p72 = scmp.ne.s32.totalorder %s64, %s66
    %p73 = scmp.eq.s32.totalorder %s14, 1
    %p74 = por %p72, %p73
    %p75 = scmp.ne.s32.totalorder %s66, %s67
    %p76 = scmp.eq.s32.totalorder %s14, 0
    %p77 = por %p75, %p76
    %p78 = scmp.ne.s32.totalorder %s66, %s67
    %p79 = scmp.eq.s32.totalorder %s15, 1
    %p80 = por %p78, %p79
    %p82 = scmp.ne.s32.totalorder %s67, %s81
    %p83 = scmp.eq.s32.totalorder %s15, 0
    %p84 = por %p82, %p83
    %p85 = scmp.le.s32.totalorder 1, %s9
    %p86 = scmp.lt.s32.totalorder %s9, 3
    %p87 = pnand %p85, %p86
    %p88 = pneg %p87
    // Predicated region
    $region9: #{basic_block_forward.3} parent=5 // pred_check
      _
    $region10: #{basic_block_forward.3} parent=5 // pred_check_branch
      %90 = sbr.rel (%p87) target = $region12
    $region11: #{basic_block_forward.3} parent=5 // pred_region
      %s91 = ssub.s32 %s9, 1
    $region12: #{basic_block_forward.3} parent=5 // pred_fallthru
      _
    %p92 = scmp.lt.s32.totalorder %s9, 2
    // Predicated region
    $region13: #{basic_block_forward.3} parent=5 // pred_check
      %p93 = pneg %p92
    $region14: #{basic_block_forward.3} parent=5 // pred_check_branch
      %95 = sbr.rel (%p93) target = $region16
    $region15: #{basic_block_forward.3} parent=5 // pred_region
      // Predicated region
      $region17: #{basic_block_forward.3} parent=15 // pred_check
        %p96 = pneg %p29
      $region18: #{basic_block_forward.3} parent=15 // pred_check_branch
        %98 = sbr.rel (%p96) target = $region20
      $region19: #{basic_block_forward.3} parent=15 // pred_region
        %p99 = scmp.lt.s32.totalorder %s9, 1
        %s100 = scalar_select %p99, %s9, 1
        %s101 = smul.addr %s100, 32
        %s102 = smul.addr %s101, 8
        %s103 = scalar_lea.vmem %s0, %s102
      $region20: #{basic_block_forward.3} parent=15 // pred_fallthru
        _
    $region16: #{basic_block_forward.3} parent=5 // pred_fallthru
      _
    %p104 = scmp.le.s32.totalorder 1, %s9
    %p105 = scmp.lt.s32.totalorder %s9, 3
    %p106 = pnand %p104, %p105
    %p107 = pneg %p106
    // Predicated region
    $region21: #{basic_block_forward.3} parent=5 // pred_check
      _
    $region22: #{basic_block_forward.3} parent=5 // pred_check_branch
      %109 = sbr.rel (%p106) target = $region24
    $region23: #{basic_block_forward.3} parent=5 // pred_region
      %s110 = ssub.s32 %s9, 1
      %p111 = scmp.lt.s32.totalorder %s14, 1
      %s112 = scalar_select %p111, %s14, 1
      %s113 = smul.addr %s112, 32
      %s114 = smul.addr %s113, 8
      %s115 = scalar_lea.vmem %s0, %s114
      %p116 = pneg %p35
      %p117 = pneg %p32
      %p118 = pneg %p56
      %p119 = pneg %p53
      %p120 = pneg %p77
      %p121 = pneg %p74
      %p122 = scmp.lt.s32.totalorder %s14, 1
      %s123 = scalar_select %p122, %s14, 1
      %s124 = smul.addr %s123, 32
      %s125 = smul.addr %s124, 8
      %s126 = scalar_lea.vmem %s0, %s125
      %p127 = scmp.eq.s32.totalorder %s14, 0
      // Predicated region
      $region25: #{basic_block_forward.3} parent=23 // pred_check
        %p128 = pneg %p127
      $region26: #{basic_block_forward.3} parent=23 // pred_check_branch
        %130 = sbr.rel (%p128) target = $region28
      $region27: #{basic_block_forward.3} parent=23 // pred_region
        %vm131 = vcmask 24576
        %132 = vst.msk [vmem:[%s1] sm:$0x1] %vm131, 0.0
        %133 = vst.msk [vmem:[%s2] sm:$0x1] %vm131, 0.0
      $region28: #{basic_block_forward.3} parent=23 // pred_fallthru
        _
      %v134 = vld [vmem:[%s126] sm:$0xff]
      %v135 = vld [vmem:[%s126 + $0x8] sm:$0xff]
      %v136 = vld [vmem:[%s126 + $0x10] sm:$0xff]
      %v137 = vld [vmem:[%s126 + $0x18] sm:$0xff]
      %v138 = vld [vmem:[%s126 + $0x20] sm:$0xff]
      %v139 = vld [vmem:[%s126 + $0x28] sm:$0xff]
      %v140 = vld [vmem:[%s126 + $0x30] sm:$0xff]
      %v141 = vld [vmem:[%s126 + $0x38] sm:$0xff]
      %v142 = vld [vmem:[%s126 + $0x40] sm:$0xff]
      %v143 = vld [vmem:[%s126 + $0x48] sm:$0xff]
      %v144 = vld [vmem:[%s126 + $0x50] sm:$0xff]
      %v145 = vld [vmem:[%s126 + $0x58] sm:$0xff]
      %v146 = vld [vmem:[%s126 + $0x60] sm:$0xff]
      %v147 = vld [vmem:[%s126 + $0x68] sm:$0xff]
      %v148 = vld [vmem:[%s126 + $0x70] sm:$0xff]
      %v149 = vld [vmem:[%s126 + $0x78] sm:$0xff]
      %v150 = vld [vmem:[%s126 + $0x80] sm:$0xff]
      %v151 = vld [vmem:[%s126 + $0x88] sm:$0xff]
      %v152 = vld [vmem:[%s126 + $0x90] sm:$0xff]
      %v153 = vld [vmem:[%s126 + $0x98] sm:$0xff]
      %v154 = vld [vmem:[%s126 + $0xa0] sm:$0xff]
      %v155 = vld [vmem:[%s126 + $0xa8] sm:$0xff]
      %v156 = vld [vmem:[%s126 + $0xb0] sm:$0xff]
      %v157 = vld [vmem:[%s126 + $0xb8] sm:$0xff]
      %v158 = vld [vmem:[%s126 + $0xc0] sm:$0xff]
      %v159 = vld [vmem:[%s126 + $0xc8] sm:$0xff]
      %v160 = vld [vmem:[%s126 + $0xd0] sm:$0xff]
      %v161 = vld [vmem:[%s126 + $0xd8] sm:$0xff]
      %v162 = vld [vmem:[%s126 + $0xe0] sm:$0xff]
      %v163 = vld [vmem:[%s126 + $0xe8] sm:$0xff]
      %v164 = vld [vmem:[%s126 + $0xf0] sm:$0xff]
      %v165 = vld [vmem:[%s126 + $0xf8] sm:$0xff]
      %vm166 = vcmask 31744
      %v167 = vsel %vm166, %v134, 0.0
      %v168 = vsel %vm166, %v136, 0.0
      %v169 = vadd.f32 %v167, %v168
      %v170 = vsel %vm166, %v138, 0.0
      %v171 = vadd.f32 %v169, %v170
      %v172 = vsel %vm166, %v140, 0.0
      %v173 = vadd.f32 %v171, %v172
      %v174 = vsel %vm166, %v142, 0.0
      %v175 = vadd.f32 %v173, %v174
      %v176 = vsel %vm166, %v144, 0.0
      %v177 = vadd.f32 %v175, %v176
      %v178 = vsel %vm166, %v146, 0.0
      %v179 = vadd.f32 %v177, %v178
      %v180 = vsel %vm166, %v148, 0.0
      %v181 = vadd.f32 %v179, %v180
      %v182 = vsel %vm166, %v150, 0.0
      %v183 = vadd.f32 %v181, %v182
      %v184 = vsel %vm166, %v152, 0.0
      %v185 = vadd.f32 %v183, %v184
      %v186 = vsel %vm166, %v154, 0.0
      %v187 = vadd.f32 %v185, %v186
      %v188 = vsel %vm166, %v156, 0.0
      %v189 = vadd.f32 %v187, %v188
      %v190 = vsel %vm166, %v158, 0.0
      %v191 = vadd.f32 %v189, %v190
      %v192 = vsel %vm166, %v160, 0.0
      %v193 = vadd.f32 %v191, %v192
      %v194 = vsel %vm166, %v162, 0.0
      %v195 = vadd.f32 %v193, %v194
      %v196 = vsel %vm166, %v164, 0.0
      %v197 = vadd.f32 %v195, %v196
      %v198 = vsel %vm166, %v135, 0.0
      %v199 = vsel %vm166, %v137, 0.0
      %v200 = vadd.f32 %v198, %v199
      %v201 = vsel %vm166, %v139, 0.0
      %v202 = vadd.f32 %v200, %v201
      %v203 = vsel %vm166, %v141, 0.0
      %v204 = vadd.f32 %v202, %v203
      %v205 = vsel %vm166, %v143, 0.0
      %v206 = vadd.f32 %v204, %v205
      %v207 = vsel %vm166, %v145, 0.0
      %v208 = vadd.f32 %v206, %v207
      %v209 = vsel %vm166, %v147, 0.0
      %v210 = vadd.f32 %v208, %v209
      %v211 = vsel %vm166, %v149, 0.0
      %v212 = vadd.f32 %v210, %v211
      %v213 = vsel %vm166, %v151, 0.0
      %v214 = vadd.f32 %v212, %v213
      %v215 = vsel %vm166, %v153, 0.0
      %v216 = vadd.f32 %v214, %v215
      %v217 = vsel %vm166, %v155, 0.0
      %v218 = vadd.f32 %v216, %v217
      %v219 = vsel %vm166, %v157, 0.0
      %v220 = vadd.f32 %v218, %v219
      %v221 = vsel %vm166, %v159, 0.0
      %v222 = vadd.f32 %v220, %v221
      %v223 = vsel %vm166, %v161, 0.0
      %v224 = vadd.f32 %v222, %v223
      %v225 = vsel %vm166, %v163, 0.0
      %v226 = vadd.f32 %v224, %v225
      %v227 = vsel %vm166, %v165, 0.0
      %v228 = vadd.f32 %v226, %v227
      %v229 = vmul.f32 %v134, %v134
      %v230 = vmul.f32 %v135, %v135
      %v231 = vmul.f32 %v136, %v136
      %v232 = vmul.f32 %v137, %v137
      %v233 = vmul.f32 %v138, %v138
      %v234 = vmul.f32 %v139, %v139
      %v235 = vmul.f32 %v140, %v140
      %v236 = vmul.f32 %v141, %v141
      %v237 = vmul.f32 %v142, %v142
      %v238 = vmul.f32 %v143, %v143
      %v239 = vmul.f32 %v144, %v144
      %v240 = vmul.f32 %v145, %v145
      %v241 = vmul.f32 %v146, %v146
      %v242 = vmul.f32 %v147, %v147
      %v243 = vmul.f32 %v148, %v148
      %v244 = vmul.f32 %v149, %v149
      %v245 = vmul.f32 %v150, %v150
      %v246 = vmul.f32 %v151, %v151
      %v247 = vmul.f32 %v152, %v152
      %v248 = vmul.f32 %v153, %v153
      %v249 = vmul.f32 %v154, %v154
      %v250 = vmul.f32 %v155, %v155
      %v251 = vmul.f32 %v156, %v156
      %v252 = vmul.f32 %v157, %v157
      %v253 = vmul.f32 %v158, %v158
      %v254 = vmul.f32 %v159, %v159
      %v255 = vmul.f32 %v160, %v160
      %v256 = vmul.f32 %v161, %v161
      %v257 = vmul.f32 %v162, %v162
      %v258 = vmul.f32 %v163, %v163
      %v259 = vmul.f32 %v164, %v164
      %v260 = vmul.f32 %v165, %v165
      %v261 = vsel %vm166, %v229, 0.0
      %v262 = vsel %vm166, %v231, 0.0
      %v263 = vadd.f32 %v261, %v262
      %v264 = vsel %vm166, %v233, 0.0
      %v265 = vadd.f32 %v263, %v264
      %v266 = vsel %vm166, %v235, 0.0
      %v267 = vadd.f32 %v265, %v266
      %v268 = vsel %vm166, %v237, 0.0
      %v269 = vadd.f32 %v267, %v268
      %v270 = vsel %vm166, %v239, 0.0
      %v271 = vadd.f32 %v269, %v270
      %v272 = vsel %vm166, %v241, 0.0
      %v273 = vadd.f32 %v271, %v272
      %v274 = vsel %vm166, %v243, 0.0
      %v275 = vadd.f32 %v273, %v274
      %v276 = vsel %vm166, %v245, 0.0
      %v277 = vadd.f32 %v275, %v276
      %v278 = vsel %vm166, %v247, 0.0
      %v279 = vadd.f32 %v277, %v278
      %v280 = vsel %vm166, %v249, 0.0
      %v281 = vadd.f32 %v279, %v280
      %v282 = vsel %vm166, %v251, 0.0
      %v283 = vadd.f32 %v281, %v282
      %v284 = vsel %vm166, %v253, 0.0
      %v285 = vadd.f32 %v283, %v284
      %v286 = vsel %vm166, %v255, 0.0
      %v287 = vadd.f32 %v285, %v286
      %v288 = vsel %vm166, %v257, 0.0
      %v289 = vadd.f32 %v287, %v288
      %v290 = vsel %vm166, %v259, 0.0
      %v291 = vadd.f32 %v289, %v290
      %v292 = vsel %vm166, %v230, 0.0
      %v293 = vsel %vm166, %v232, 0.0
      %v294 = vadd.f32 %v292, %v293
      %v295 = vsel %vm166, %v234, 0.0
      %v296 = vadd.f32 %v294, %v295
      %v297 = vsel %vm166, %v236, 0.0
      %v298 = vadd.f32 %v296, %v297
      %v299 = vsel %vm166, %v238, 0.0
      %v300 = vadd.f32 %v298, %v299
      %v301 = vsel %vm166, %v240, 0.0
      %v302 = vadd.f32 %v300, %v301
      %v303 = vsel %vm166, %v242, 0.0
      %v304 = vadd.f32 %v302, %v303
      %v305 = vsel %vm166, %v244, 0.0
      %v306 = vadd.f32 %v304, %v305
      %v307 = vsel %vm166, %v246, 0.0
      %v308 = vadd.f32 %v306, %v307
      %v309 = vsel %vm166, %v248, 0.0
      %v310 = vadd.f32 %v308, %v309
      %v311 = vsel %vm166, %v250, 0.0
      %v312 = vadd.f32 %v310, %v311
      %v313 = vsel %vm166, %v252, 0.0
      %v314 = vadd.f32 %v312, %v313
      %v315 = vsel %vm166, %v254, 0.0
      %v316 = vadd.f32 %v314, %v315
      %v317 = vsel %vm166, %v256, 0.0
      %v318 = vadd.f32 %v316, %v317
      %v319 = vsel %vm166, %v258, 0.0
      %v320 = vadd.f32 %v318, %v319
      %v321 = vsel %vm166, %v260, 0.0
      %v322 = vadd.f32 %v320, %v321
      %v323 = vld [vmem:[%s1] sm:$0x1]
      %v324 = vsel %vm166, %v197, 0.0
      %v325 = vsel %vm166, %v228, 0.0
      %v326 = vadd.f32 %v324, %v325
      %v327 = vrot.slane %v326, 4
      %v328 = vadd.f32 %v326, %v327
      %v329 = vrot.slane %v328, 2
      %v330 = vadd.f32 %v328, %v329
      %v331 = vrot.slane %v330, 1
      %v332 = vadd.f32 %v330, %v331
      %v333 = vadd.f32 %v323, %v332
      %vm334 = vcmask 24576
      %335 = vst.msk [vmem:[%s1] sm:$0x1] %vm334, %v333
      %v336 = vld [vmem:[%s2] sm:$0x1]
      %v337 = vsel %vm166, %v291, 0.0
      %v338 = vsel %vm166, %v322, 0.0
      %v339 = vadd.f32 %v337, %v338
      %v340 = vrot.slane %v339, 4
      %v341 = vadd.f32 %v339, %v340
      %v342 = vrot.slane %v341, 2
      %v343 = vadd.f32 %v341, %v342
      %v344 = vrot.slane %v343, 1
      %v345 = vadd.f32 %v343, %v344
      %v346 = vadd.f32 %v336, %v345
      %347 = vst.msk [vmem:[%s2] sm:$0x1] %vm334, %v346
      // Predicated region
      $region29: #{basic_block_forward.3} parent=23 // pred_check
        %p348 = pneg %p53
      $region30: #{basic_block_forward.3} parent=23 // pred_check_branch
        %350 = sbr.rel (%p348) target = $region32
      $region31: #{basic_block_forward.3} parent=23 // pred_region
        _
      $region32: #{basic_block_forward.3} parent=23 // pred_fallthru
        _
      // Predicated region
      $region33: #{basic_block_forward.3} parent=23 // pred_check
        %p351 = pneg %p74
      $region34: #{basic_block_forward.3} parent=23 // pred_check_branch
        %353 = sbr.rel (%p351) target = $region36
      $region35: #{basic_block_forward.3} parent=23 // pred_region
        _
      $region36: #{basic_block_forward.3} parent=23 // pred_fallthru
        _
      // Predicated region
      $region37: #{basic_block_forward.3} parent=23 // pred_check
        %p354 = pneg %p53
      $region38: #{basic_block_forward.3} parent=23 // pred_check_branch
        %356 = sbr.rel (%p354) target = $region40
      $region39: #{basic_block_forward.3} parent=23 // pred_region
        _
      $region40: #{basic_block_forward.3} parent=23 // pred_fallthru
        _
      // Predicated region
      $region41: #{basic_block_forward.3} parent=23 // pred_check
        %p357 = pneg %p74
      $region42: #{basic_block_forward.3} parent=23 // pred_check_branch
        %359 = sbr.rel (%p357) target = $region44
      $region43: #{basic_block_forward.3} parent=23 // pred_region
        _
      $region44: #{basic_block_forward.3} parent=23 // pred_fallthru
        _
    $region24: #{basic_block_forward.3} parent=5 // pred_fallthru
      _
    %p360 = scmp.le.s32.totalorder 2, %s9
    // Predicated region
    $region45: #{basic_block_forward.3} parent=5 // pred_check
      %p361 = pneg %p360
    $region46: #{basic_block_forward.3} parent=5 // pred_check_branch
      %363 = sbr.rel (%p361) target = $region48
    $region47: #{basic_block_forward.3} parent=5 // pred_region
      %s364 = ssub.s32 %s9, 2
    $region48: #{basic_block_forward.3} parent=5 // pred_fallthru
      _
  $region6: #{basic_block_forward.3} parent=0 // loop_footer
    %s13 = sadd.s32 1, %s9
  $region7: #{basic_block_forward.3} parent=0 // loop_footer_branch
    %8 = sbr.rel target = $region3
  $region8: #{basic_block_forward.3} parent=0 // loop_exit
    _

// kernel: basic_block_forward.4
$region0: #{basic_block_forward.4}
  #allocation0 [shape = 'u32[]', space=smem, size = 0x4, offset = 0x4, fixed_abs, tag = 'smem constant byte address 0x4 - core index']
  #allocation1 [shape = 'u32[144,128]{1,0:T(1,128)}', space=vmem, size = 0x12000, scoped, tag = 'internal scratch']
  %s0 = inlined_call_operand.vmem [shape: f32[2,16,16,4], index: 0, kind: input, shape index: {}]
  %s1 = inlined_call_operand.vmem [shape: f32[1,4], index: 1, kind: input, shape index: {}]
  %s2 = inlined_call_operand.vmem [shape: f32[1,4], index: 2, kind: input, shape index: {}]
  %s3 = inlined_call_operand.vmem [shape: f32[36,8], index: 3, kind: input, shape index: {}]
  %s4 = inlined_call_operand.vmem [shape: f32[1,8], index: 4, kind: input, shape index: {}]
  %s5 = inlined_call_operand.vmem [shape: f32[2,16,16,8], index: 5, kind: output, shape index: {0}]
  %s6 = inlined_call_operand.vmem [shape: f32[1,8], index: 6, kind: output, shape index: {1}]
  %s7 = inlined_call_operand.vmem [shape: f32[1,8], index: 7, kind: output, shape index: {2}]
  %8 = xla_tuple %s5, %s6, %s7
  %s9 = sld [smem:[#allocation0]]
  $region73: #{basic_block_forward.4} parent=0
    _
  %s11 = ssub.s32 1, %s9
  %s12 = scalar_select 0, %s11, %s9
  loop: start=0, step=1, limit=4
  $region2: #{basic_block_forward.4} parent=0 // loop_pre_header
    _
  $region3: #{basic_block_forward.4} parent=0 // loop_header
    %s14 = sphi 0, %s18
    %p15 = scmp.ge.s32.totalorder %s14, 4
    %s24 = sphi 0, %s26
    %s27 = sphi 0, %s24
    %s28 = sphi 0, %s27
    %s44 = sphi 0, %s28
    %s48 = sphi 0, %s48
    %s50 = sphi 0, %s48
    %s51 = sphi 0, %s50
    %s65 = sphi 0, %s51
    %s69 = sphi 0, %s69
    %s71 = sphi 0, %s69
    %s72 = sphi 0, %s71
    %s86 = sphi 0, %s72
    %s90 = sphi 0, %s90
    %s92 = sphi 0, %s90
    %s93 = sphi 0, %s92
    %s107 = sphi 0, %s93
    %s111 = sphi 0, %s111
    %s113 = sphi 0, %s111
    %s114 = sphi 0, %s113
    %s128 = sphi 0, %s114
    %s134 = sphi 0, %s136
    %s137 = sphi 0, %s134
    %s138 = sphi 0, %s137
    %s154 = sphi 0, %s138
    %s158 = sphi 0, %s158
    %s160 = sphi 0, %s158
    %s161 = sphi 0, %s160
    %s175 = sphi 0, %s161
    %s179 = sphi 0, %s179
    %s181 = sphi 0, %s179
    %s182 = sphi 0, %s181
    %s196 = sphi 0, %s182
  $region4: #{basic_block_forward.4} parent=0 // loop_header_branch
    %17 = sbr.rel (%p15) target = $region8
  $region5: #{basic_block_forward.4} parent=0 // loop_body
    %s19 = ssub.s32 %s14, 1
    %s20 = ssub.s32 %s14, 2
    %s21 = sadd.s32 %s14, 1
    %s22 = ssub.s32 %s14, %s21
    %p23 = scmp.eq.s32.totalorder %s22, 0
    %s25 = sadd.s32 %s24, 1
    %s26 = scalar_select %p23, %s24, %s25
    %p29 = pneg %p23
    %p30 = scmp.eq.s32.totalorder %s14, 1
    %p31 = por %p29, %p30
    %p32 = scmp.ne.s32.totalorder %s24, %s27
    %p33 = scmp.eq.s32.totalorder %s14, 0
    %p34 = por %p32, %p33
    %p35 = scmp.ne.s32.totalorder %s24, %s27
    %p36 = scmp.eq.s32.totalorder %s19, 1
    %p37 = por %p35, %p36
    %p38 = scmp.ne.s32.totalorder %s27, %s28
    %p39 = scmp.eq.s32.totalorder %s19, 0
    %p40 = por %p38, %p39
    %p41 = scmp.ne.s32.totalorder %s27, %s28
    %p42 = scmp.eq.s32.totalorder %s20, 1
    %p43 = por %p41, %p42
    %p45 = scmp.ne.s32.totalorder %s28, %s44
    %p46 = scmp.eq.s32.totalorder %s20, 0
    %p47 = por %p45, %p46
    %s49 = sadd.s32 %s48, 1
    %p52 = scmp.eq.s32.totalorder %s14, 1
    %p53 = scmp.ne.s32.totalorder %s48, %s50
    %p54 = scmp.eq.s32.totalorder %s14, 0
    %p55 = por %p53, %p54
    %p56 = scmp.ne.s32.totalorder %s48, %s50
    %p57 = scmp.eq.s32.totalorder %s19, 1
    %p58 = por %p56, %p57
    %p59 = scmp.ne.s32.totalorder %s50, %s51
    %p60 = scmp.eq.s32.totalorder %s19, 0
    %p61 = por %p59, %p60
    %p62 = scmp.ne.s32.totalorder %s50, %s51
    %p63 = scmp.eq.s32.totalorder %s20, 1
    %p64 = por %p62, %p63
    %p66 = scmp.ne.s32.totalorder %s51, %s65
    %p67 = scmp.eq.s32.totalorder %s20, 0
    %p68 = por %p66, %p67
    %s70 = sadd.s32 %s69, 1
    %p73 = scmp.eq.s32.totalorder %s14, 1
    %p74 = scmp.ne.s32.totalorder %s69, %s71
    %p75 = scmp.eq.s32.totalorder %s14, 0
    %p76 = por %p74, %p75
    %p77 = scmp.ne.s32.totalorder %s69, %s71
    %p78 = scmp.eq.s32.totalorder %s19, 1
    %p79 = por %p77, %p78
    %p80 = scmp.ne.s32.totalorder %s71, %s72
    %p81 = scmp.eq.s32.totalorder %s19, 0
    %p82 = por %p80, %p81
    %p83 = scmp.ne.s32.totalorder %s71, %s72
    %p84 = scmp.eq.s32.totalorder %s20, 1
    %p85 = por %p83, %p84
    %p87 = scmp.ne.s32.totalorder %s72, %s86
    %p88 = scmp.eq.s32.totalorder %s20, 0
    %p89 = por %p87, %p88
    %s91 = sadd.s32 %s90, 1
    %p94 = scmp.eq.s32.totalorder %s14, 1
    %p95 = scmp.ne.s32.totalorder %s90, %s92
    %p96 = scmp.eq.s32.totalorder %s14, 0
    %p97 = por %p95, %p96
    %p98 = scmp.ne.s32.totalorder %s90, %s92
    %p99 = scmp.eq.s32.totalorder %s19, 1
    %p100 = por %p98, %p99
    %p101 = scmp.ne.s32.totalorder %s92, %s93
    %p102 = scmp.eq.s32.totalorder %s19, 0
    %p103 = por %p101, %p102
    %p104 = scmp.ne.s32.totalorder %s92, %s93
    %p105 = scmp.eq.s32.totalorder %s20, 1
    %p106 = por %p104, %p105
    %p108 = scmp.ne.s32.totalorder %s93, %s107
    %p109 = scmp.eq.s32.totalorder %s20, 0
    %p110 = por %p108, %p109
    %s112 = sadd.s32 %s111, 1
    %p115 = scmp.eq.s32.totalorder %s14, 1
    %p116 = scmp.ne.s32.totalorder %s111, %s113
    %p117 = scmp.eq.s32.totalorder %s14, 0
    %p118 = por %p116, %p117
    %p119 = scmp.ne.s32.totalorder %s111, %s113
    %p120 = scmp.eq.s32.totalorder %s19, 1
    %p121 = por %p119, %p120
    %p122 = scmp.ne.s32.totalorder %s113, %s114
    %p123 = scmp.eq.s32.totalorder %s19, 0
    %p124 = por %p122, %p123
    %p125 = scmp.ne.s32.totalorder %s113, %s114
    %p126 = scmp.eq.s32.totalorder %s20, 1
    %p127 = por %p125, %p126
    %p129 = scmp.ne.s32.totalorder %s114, %s128
    %p130 = scmp.eq.s32.totalorder %s20, 0
    %p131 = por %p129, %p130
    %s132 = ssub.s32 %s14, %s21
    %p133 = scmp.eq.s32.totalorder %s132, 0
    %s135 = sadd.s32 %s134, 1
    %s136 = scalar_select %p133, %s134, %s135
    %p139 = pneg %p133
    %p140 = scmp.eq.s32.totalorder %s14, 1
    %p141 = por %p139, %p140
    %p142 = scmp.ne.s32.totalorder %s134, %s137
    %p143 = scmp.eq.s32.totalorder %s14, 0
    %p144 = por %p142, %p143
    %p145 = scmp.ne.s32.totalorder %s134, %s137
    %p146 = scmp.eq.s32.totalorder %s19, 1
    %p147 = por %p145, %p146
    %p148 = scmp.ne.s32.totalorder %s137, %s138
    %p149 = scmp.eq.s32.totalorder %s19, 0
    %p150 = por %p148, %p149
    %p151 = scmp.ne.s32.totalorder %s137, %s138
    %p152 = scmp.eq.s32.totalorder %s20, 1
    %p153 = por %p151, %p152
    %p155 = scmp.ne.s32.totalorder %s138, %s154
    %p156 = scmp.eq.s32.totalorder %s20, 0
    %p157 = por %p155, %p156
    %s159 = sadd.s32 %s158, 1
    %p162 = scmp.eq.s32.totalorder %s14, 1
    %p163 = scmp.ne.s32.totalorder %s158, %s160
    %p164 = scmp.eq.s32.totalorder %s14, 0
    %p165 = por %p163, %p164
    %p166 = scmp.ne.s32.totalorder %s158, %s160
    %p167 = scmp.eq.s32.totalorder %s19, 1
    %p168 = por %p166, %p167
    %p169 = scmp.ne.s32.totalorder %s160, %s161
    %p170 = scmp.eq.s32.totalorder %s19, 0
    %p171 = por %p169, %p170
    %p172 = scmp.ne.s32.totalorder %s160, %s161
    %p173 = scmp.eq.s32.totalorder %s20, 1
    %p174 = por %p172, %p173
    %p176 = scmp.ne.s32.totalorder %s161, %s175
    %p177 = scmp.eq.s32.totalorder %s20, 0
    %p178 = por %p176, %p177
    %s180 = sadd.s32 %s179, 1
    %p183 = scmp.eq.s32.totalorder %s14, 1
    %p184 = scmp.ne.s32.totalorder %s179, %s181
    %p185 = scmp.eq.s32.totalorder %s14, 0
    %p186 = por %p184, %p185
    %p187 = scmp.ne.s32.totalorder %s179, %s181
    %p188 = scmp.eq.s32.totalorder %s19, 1
    %p189 = por %p187, %p188
    %p190 = scmp.ne.s32.totalorder %s181, %s182
    %p191 = scmp.eq.s32.totalorder %s19, 0
    %p192 = por %p190, %p191
    %p193 = scmp.ne.s32.totalorder %s181, %s182
    %p194 = scmp.eq.s32.totalorder %s20, 1
    %p195 = por %p193, %p194
    %p197 = scmp.ne.s32.totalorder %s182, %s196
    %p198 = scmp.eq.s32.totalorder %s20, 0
    %p199 = por %p197, %p198
    %p200 = scmp.le.s32.totalorder 1, %s14
    %p201 = scmp.lt.s32.totalorder %s14, 3
    %p202 = pnand %p200, %p201
    %p203 = pneg %p202
    // Predicated region
    $region9: #{basic_block_forward.4} parent=5 // pred_check
      _
    $region10: #{basic_block_forward.4} parent=5 // pred_check_branch
      %205 = sbr.rel (%p202) target = $region12
    $region11: #{basic_block_forward.4} parent=5 // pred_region
      %s206 = ssub.s32 %s14, 1
      // Predicated region
      $region13: #{basic_block_forward.4} parent=11 // pred_check
        %p207 = pneg %p61
      $region14: #{basic_block_forward.4} parent=11 // pred_check_branch
        %209 = sbr.rel (%p207) target = $region16
      $region15: #{basic_block_forward.4} parent=11 // pred_region
        _
      $region16: #{basic_block_forward.4} parent=11 // pred_fallthru
        _
      // Predicated region
      $region17: #{basic_block_forward.4} parent=11 // pred_check
        %p210 = pneg %p82
      $region18: #{basic_block_forward.4} parent=11 // pred_check_branch
        %212 = sbr.rel (%p210) target = $region20
      $region19: #{basic_block_forward.4} parent=11 // pred_region
        _
      $region20: #{basic_block_forward.4} parent=11 // pred_fallthru
        _
      // Predicated region
      $region21: #{basic_block_forward.4} parent=11 // pred_check
        %p213 = pneg %p103
      $region22: #{basic_block_forward.4} parent=11 // pred_check_branch
        %215 = sbr.rel (%p213) target = $region24
      $region23: #{basic_block_forward.4} parent=11 // pred_region
        _
      $region24: #{basic_block_forward.4} parent=11 // pred_fallthru
        _
      // Predicated region
      $region25: #{basic_block_forward.4} parent=11 // pred_check
        %p216 = pneg %p124
      $region26: #{basic_block_forward.4} parent=11 // pred_check_branch
        %218 = sbr.rel (%p216) target = $region28
      $region27: #{basic_block_forward.4} parent=11 // pred_region
        _
      $region28: #{basic_block_forward.4} parent=11 // pred_fallthru
        _
    $region12: #{basic_block_forward.4} parent=5 // pred_fallthru
      _
    %p219 = scmp.lt.s32.totalorder %s14, 2
    // Predicated region
    $region29: #{basic_block_forward.4} parent=5 // pred_check
      %p220 = pneg %p219
    $region30: #{basic_block_forward.4} parent=5 // pred_check_branch
      %222 = sbr.rel (%p220) target = $region32
    $region31: #{basic_block_forward.4} parent=5 // pred_region
      // Predicated region
      $region33: #{basic_block_forward.4} parent=31 // pred_check
        %p223 = pneg %p34
      $region34: #{basic_block_forward.4} parent=31 // pred_check_branch
        %225 = sbr.rel (%p223) target = $region36
      $region35: #{basic_block_forward.4} parent=31 // pred_region
        %p226 = scmp.lt.s32.totalorder %s14, 1
        %s227 = scalar_select %p226, %s14, 1
        %s228 = smul.addr %s227, 32
        %s229 = smul.addr %s228, 8
        %s230 = scalar_lea.vmem %s0, %s229
      $region36: #{basic_block_forward.4} parent=31 // pred_fallthru
        _
    $region32: #{basic_block_forward.4} parent=5 // pred_fallthru
      _
    %p231 = scmp.le.s32.totalorder 1, %s14
    %p232 = scmp.lt.s32.totalorder %s14, 3
    %p233 = pnand %p231, %p232
    %p234 = pneg %p233
    // Predicated region
    $region37: #{basic_block_forward.4} parent=5 // pred_check
      _
    $region38: #{basic_block_forward.4} parent=5 // pred_check_branch
      %236 = sbr.rel (%p233) target = $region40
    $region39: #{basic_block_forward.4} parent=5 // pred_region
      %s237 = ssub.s32 %s14, 1
      %p238 = scmp.lt.s32.totalorder %s19, 1
      %s239 = scalar_select %p238, %s19, 1
      %s240 = smul.addr %s239, 32
      %s241 = smul.addr %s240, 8
      %s242 = scalar_lea.vmem %s0, %s241
      %p243 = pneg %p40
      %p244 = pneg %p37
      %p245 = pneg %p61
      %p246 = pneg %p58
      %p247 = pneg %p82
      %p248 = pneg %p79
      %p249 = pneg %p103
      %p250 = pneg %p100
      %p251 = pneg %p124
      %p252 = pneg %p121
      %p253 = pneg %p150
      %p254 = pneg %p147
      %p255 = scmp.lt.s32.totalorder %s19, 1
      %s256 = scalar_select %p255, %s19, 1
      %s257 = smul.addr %s256, 32
      %s258 = smul.addr %s257, 8
      %s259 = scalar_lea.vmem %s5, %s258
      %p260 = pneg %p171
      %p261 = pneg %p168
      %p262 = pneg %p192
      %p263 = pneg %p189
      %p264 = scmp.lt.s32.totalorder %s19, 1
      %s265 = scalar_select %p264, %s19, 1
      %s266 = smul.addr %s265, 32
      %s267 = smul.addr %s266, 8
      %s268 = scalar_lea.vmem %s0, %s267
      %p269 = scmp.lt.s32.totalorder %s19, 1
      %s270 = scalar_select %p269, %s19, 1
      %s271 = smul.addr %s270, 32
      %s272 = smul.addr %s271, 8
      %s273 = scalar_lea.vmem %s5, %s272
      %p274 = scmp.eq.s32.totalorder %s19, 0
      // Predicated region
      $region41: #{basic_block_forward.4} parent=39 // pred_check
        %p275 = pneg %p274
      $region42: #{basic_block_forward.4} parent=39 // pred_check_branch
        %277 = sbr.rel (%p275) target = $region44
      $region43: #{basic_block_forward.4} parent=39 // pred_region
        %vm278 = vcmask 57344
        %279 = vst.msk [vmem:[%s6] sm:$0x1] %vm278, 0.0
        %280 = vst.msk [vmem:[%s7] sm:$0x1] %vm278, 0.0
      $region44: #{basic_block_forward.4} parent=39 // pred_fallthru
        _
      %v281 = vld [vmem:[%s268] sm:$0xff]
      %v282 = vld [vmem:[%s268 + $0x8] sm:$0xff]
      %v283 = vld [vmem:[%s268 + $0x10] sm:$0xff]
      %v284 = vld [vmem:[%s268 + $0x18] sm:$0xff]
      %v285 = vld [vmem:[%s268 + $0x20] sm:$0xff]
      %v286 = vld [vmem:[%s268 + $0x28] sm:$0xff]
      %v287 = vld [vmem:[%s268 + $0x30] sm:$0xff]
      %v288 = vld [vmem:[%s268 + $0x38] sm:$0xff]
      %v289 = vld [vmem:[%s268 + $0x40] sm:$0xff]
      %v290 = vld [vmem:[%s268 + $0x48] sm:$0xff]
      %v291 = vld [vmem:[%s268 + $0x50] sm:$0xff]
      %v292 = vld [vmem:[%s268 + $0x58] sm:$0xff]
      %v293 = vld [vmem:[%s268 + $0x60] sm:$0xff]
      %v294 = vld [vmem:[%s268 + $0x68] sm:$0xff]
      %v295 = vld [vmem:[%s268 + $0x70] sm:$0xff]
      %v296 = vld [vmem:[%s268 + $0x78] sm:$0xff]
      %v297 = vld [vmem:[%s268 + $0x80] sm:$0xff]
      %v298 = vld [vmem:[%s268 + $0x88] sm:$0xff]
      %v299 = vld [vmem:[%s268 + $0x90] sm:$0xff]
      %v300 = vld [vmem:[%s268 + $0x98] sm:$0xff]
      %v301 = vld [vmem:[%s268 + $0xa0] sm:$0xff]
      %v302 = vld [vmem:[%s268 + $0xa8] sm:$0xff]
      %v303 = vld [vmem:[%s268 + $0xb0] sm:$0xff]
      %v304 = vld [vmem:[%s268 + $0xb8] sm:$0xff]
      %v305 = vld [vmem:[%s268 + $0xc0] sm:$0xff]
      %v306 = vld [vmem:[%s268 + $0xc8] sm:$0xff]
      %v307 = vld [vmem:[%s268 + $0xd0] sm:$0xff]
      %v308 = vld [vmem:[%s268 + $0xd8] sm:$0xff]
      %v309 = vld [vmem:[%s268 + $0xe0] sm:$0xff]
      %v310 = vld [vmem:[%s268 + $0xe8] sm:$0xff]
      %v311 = vld [vmem:[%s268 + $0xf0] sm:$0xff]
      %v312 = vld [vmem:[%s268 + $0xf8] sm:$0xff]
      %v313 = vld [vmem:[%s1] sm:$0x1]
      %v314 = vld [vmem:[%s2] sm:$0x1]
      %v316 = vlaneseq
      %v317 = vshrl.u32 %v316, 7
      %v318 = vsub.s32 0, %v317
      %v319 = vrot.slane %v313, %v318
      %v321 = vmul.f32 %v281, %v319
      %v322 = vmul.f32 %v282, %v319
      %v323 = vmul.f32 %v283, %v319
      %v324 = vmul.f32 %v284, %v319
      %v325 = vmul.f32 %v285, %v319
      %v326 = vmul.f32 %v286, %v319
      %v327 = vmul.f32 %v287, %v319
      %v328 = vmul.f32 %v288, %v319
      %v329 = vmul.f32 %v289, %v319
      %v330 = vmul.f32 %v290, %v319
      %v331 = vmul.f32 %v291, %v319
      %v332 = vmul.f32 %v292, %v319
      %v333 = vmul.f32 %v293, %v319
      %v334 = vmul.f32 %v294, %v319
      %v335 = vmul.f32 %v295, %v319
      %v336 = vmul.f32 %v296, %v319
      %v337 = vmul.f32 %v297, %v319
      %v338 = vmul.f32 %v298, %v319
      %v339 = vmul.f32 %v299, %v319
      %v340 = vmul.f32 %v300, %v319
      %v341 = vmul.f32 %v301, %v319
      %v342 = vmul.f32 %v302, %v319
      %v343 = vmul.f32 %v303, %v319
      %v344 = vmul.f32 %v304, %v319
      %v345 = vmul.f32 %v305, %v319
      %v346 = vmul.f32 %v306, %v319
      %v347 = vmul.f32 %v307, %v319
      %v348 = vmul.f32 %v308, %v319
      %v349 = vmul.f32 %v309, %v319
      %v350 = vmul.f32 %v310, %v319
      %v351 = vmul.f32 %v311, %v319
      %v352 = vmul.f32 %v312, %v319
      %v354 = vlaneseq
      %v355 = vshrl.u32 %v354, 7
      %v356 = vsub.s32 0, %v355
      %v357 = vrot.slane %v314, %v356
      %v359 = vadd.f32 %v321, %v357
      %v360 = vadd.f32 %v322, %v357
      %v361 = vadd.f32 %v323, %v357
      %v362 = vadd.f32 %v324, %v357
      %v363 = vadd.f32 %v325, %v357
      %v364 = vadd.f32 %v326, %v357
      %v365 = vadd.f32 %v327, %v357
      %v366 = vadd.f32 %v328, %v357
      %v367 = vadd.f32 %v329, %v357
      %v368 = vadd.f32 %v330, %v357
      %v369 = vadd.f32 %v331, %v357
      %v370 = vadd.f32 %v332, %v357
      %v371 = vadd.f32 %v333, %v357
      %v372 = vadd.f32 %v334, %v357
      %v373 = vadd.f32 %v335, %v357
      %v374 = vadd.f32 %v336, %v357
      %v375 = vadd.f32 %v337, %v357
      %v376 = vadd.f32 %v338, %v357
      %v377 = vadd.f32 %v339, %v357
      %v378 = vadd.f32 %v340, %v357
      %v379 = vadd.f32 %v341, %v357
      %v380 = vadd.f32 %v342, %v357
      %v381 = vadd.f32 %v343, %v357
      %v382 = vadd.f32 %v344, %v357
      %v383 = vadd.f32 %v345, %v357
      %v384 = vadd.f32 %v346, %v357
      %v385 = vadd.f32 %v347, %v357
      %v386 = vadd.f32 %v348, %v357
      %v387 = vadd.f32 %v349, %v357
      %v388 = vadd.f32 %v350, %v357
      %v389 = vadd.f32 %v351, %v357
      %v390 = vadd.f32 %v352, %v357
      %vm391 = vcmp.ge.f32.partialorder %v359, 0.0
      %vm392 = vcmp.ge.f32.partialorder %v360, 0.0
      %vm393 = vcmp.ge.f32.partialorder %v361, 0.0
      %vm394 = vcmp.ge.f32.partialorder %v362, 0.0
      %vm395 = vcmp.ge.f32.partialorder %v363, 0.0
      %vm396 = vcmp.ge.f32.partialorder %v364, 0.0
      %vm397 = vcmp.ge.f32.partialorder %v365, 0.0
      %vm398 = vcmp.ge.f32.partialorder %v366, 0.0
      %vm399 = vcmp.ge.f32.partialorder %v367, 0.0
      %vm400 = vcmp.ge.f32.partialorder %v368, 0.0
      %vm401 = vcmp.ge.f32.partialorder %v369, 0.0
      %vm402 = vcmp.ge.f32.partialorder %v370, 0.0
      %vm403 = vcmp.ge.f32.partialorder %v371, 0.0
      %vm404 = vcmp.ge.f32.partialorder %v372, 0.0
      %vm405 = vcmp.ge.f32.partialorder %v373, 0.0
      %vm406 = vcmp.ge.f32.partialorder %v374, 0.0
      %vm407 = vcmp.ge.f32.partialorder %v375, 0.0
      %vm408 = vcmp.ge.f32.partialorder %v376, 0.0
      %vm409 = vcmp.ge.f32.partialorder %v377, 0.0
      %vm410 = vcmp.ge.f32.partialorder %v378, 0.0
      %vm411 = vcmp.ge.f32.partialorder %v379, 0.0
      %vm412 = vcmp.ge.f32.partialorder %v380, 0.0
      %vm413 = vcmp.ge.f32.partialorder %v381, 0.0
      %vm414 = vcmp.ge.f32.partialorder %v382, 0.0
      %vm415 = vcmp.ge.f32.partialorder %v383, 0.0
      %vm416 = vcmp.ge.f32.partialorder %v384, 0.0
      %vm417 = vcmp.ge.f32.partialorder %v385, 0.0
      %vm418 = vcmp.ge.f32.partialorder %v386, 0.0
      %vm419 = vcmp.ge.f32.partialorder %v387, 0.0
      %vm420 = vcmp.ge.f32.partialorder %v388, 0.0
      %vm421 = vcmp.ge.f32.partialorder %v389, 0.0
      %vm422 = vcmp.ge.f32.partialorder %v390, 0.0
      %v423 = vmul.f32 %v359, 0.2
      %v424 = vmul.f32 %v360, 0.2
      %v425 = vmul.f32 %v361, 0.2
      %v426 = vmul.f32 %v362, 0.2
      %v427 = vmul.f32 %v363, 0.2
      %v428 = vmul.f32 %v364, 0.2
      %v429 = vmul.f32 %v365, 0.2
      %v430 = vmul.f32 %v366, 0.2
      %v431 = vmul.f32 %v367, 0.2
      %v432 = vmul.f32 %v368, 0.2
      %v433 = vmul.f32 %v369, 0.2
      %v434 = vmul.f32 %v370, 0.2
      %v435 = vmul.f32 %v371, 0.2
      %v436 = vmul.f32 %v372, 0.2
      %v437 = vmul.f32 %v373, 0.2
      %v438 = vmul.f32 %v374, 0.2
      %v439 = vmul.f32 %v375, 0.2
      %v440 = vmul.f32 %v376, 0.2
      %v441 = vmul.f32 %v377, 0.2
      %v442 = vmul.f32 %v378, 0.2
      %v443 = vmul.f32 %v379, 0.2
      %v444 = vmul.f32 %v380, 0.2
      %v445 = vmul.f32 %v381, 0.2
      %v446 = vmul.f32 %v382, 0.2
      %v447 = vmul.f32 %v383, 0.2
      %v448 = vmul.f32 %v384, 0.2
      %v449 = vmul.f32 %v385, 0.2
      %v450 = vmul.f32 %v386, 0.2
      %v451 = vmul.f32 %v387, 0.2
      %v452 = vmul.f32 %v388, 0.2
      %v453 = vmul.f32 %v389, 0.2
      %v454 = vmul.f32 %v390, 0.2
      %v455 = vsel %vm391, %v359, %v423
      %v456 = vsel %vm392, %v360, %v424
      %v457 = vsel %vm393, %v361, %v425
      %v458 = vsel %vm394, %v362, %v426
      %v459 = vsel %vm395, %v363, %v427
      %v460 = vsel %vm396, %v364, %v428
      %v461 = vsel %vm397, %v365, %v429
      %v462 = vsel %vm398, %v366, %v430
      %v463 = vsel %vm399, %v367, %v431
      %v464 = vsel %vm400, %v368, %v432
      %v465 = vsel %vm401, %v369, %v433
      %v466 = vsel %vm402, %v370, %v434
      %v467 = vsel %vm403, %v371, %v435
      %v468 = vsel %vm404, %v372, %v436
      %v469 = vsel %vm405, %v373, %v437
      %v470 = vsel %vm406, %v374, %v438
      %v471 = vsel %vm407, %v375, %v439
      %v472 = vsel %vm408, %v376, %v440
      %v473 = vsel %vm409, %v377, %v441
      %v474 = vsel %vm410, %v378, %v442
      %v475 = vsel %vm411, %v379, %v443
      %v476 = vsel %vm412, %v380, %v444
      %v477 = vsel %vm413, %v381, %v445
      %v478 = vsel %vm414, %v382, %v446
      %v479 = vsel %vm415, %v383, %v447
      %v480 = vsel %vm416, %v384, %v448
      %v481 = vsel %vm417, %v385, %v449
      %v482 = vsel %vm418, %v386, %v450
      %v483 = vsel %vm419, %v387, %v451
      %v484 = vsel %vm420, %v388, %v452
      %v485 = vsel %vm421, %v389, %v453
      %v486 = vsel %vm422, %v390, %v454
      %vm520 = vcmask 1040384
      %v521 = vrot.slane 0.0, 7
      %v522 = vsel %vm520, %v521, %v521
      %v523 = vrot.slane %v455, 7
      %v524 = vrot.slane %v456, 7
      %v525 = vsel %vm520, %v523, %v524
      %v526 = vrot.slane %v457, 7
      %v527 = vrot.slane %v458, 7
      %v528 = vsel %vm520, %v526, %v527
      %v529 = vrot.slane %v459, 7
      %v530 = vrot.slane %v460, 7
      %v531 = vsel %vm520, %v529, %v530
      %v532 = vrot.slane %v461, 7
      %v533 = vrot.slane %v462, 7
      %v534 = vsel %vm520, %v532, %v533
      %v535 = vrot.slane %v463, 7
      %v536 = vrot.slane %v464, 7
      %v537 = vsel %vm520, %v535, %v536
      %v538 = vrot.slane %v465, 7
      %v539 = vrot.slane %v466, 7
      %v540 = vsel %vm520, %v538, %v539
      %v541 = vrot.slane %v467, 7
      %v542 = vrot.slane %v468, 7
      %v543 = vsel %vm520, %v541, %v542
      %v544 = vrot.slane %v469, 7
      %v545 = vrot.slane %v470, 7
      %v546 = vsel %vm520, %v544, %v545
      %v547 = vrot.slane %v471, 7
      %v548 = vrot.slane %v472, 7
      %v549 = vsel %vm520, %v547, %v548
      %v550 = vrot.slane %v473, 7
      %v551 = vrot.slane %v474, 7
      %v552 = vsel %vm520, %v550, %v551
      %v553 = vrot.slane %v475, 7
      %v554 = vrot.slane %v476, 7
      %v555 = vsel %vm520, %v553, %v554
      %v556 = vrot.slane %v477, 7
      %v557 = vrot.slane %v478, 7
      %v558 = vsel %vm520, %v556, %v557
      %v559 = vrot.slane %v479, 7
      %v560 = vrot.slane %v480, 7
      %v561 = vsel %vm520, %v559, %v560
      %v562 = vrot.slane %v481, 7
      %v563 = vrot.slane %v482, 7
      %v564 = vsel %vm520, %v562, %v563
      %v565 = vrot.slane %v483, 7
      %v566 = vrot.slane %v484, 7
      %v567 = vsel %vm520, %v565, %v566
      %v568 = vrot.slane %v485, 7
      %v569 = vrot.slane %v486, 7
      %v570 = vsel %vm520, %v568, %v569
      %v620 = vsel %vm520, 0.0, %v521
      %v621 = vsel %vm520, 0.0, %v523
      %v622 = vsel %vm520, 0.0, %v526
      %v623 = vsel %vm520, 0.0, %v529
      %v624 = vsel %vm520, 0.0, %v532
      %v625 = vsel %vm520, 0.0, %v535
      %v626 = vsel %vm520, 0.0, %v538
      %v627 = vsel %vm520, 0.0, %v541
      %v628 = vsel %vm520, 0.0, %v544
      %v629 = vsel %vm520, 0.0, %v547
      %v630 = vsel %vm520, 0.0, %v550
      %v631 = vsel %vm520, 0.0, %v553
      %v632 = vsel %vm520, 0.0, %v556
      %v633 = vsel %vm520, 0.0, %v559
      %v634 = vsel %vm520, 0.0, %v562
      %v635 = vsel %vm520, 0.0, %v565
      %v636 = vsel %vm520, 0.0, %v568
      %v637 = vsel %vm520, %v521, 0.0
      %v638 = vsel %vm520, %v524, 0.0
      %v639 = vsel %vm520, %v527, 0.0
      %v640 = vsel %vm520, %v530, 0.0
      %v641 = vsel %vm520, %v533, 0.0
      %v642 = vsel %vm520, %v536, 0.0
      %v643 = vsel %vm520, %v539, 0.0
      %v644 = vsel %vm520, %v542, 0.0
      %v645 = vsel %vm520, %v545, 0.0
      %v646 = vsel %vm520, %v548, 0.0
      %v647 = vsel %vm520, %v551, 0.0
      %v648 = vsel %vm520, %v554, 0.0
      %v649 = vsel %vm520, %v557, 0.0
      %v650 = vsel %vm520, %v560, 0.0
      %v651 = vsel %vm520, %v563, 0.0
      %v652 = vsel %vm520, %v566, 0.0
      %v653 = vsel %vm520, %v569, 0.0
      %vm686 = vcmask 1046528
      %v687 = vrot.slane %v620, 1
      %v688 = vrot.slane %v522, 1
      %v689 = vsel %vm686, %v687, %v688
      %v690 = vrot.slane %v637, 1
      %v691 = vsel %vm686, %v688, %v690
      %v692 = vrot.slane %v621, 1
      %v693 = vrot.slane %v525, 1
      %v694 = vsel %vm686, %v692, %v693
      %v695 = vrot.slane %v638, 1
      %v696 = vsel %vm686, %v693, %v695
      %v697 = vrot.slane %v622, 1
      %v698 = vrot.slane %v528, 1
      %v699 = vsel %vm686, %v697, %v698
      %v700 = vrot.slane %v639, 1
      %v701 = vsel %vm686, %v698, %v700
      %v702 = vrot.slane %v623, 1
      %v703 = vrot.slane %v531, 1
      %v704 = vsel %vm686, %v702, %v703
      %v705 = vrot.slane %v640, 1
      %v706 = vsel %vm686, %v703, %v705
      %v707 = vrot.slane %v624, 1
      %v708 = vrot.slane %v534, 1
      %v709 = vsel %vm686, %v707, %v708
      %v710 = vrot.slane %v641, 1
      %v711 = vsel %vm686, %v708, %v710
      %v712 = vrot.slane %v625, 1
      %v713 = vrot.slane %v537, 1
      %v714 = vsel %vm686, %v712, %v713
      %v715 = vrot.slane %v642, 1
      %v716 = vsel %vm686, %v713, %v715
      %v717 = vrot.slane %v626, 1
      %v718 = vrot.slane %v540, 1
      %v719 = vsel %vm686, %v717, %v718
      %v720 = vrot.slane %v643, 1
      %v721 = vsel %vm686, %v718, %v720
      %v722 = vrot.slane %v627, 1
      %v723 = vrot.slane %v543, 1
      %v724 = vsel %vm686, %v722, %v723
      %v725 = vrot.slane %v644, 1
      %v726 = vsel %vm686, %v723, %v725
      %v727 = vrot.slane %v628, 1
      %v728 = vrot.slane %v546, 1
      %v729 = vsel %vm686, %v727, %v728
      %v730 = vrot.slane %v645, 1
      %v731 = vsel %vm686, %v728, %v730
      %v732 = vrot.slane %v629, 1
      %v733 = vrot.slane %v549, 1
      %v734 = vsel %vm686, %v732, %v733
      %v735 = vrot.slane %v646, 1
      %v736 = vsel %vm686, %v733, %v735
      %v737 = vrot.slane %v630, 1
      %v738 = vrot.slane %v552, 1
      %v739 = vsel %vm686, %v737, %v738
      %v740 = vrot.slane %v647, 1
      %v741 = vsel %vm686, %v738, %v740
      %v742 = vrot.slane %v631, 1
      %v743 = vrot.slane %v555, 1
      %v744 = vsel %vm686, %v742, %v743
      %v745 = vrot.slane %v648, 1
      %v746 = vsel %vm686, %v743, %v745
      %v747 = vrot.slane %v632, 1
      %v748 = vrot.slane %v558, 1
      %v749 = vsel %vm686, %v747, %v748
      %v750 = vrot.slane %v649, 1
      %v751 = vsel %vm686, %v748, %v750
      %v752 = vrot.slane %v633, 1
      %v753 = vrot.slane %v561, 1
      %v754 = vsel %vm686, %v752, %v753
      %v755 = vrot.slane %v650, 1
      %v756 = vsel %vm686, %v753, %v755
      %v757 = vrot.slane %v634, 1
      %v758 = vrot.slane %v564, 1
      %v759 = vsel %vm686, %v757, %v758
      %v760 = vrot.slane %v651, 1
      %v761 = vsel %vm686, %v758, %v760
      %v762 = vrot.slane %v635, 1
      %v763 = vrot.slane %v567, 1
      %v764 = vsel %vm686, %v762, %v763
      %v765 = vrot.slane %v652, 1
      %v766 = vsel %vm686, %v763, %v765
      %767 = vrot.lane.b32.xlu0 %v689, 4
      %v768 = vpop.permute.xlu0 %767
      %769 = vrot.lane.b32.xlu0 %v691, 4
      %v770 = vpop.permute.xlu0 %769
      %771 = vrot.lane.b32.xlu0 %v694, 4
      %v772 = vpop.permute.xlu0 %771
      %773 = vrot.lane.b32.xlu0 %v696, 4
      %v774 = vpop.permute.xlu0 %773
      %775 = vrot.lane.b32.xlu0 %v699, 4
      %v776 = vpop.permute.xlu0 %775
      %777 = vrot.lane.b32.xlu0 %v701, 4
      %v778 = vpop.permute.xlu0 %777
      %779 = vrot.lane.b32.xlu0 %v704, 4
      %v780 = vpop.permute.xlu0 %779
      %781 = vrot.lane.b32.xlu0 %v706, 4
      %v782 = vpop.permute.xlu0 %781
      %783 = vrot.lane.b32.xlu0 %v709, 4
      %v784 = vpop.permute.xlu0 %783
      %785 = vrot.lane.b32.xlu0 %v711, 4
      %v786 = vpop.permute.xlu0 %785
      %787 = vrot.lane.b32.xlu0 %v714, 4
      %v788 = vpop.permute.xlu0 %787
      %789 = vrot.lane.b32.xlu0 %v716, 4
      %v790 = vpop.permute.xlu0 %789
      %791 = vrot.lane.b32.xlu0 %v719, 4
      %v792 = vpop.permute.xlu0 %791
      %793 = vrot.lane.b32.xlu0 %v721, 4
      %v794 = vpop.permute.xlu0 %793
      %795 = vrot.lane.b32.xlu0 %v724, 4
      %v796 = vpop.permute.xlu0 %795
      %797 = vrot.lane.b32.xlu0 %v726, 4
      %v798 = vpop.permute.xlu0 %797
      %799 = vrot.lane.b32.xlu0 %v729, 4
      %v800 = vpop.permute.xlu0 %799
      %801 = vrot.lane.b32.xlu0 %v731, 4
      %v802 = vpop.permute.xlu0 %801
      %803 = vrot.lane.b32.xlu0 %v734, 4
      %v804 = vpop.permute.xlu0 %803
      %805 = vrot.lane.b32.xlu0 %v736, 4
      %v806 = vpop.permute.xlu0 %805
      %807 = vrot.lane.b32.xlu0 %v739, 4
      %v808 = vpop.permute.xlu0 %807
      %809 = vrot.lane.b32.xlu0 %v741, 4
      %v810 = vpop.permute.xlu0 %809
      %811 = vrot.lane.b32.xlu0 %v744, 4
      %v812 = vpop.permute.xlu0 %811
      %813 = vrot.lane.b32.xlu0 %v746, 4
      %v814 = vpop.permute.xlu0 %813
      %815 = vrot.lane.b32.xlu0 %v749, 4
      %v816 = vpop.permute.xlu0 %815
      %817 = vrot.lane.b32.xlu0 %v751, 4
      %v818 = vpop.permute.xlu0 %817
      %819 = vrot.lane.b32.xlu0 %v754, 4
      %v820 = vpop.permute.xlu0 %819
      %821 = vrot.lane.b32.xlu0 %v756, 4
      %v822 = vpop.permute.xlu0 %821
      %823 = vrot.lane.b32.xlu0 %v759, 4
      %v824 = vpop.permute.xlu0 %823
      %825 = vrot.lane.b32.xlu0 %v761, 4
      %v826 = vpop.permute.xlu0 %825
      %827 = vrot.lane.b32.xlu0 %v764, 4
      %v828 = vpop.permute.xlu0 %827
      %829 = vrot.lane.b32.xlu0 %v766, 4
      %v830 = vpop.permute.xlu0 %829
      %vm863 = vcmask 1045504
      %v864 = vrot.slane %v620, 2
      %v865 = vrot.slane %v522, 2
      %v866 = vsel %vm863, %v864, %v865
      %v867 = vrot.slane %v637, 2
      %v868 = vsel %vm863, %v865, %v867
      %v869 = vrot.slane %v621, 2
      %v870 = vrot.slane %v525, 2
      %v871 = vsel %vm863, %v869, %v870
      %v872 = vrot.slane %v638, 2
      %v873 = vsel %vm863, %v870, %v872
      %v874 = vrot.slane %v622, 2
      %v875 = vrot.slane %v528, 2
      %v876 = vsel %vm863, %v874, %v875
      %v877 = vrot.slane %v639, 2
      %v878 = vsel %vm863, %v875, %v877
      %v879 = vrot.slane %v623, 2
      %v880 = vrot.slane %v531, 2
      %v881 = vsel %vm863, %v879, %v880
      %v882 = vrot.slane %v640, 2
      %v883 = vsel %vm863, %v880, %v882
      %v884 = vrot.slane %v624, 2
      %v885 = vrot.slane %v534, 2
      %v886 = vsel %vm863, %v884, %v885
      %v887 = vrot.slane %v641, 2
      %v888 = vsel %vm863, %v885, %v887
      %v889 = vrot.slane %v625, 2
      %v890 = vrot.slane %v537, 2
      %v891 = vsel %vm863, %v889, %v890
      %v892 = vrot.slane %v642, 2
      %v893 = vsel %vm863, %v890, %v892
      %v894 = vrot.slane %v626, 2
      %v895 = vrot.slane %v540, 2
      %v896 = vsel %vm863, %v894, %v895
      %v897 = vrot.slane %v643, 2
      %v898 = vsel %vm863, %v895, %v897
      %v899 = vrot.slane %v627, 2
      %v900 = vrot.slane %v543, 2
      %v901 = vsel %vm863, %v899, %v900
      %v902 = vrot.slane %v644, 2
      %v903 = vsel %vm863, %v900, %v902
      %v904 = vrot.slane %v628, 2
      %v905 = vrot.slane %v546, 2
      %v906 = vsel %vm863, %v904, %v905
      %v907 = vrot.slane %v645, 2
      %v908 = vsel %vm863, %v905, %v907
      %v909 = vrot.slane %v629, 2
      %v910 = vrot.slane %v549, 2
      %v911 = vsel %vm863, %v909, %v910
      %v912 = vrot.slane %v646, 2
      %v913 = vsel %vm863, %v910, %v912
      %v914 = vrot.slane %v630, 2
      %v915 = vrot.slane %v552, 2
      %v916 = vsel %vm863, %v914, %v915
      %v917 = vrot.slane %v647, 2
      %v918 = vsel %vm863, %v915, %v917
      %v919 = vrot.slane %v631, 2
      %v920 = vrot.slane %v555, 2
      %v921 = vsel %vm863, %v919, %v920
      %v922 = vrot.slane %v648, 2
      %v923 = vsel %vm863, %v920, %v922
      %v924 = vrot.slane %v632, 2
      %v925 = vrot.slane %v558, 2
      %v926 = vsel %vm863, %v924, %v925
      %v927 = vrot.slane %v649, 2
      %v928 = vsel %vm863, %v925, %v927
      %v929 = vrot.slane %v633, 2
      %v930 = vrot.slane %v561, 2
      %v931 = vsel %vm863, %v929, %v930
      %v932 = vrot.slane %v650, 2
      %v933 = vsel %vm863, %v930, %v932
      %v934 = vrot.slane %v634, 2
      %v935 = vrot.slane %v564, 2
      %v936 = vsel %vm863, %v934, %v935
      %v937 = vrot.slane %v651, 2
      %v938 = vsel %vm863, %v935, %v937
      %v939 = vrot.slane %v635, 2
      %v940 = vrot.slane %v567, 2
      %v941 = vsel %vm863, %v939, %v940
      %v942 = vrot.slane %v652, 2
      %v943 = vsel %vm863, %v940, %v942
      %944 = vrot.lane.b32.xlu0 %v866, 8
      %v945 = vpop.permute.xlu0 %944
      %946 = vrot.lane.b32.xlu0 %v868, 8
      %v947 = vpop.permute.xlu0 %946
      %948 = vrot.lane.b32.xlu0 %v871, 8
      %v949 = vpop.permute.xlu0 %948
      %950 = vrot.lane.b32.xlu0 %v873, 8
      %v951 = vpop.permute.xlu0 %950
      %952 = vrot.lane.b32.xlu0 %v876, 8
      %v953 = vpop.permute.xlu0 %952
      %954 = vrot.lane.b32.xlu0 %v878, 8
      %v955 = vpop.permute.xlu0 %954
      %956 = vrot.lane.b32.xlu0 %v881, 8
      %v957 = vpop.permute.xlu0 %956
      %958 = vrot.lane.b32.xlu0 %v883, 8
      %v959 = vpop.permute.xlu0 %958
      %960 = vrot.lane.b32.xlu0 %v886, 8
      %v961 = vpop.permute.xlu0 %960
      %962 = vrot.lane.b32.xlu0 %v888, 8
      %v963 = vpop.permute.xlu0 %962
      %964 = vrot.lane.b32.xlu0 %v891, 8
      %v965 = vpop.permute.xlu0 %964
      %966 = vrot.lane.b32.xlu0 %v893, 8
      %v967 = vpop.permute.xlu0 %966
      %968 = vrot.lane.b32.xlu0 %v896, 8
      %v969 = vpop.permute.xlu0 %968
      %970 = vrot.lane.b32.xlu0 %v898, 8
      %v971 = vpop.permute.xlu0 %970
      %972 = vrot.lane.b32.xlu0 %v901, 8
      %v973 = vpop.permute.xlu0 %972
      %974 = vrot.lane.b32.xlu0 %v903, 8
      %v975 = vpop.permute.xlu0 %974
      %976 = vrot.lane.b32.xlu0 %v906, 8
      %v977 = vpop.permute.xlu0 %976
      %978 = vrot.lane.b32.xlu0 %v908, 8
      %v979 = vpop.permute.xlu0 %978
      %980 = vrot.lane.b32.xlu0 %v911, 8
      %v981 = vpop.permute.xlu0 %980
      %982 = vrot.lane.b32.xlu0 %v913, 8
      %v983 = vpop.permute.xlu0 %982
      %984 = vrot.lane.b32.xlu0 %v916, 8
      %v985 = vpop.permute.xlu0 %984
      %986 = vrot.lane.b32.xlu0 %v918, 8
      %v987 = vpop.permute.xlu0 %986
      %988 = vrot.lane.b32.xlu0 %v921, 8
      %v989 = vpop.permute.xlu0 %988
      %990 = vrot.lane.b32.xlu0 %v923, 8
      %v991 = vpop.permute.xlu0 %990
      %992 = vrot.lane.b32.xlu0 %v926, 8
      %v993 = vpop.permute.xlu0 %992
      %994 = vrot.lane.b32.xlu0 %v928, 8
      %v995 = vpop.permute.xlu0 %994
      %996 = vrot.lane.b32.xlu0 %v931, 8
      %v997 = vpop.permute.xlu0 %996
      %998 = vrot.lane.b32.xlu0 %v933, 8
      %v999 = vpop.permute.xlu0 %998
      %1000 = vrot.lane.b32.xlu0 %v936, 8
      %v1001 = vpop.permute.xlu0 %1000
      %1002 = vrot.lane.b32.xlu0 %v938, 8
      %v1003 = vpop.permute.xlu0 %1002
      %1004 = vrot.lane.b32.xlu0 %v941, 8
      %v1005 = vpop.permute.xlu0 %1004
      %1006 = vrot.lane.b32.xlu0 %v943, 8
      %v1007 = vpop.permute.xlu0 %1006
      %1041 = vrot.lane.b32.xlu0 %v621, 12
      %v1042 = vpop.permute.xlu0 %1041
      %1043 = vrot.lane.b32.xlu0 %v525, 12
      %v1044 = vpop.permute.xlu0 %1043
      %1045 = vrot.lane.b32.xlu0 %v622, 12
      %v1046 = vpop.permute.xlu0 %1045
      %1047 = vrot.lane.b32.xlu0 %v528, 12
      %v1048 = vpop.permute.xlu0 %1047
      %1049 = vrot.lane.b32.xlu0 %v623, 12
      %v1050 = vpop.permute.xlu0 %1049
      %1051 = vrot.lane.b32.xlu0 %v531, 12
      %v1052 = vpop.permute.xlu0 %1051
      %1053 = vrot.lane.b32.xlu0 %v624, 12
      %v1054 = vpop.permute.xlu0 %1053
      %1055 = vrot.lane.b32.xlu0 %v534, 12
      %v1056 = vpop.permute.xlu0 %1055
      %1057 = vrot.lane.b32.xlu0 %v625, 12
      %v1058 = vpop.permute.xlu0 %1057
      %1059 = vrot.lane.b32.xlu0 %v537, 12
      %v1060 = vpop.permute.xlu0 %1059
      %1061 = vrot.lane.b32.xlu0 %v626, 12
      %v1062 = vpop.permute.xlu0 %1061
      %1063 = vrot.lane.b32.xlu0 %v540, 12
      %v1064 = vpop.permute.xlu0 %1063
      %1065 = vrot.lane.b32.xlu0 %v627, 12
      %v1066 = vpop.permute.xlu0 %1065
      %1067 = vrot.lane.b32.xlu0 %v543, 12
      %v1068 = vpop.permute.xlu0 %1067
      %1069 = vrot.lane.b32.xlu0 %v628, 12
      %v1070 = vpop.permute.xlu0 %1069
      %1071 = vrot.lane.b32.xlu0 %v546, 12
      %v1072 = vpop.permute.xlu0 %1071
      %1073 = vrot.lane.b32.xlu0 %v629, 12
      %v1074 = vpop.permute.xlu0 %1073
      %1075 = vrot.lane.b32.xlu0 %v549, 12
      %v1076 = vpop.permute.xlu0 %1075
      %1077 = vrot.lane.b32.xlu0 %v630, 12
      %v1078 = vpop.permute.xlu0 %1077
      %1079 = vrot.lane.b32.xlu0 %v552, 12
      %v1080 = vpop.permute.xlu0 %1079
      %1081 = vrot.lane.b32.xlu0 %v631, 12
      %v1082 = vpop.permute.xlu0 %1081
      %1083 = vrot.lane.b32.xlu0 %v555, 12
      %v1084 = vpop.permute.xlu0 %1083
      %1085 = vrot.lane.b32.xlu0 %v632, 12
      %v1086 = vpop.permute.xlu0 %1085
      %1087 = vrot.lane.b32.xlu0 %v558, 12
      %v1088 = vpop.permute.xlu0 %1087
      %1089 = vrot.lane.b32.xlu0 %v633, 12
      %v1090 = vpop.permute.xlu0 %1089
      %1091 = vrot.lane.b32.xlu0 %v561, 12
      %v1092 = vpop.permute.xlu0 %1091
      %1093 = vrot.lane.b32.xlu0 %v634, 12
      %v1094 = vpop.permute.xlu0 %1093
      %1095 = vrot.lane.b32.xlu0 %v564, 12
      %v1096 = vpop.permute.xlu0 %1095
      %1097 = vrot.lane.b32.xlu0 %v635, 12
      %v1098 = vpop.permute.xlu0 %1097
      %1099 = vrot.lane.b32.xlu0 %v567, 12
      %v1100 = vpop.permute.xlu0 %1099
      %1101 = vrot.lane.b32.xlu0 %v636, 12
      %v1102 = vpop.permute.xlu0 %1101
      %1103 = vrot.lane.b32.xlu0 %v570, 12
      %v1104 = vpop.permute.xlu0 %1103
      %v1138 = vrot.slane %v636, 1
      %v1139 = vrot.slane %v570, 1
      %v1140 = vsel %vm686, %v1138, %v1139
      %v1141 = vrot.slane %v653, 1
      %v1142 = vsel %vm686, %v1139, %v1141
      %1143 = vrot.lane.b32.xlu0 %v694, 16
      %v1144 = vpop.permute.xlu0 %1143
      %1145 = vrot.lane.b32.xlu0 %v696, 16
      %v1146 = vpop.permute.xlu0 %1145
      %1147 = vrot.lane.b32.xlu0 %v699, 16
      %v1148 = vpop.permute.xlu0 %1147
      %1149 = vrot.lane.b32.xlu0 %v701, 16
      %v1150 = vpop.permute.xlu0 %1149
      %1151 = vrot.lane.b32.xlu0 %v704, 16
      %v1152 = vpop.permute.xlu0 %1151
      %1153 = vrot.lane.b32.xlu0 %v706, 16
      %v1154 = vpop.permute.xlu0 %1153
      %1155 = vrot.lane.b32.xlu0 %v709, 16
      %v1156 = vpop.permute.xlu0 %1155
      %1157 = vrot.lane.b32.xlu0 %v711, 16
      %v1158 = vpop.permute.xlu0 %1157
      %1159 = vrot.lane.b32.xlu0 %v714, 16
      %v1160 = vpop.permute.xlu0 %1159
      %1161 = vrot.lane.b32.xlu0 %v716, 16
      %v1162 = vpop.permute.xlu0 %1161
      %1163 = vrot.lane.b32.xlu0 %v719, 16
      %v1164 = vpop.permute.xlu0 %1163
      %1165 = vrot.lane.b32.xlu0 %v721, 16
      %v1166 = vpop.permute.xlu0 %1165
      %1167 = vrot.lane.b32.xlu0 %v724, 16
      %v1168 = vpop.permute.xlu0 %1167
      %1169 = vrot.lane.b32.xlu0 %v726, 16
      %v1170 = vpop.permute.xlu0 %1169
      %1171 = vrot.lane.b32.xlu0 %v729, 16
      %v1172 = vpop.permute.xlu0 %1171
      %1173 = vrot.lane.b32.xlu0 %v731, 16
      %v1174 = vpop.permute.xlu0 %1173
      %1175 = vrot.lane.b32.xlu0 %v734, 16
      %v1176 = vpop.permute.xlu0 %1175
      %1177 = vrot.lane.b32.xlu0 %v736, 16
      %v1178 = vpop.permute.xlu0 %1177
      %1179 = vrot.lane.b32.xlu0 %v739, 16
      %v1180 = vpop.permute.xlu0 %1179
      %1181 = vrot.lane.b32.xlu0 %v741, 16
      %v1182 = vpop.permute.xlu0 %1181
      %1183 = vrot.lane.b32.xlu0 %v744, 16
      %v1184 = vpop.permute.xlu0 %1183
      %1185 = vrot.lane.b32.xlu0 %v746, 16
      %v1186 = vpop.permute.xlu0 %1185
      %1187 = vrot.lane.b32.xlu0 %v749, 16
      %v1188 = vpop.permute.xlu0 %1187
      %1189 = vrot.lane.b32.xlu0 %v751, 16
      %v1190 = vpop.permute.xlu0 %1189
      %1191 = vrot.lane.b32.xlu0 %v754, 16
      %v1192 = vpop.permute.xlu0 %1191
      %1193 = vrot.lane.b32.xlu0 %v756, 16
      %v1194 = vpop.permute.xlu0 %1193
      %1195 = vrot.lane.b32.xlu0 %v759, 16
      %v1196 = vpop.permute.xlu0 %1195
      %1197 = vrot.lane.b32.xlu0 %v761, 16
      %v1198 = vpop.permute.xlu0 %1197
      %1199 = vrot.lane.b32.xlu0 %v764, 16
      %v1200 = vpop.permute.xlu0 %1199
      %1201 = vrot.lane.b32.xlu0 %v766, 16
      %v1202 = vpop.permute.xlu0 %1201
      %1203 = vrot.lane.b32.xlu0 %v1140, 16
      %v1204 = vpop.permute.xlu0 %1203
      %1205 = vrot.lane.b32.xlu0 %v1142, 16
      %v1206 = vpop.permute.xlu0 %1205
      %v1239 = vrot.slane %v636, 2
      %v1240 = vrot.slane %v570, 2
      %v1241 = vsel %vm863, %v1239, %v1240
      %v1242 = vrot.slane %v653, 2
      %v1243 = vsel %vm863, %v1240, %v1242
      %1244 = vrot.lane.b32.xlu0 %v871, 20
      %v1245 = vpop.permute.xlu0 %1244
      %1246 = vrot.lane.b32.xlu0 %v873, 20
      %v1247 = vpop.permute.xlu0 %1246
      %1248 = vrot.lane.b32.xlu0 %v876, 20
      %v1249 = vpop.permute.xlu0 %1248
      %1250 = vrot.lane.b32.xlu0 %v878, 20
      %v1251 = vpop.permute.xlu0 %1250
      %1252 = vrot.lane.b32.xlu0 %v881, 20
      %v1253 = vpop.permute.xlu0 %1252
      %1254 = vrot.lane.b32.xlu0 %v883, 20
      %v1255 = vpop.permute.xlu0 %1254
      %1256 = vrot.lane.b32.xlu0 %v886, 20
      %v1257 = vpop.permute.xlu0 %1256
      %1258 = vrot.lane.b32.xlu0 %v888, 20
      %v1259 = vpop.permute.xlu0 %1258
      %1260 = vrot.lane.b32.xlu0 %v891, 20
      %v1261 = vpop.permute.xlu0 %1260
      %1262 = vrot.lane.b32.xlu0 %v893, 20
      %v1263 = vpop.permute.xlu0 %1262
      %1264 = vrot.lane.b32.xlu0 %v896, 20
      %v1265 = vpop.permute.xlu0 %1264
      %1266 = vrot.lane.b32.xlu0 %v898, 20
      %v1267 = vpop.permute.xlu0 %1266
      %1268 = vrot.lane.b32.xlu0 %v901, 20
      %v1269 = vpop.permute.xlu0 %1268
      %1270 = vrot.lane.b32.xlu0 %v903, 20
      %v1271 = vpop.permute.xlu0 %1270
      %1272 = vrot.lane.b32.xlu0 %v906, 20
      %v1273 = vpop.permute.xlu0 %1272
      %1274 = vrot.lane.b32.xlu0 %v908, 20
      %v1275 = vpop.permute.xlu0 %1274
      %1276 = vrot.lane.b32.xlu0 %v911, 20
      %v1277 = vpop.permute.xlu0 %1276
      %1278 = vrot.lane.b32.xlu0 %v913, 20
      %v1279 = vpop.permute.xlu0 %1278
      %1280 = vrot.lane.b32.xlu0 %v916, 20
      %v1281 = vpop.permute.xlu0 %1280
      %1282 = vrot.lane.b32.xlu0 %v918, 20
      %v1283 = vpop.permute.xlu0 %1282
      %1284 = vrot.lane.b32.xlu0 %v921, 20
      %v1285 = vpop.permute.xlu0 %1284
      %1286 = vrot.lane.b32.xlu0 %v923, 20
      %v1287 = vpop.permute.xlu0 %1286
      %1288 = vrot.lane.b32.xlu0 %v926, 20
      %v1289 = vpop.permute.xlu0 %1288
      %1290 = vrot.lane.b32.xlu0 %v928, 20
      %v1291 = vpop.permute.xlu0 %1290
      %1292 = vrot.lane.b32.xlu0 %v931, 20
      %v1293 = vpop.permute.xlu0 %1292
      %1294 = vrot.lane.b32.xlu0 %v933, 20
      %v1295 = vpop.permute.xlu0 %1294
      %1296 = vrot.lane.b32.xlu0 %v936, 20
      %v1297 = vpop.permute.xlu0 %1296
      %1298 = vrot.lane.b32.xlu0 %v938, 20
      %v1299 = vpop.permute.xlu0 %1298
      %1300 = vrot.lane.b32.xlu0 %v941, 20
      %v1301 = vpop.permute.xlu0 %1300
      %1302 = vrot.lane.b32.xlu0 %v943, 20
      %v1303 = vpop.permute.xlu0 %1302
      %1304 = vrot.lane.b32.xlu0 %v1241, 20
      %v1305 = vpop.permute.xlu0 %1304
      %1306 = vrot.lane.b32.xlu0 %v1243, 20
      %v1307 = vpop.permute.xlu0 %1306
      %1340 = vrot.lane.b32.xlu0 %v622, 24
      %v1341 = vpop.permute.xlu0 %1340
      %1342 = vrot.lane.b32.xlu0 %v528, 24
      %v1343 = vpop.permute.xlu0 %1342
      %1344 = vrot.lane.b32.xlu0 %v623, 24
      %v1345 = vpop.permute.xlu0 %1344
      %1346 = vrot.lane.b32.xlu0 %v531, 24
      %v1347 = vpop.permute.xlu0 %1346
      %1348 = vrot.lane.b32.xlu0 %v624, 24
      %v1349 = vpop.permute.xlu0 %1348
      %1350 = vrot.lane.b32.xlu0 %v534, 24
      %v1351 = vpop.permute.xlu0 %1350
      %1352 = vrot.lane.b32.xlu0 %v625, 24
      %v1353 = vpop.permute.xlu0 %1352
      %1354 = vrot.lane.b32.xlu0 %v537, 24
      %v1355 = vpop.permute.xlu0 %1354
      %1356 = vrot.lane.b32.xlu0 %v626, 24
      %v1357 = vpop.permute.xlu0 %1356
      %1358 = vrot.lane.b32.xlu0 %v540, 24
      %v1359 = vpop.permute.xlu0 %1358
      %1360 = vrot.lane.b32.xlu0 %v627, 24
      %v1361 = vpop.permute.xlu0 %1360
      %1362 = vrot.lane.b32.xlu0 %v543, 24
      %v1363 = vpop.permute.xlu0 %1362
      %1364 = vrot.lane.b32.xlu0 %v628, 24
      %v1365 = vpop.permute.xlu0 %1364
      %1366 = vrot.lane.b32.xlu0 %v546, 24
      %v1367 = vpop.permute.xlu0 %1366
      %1368 = vrot.lane.b32.xlu0 %v629, 24
      %v1369 = vpop.permute.xlu0 %1368
      %1370 = vrot.lane.b32.xlu0 %v549, 24
      %v1371 = vpop.permute.xlu0 %1370
      %1372 = vrot.lane.b32.xlu0 %v630, 24
      %v1373 = vpop.permute.xlu0 %1372
      %1374 = vrot.lane.b32.xlu0 %v552, 24
      %v1375 = vpop.permute.xlu0 %1374
      %1376 = vrot.lane.b32.xlu0 %v631, 24
      %v1377 = vpop.permute.xlu0 %1376
      %1378 = vrot.lane.b32.xlu0 %v555, 24
      %v1379 = vpop.permute.xlu0 %1378
      %1380 = vrot.lane.b32.xlu0 %v632, 24
      %v1381 = vpop.permute.xlu0 %1380
      %1382 = vrot.lane.b32.xlu0 %v558, 24
      %v1383 = vpop.permute.xlu0 %1382
      %1384 = vrot.lane.b32.xlu0 %v633, 24
      %v1385 = vpop.permute.xlu0 %1384
      %1386 = vrot.lane.b32.xlu0 %v561, 24
      %v1387 = vpop.permute.xlu0 %1386
      %1388 = vrot.lane.b32.xlu0 %v634, 24
      %v1389 = vpop.permute.xlu0 %1388
      %1390 = vrot.lane.b32.xlu0 %v564, 24
      %v1391 = vpop.permute.xlu0 %1390
      %1392 = vrot.lane.b32.xlu0 %v635, 24
      %v1393 = vpop.permute.xlu0 %1392
      %1394 = vrot.lane.b32.xlu0 %v567, 24
      %v1395 = vpop.permute.xlu0 %1394
      %1396 = vrot.lane.b32.xlu0 %v636, 24
      %v1397 = vpop.permute.xlu0 %1396
      %1398 = vrot.lane.b32.xlu0 %v570, 24
      %v1399 = vpop.permute.xlu0 %1398
      %1400 = vrot.lane.b32.xlu0 %v620, 24
      %v1401 = vpop.permute.xlu0 %1400
      %1402 = vrot.lane.b32.xlu0 %v522, 24
      %v1403 = vpop.permute.xlu0 %1402
      %1436 = vrot.lane.b32.xlu0 %v699, 28
      %v1437 = vpop.permute.xlu0 %1436
      %1438 = vrot.lane.b32.xlu0 %v701, 28
      %v1439 = vpop.permute.xlu0 %1438
      %1440 = vrot.lane.b32.xlu0 %v704, 28
      %v1441 = vpop.permute.xlu0 %1440
      %1442 = vrot.lane.b32.xlu0 %v706, 28
      %v1443 = vpop.permute.xlu0 %1442
      %1444 = vrot.lane.b32.xlu0 %v709, 28
      %v1445 = vpop.permute.xlu0 %1444
      %1446 = vrot.lane.b32.xlu0 %v711, 28
      %v1447 = vpop.permute.xlu0 %1446
      %1448 = vrot.lane.b32.xlu0 %v714, 28
      %v1449 = vpop.permute.xlu0 %1448
      %1450 = vrot.lane.b32.xlu0 %v716, 28
      %v1451 = vpop.permute.xlu0 %1450
      %1452 = vrot.lane.b32.xlu0 %v719, 28
      %v1453 = vpop.permute.xlu0 %1452
      %1454 = vrot.lane.b32.xlu0 %v721, 28
      %v1455 = vpop.permute.xlu0 %1454
      %1456 = vrot.lane.b32.xlu0 %v724, 28
      %v1457 = vpop.permute.xlu0 %1456
      %1458 = vrot.lane.b32.xlu0 %v726, 28
      %v1459 = vpop.permute.xlu0 %1458
      %1460 = vrot.lane.b32.xlu0 %v729, 28
      %v1461 = vpop.permute.xlu0 %1460
      %1462 = vrot.lane.b32.xlu0 %v731, 28
      %v1463 = vpop.permute.xlu0 %1462
      %1464 = vrot.lane.b32.xlu0 %v734, 28
      %v1465 = vpop.permute.xlu0 %1464
      %1466 = vrot.lane.b32.xlu0 %v736, 28
      %v1467 = vpop.permute.xlu0 %1466
      %1468 = vrot.lane.b32.xlu0 %v739, 28
      %v1469 = vpop.permute.xlu0 %1468
      %1470 = vrot.lane.b32.xlu0 %v741, 28
      %v1471 = vpop.permute.xlu0 %1470
      %1472 = vrot.lane.b32.xlu0 %v744, 28
      %v1473 = vpop.permute.xlu0 %1472
      %1474 = vrot.lane.b32.xlu0 %v746, 28
      %v1475 = vpop.permute.xlu0 %1474
      %1476 = vrot.lane.b32.xlu0 %v749, 28
      %v1477 = vpop.permute.xlu0 %1476
      %1478 = vrot.lane.b32.xlu0 %v751, 28
      %v1479 = vpop.permute.xlu0 %1478
      %1480 = vrot.lane.b32.xlu0 %v754, 28
      %v1481 = vpop.permute.xlu0 %1480
      %1482 = vrot.lane.b32.xlu0 %v756, 28
      %v1483 = vpop.permute.xlu0 %1482
      %1484 = vrot.lane.b32.xlu0 %v759, 28
      %v1485 = vpop.permute.xlu0 %1484
      %1486 = vrot.lane.b32.xlu0 %v761, 28
      %v1487 = vpop.permute.xlu0 %1486
      %1488 = vrot.lane.b32.xlu0 %v764, 28
      %v1489 = vpop.permute.xlu0 %1488
      %1490 = vrot.lane.b32.xlu0 %v766, 28
      %v1491 = vpop.permute.xlu0 %1490
      %1492 = vrot.lane.b32.xlu0 %v1140, 28
      %v1493 = vpop.permute.xlu0 %1492
      %1494 = vrot.lane.b32.xlu0 %v1142, 28
      %v1495 = vpop.permute.xlu0 %1494
      %1496 = vrot.lane.b32.xlu0 %v689, 28
      %v1497 = vpop.permute.xlu0 %1496
      %1498 = vrot.lane.b32.xlu0 %v691, 28
      %v1499 = vpop.permute.xlu0 %1498
      %1532 = vrot.lane.b32.xlu0 %v876, 32
      %v1533 = vpop.permute.xlu0 %1532
      %1534 = vrot.lane.b32.xlu0 %v878, 32
      %v1535 = vpop.permute.xlu0 %1534
      %1536 = vrot.lane.b32.xlu0 %v881, 32
      %v1537 = vpop.permute.xlu0 %1536
      %1538 = vrot.lane.b32.xlu0 %v883, 32
      %v1539 = vpop.permute.xlu0 %1538
      %1540 = vrot.lane.b32.xlu0 %v886, 32
      %v1541 = vpop.permute.xlu0 %1540
      %1542 = vrot.lane.b32.xlu0 %v888, 32
      %v1543 = vpop.permute.xlu0 %1542
      %1544 = vrot.lane.b32.xlu0 %v891, 32
      %v1545 = vpop.permute.xlu0 %1544
      %1546 = vrot.lane.b32.xlu0 %v893, 32
      %v1547 = vpop.permute.xlu0 %1546
      %1548 = vrot.lane.b32.xlu0 %v896, 32
      %v1549 = vpop.permute.xlu0 %1548
      %1550 = vrot.lane.b32.xlu0 %v898, 32
      %v1551 = vpop.permute.xlu0 %1550
      %1552 = vrot.lane.b32.xlu0 %v901, 32
      %v1553 = vpop.permute.xlu0 %1552
      %1554 = vrot.lane.b32.xlu0 %v903, 32
      %v1555 = vpop.permute.xlu0 %1554
      %1556 = vrot.lane.b32.xlu0 %v906, 32
      %v1557 = vpop.permute.xlu0 %1556
      %1558 = vrot.lane.b32.xlu0 %v908, 32
      %v1559 = vpop.permute.xlu0 %1558
      %1560 = vrot.lane.b32.xlu0 %v911, 32
      %v1561 = vpop.permute.xlu0 %1560
      %1562 = vrot.lane.b32.xlu0 %v913, 32
      %v1563 = vpop.permute.xlu0 %1562
      %1564 = vrot.lane.b32.xlu0 %v916, 32
      %v1565 = vpop.permute.xlu0 %1564
      %1566 = vrot.lane.b32.xlu0 %v918, 32
      %v1567 = vpop.permute.xlu0 %1566
      %1568 = vrot.lane.b32.xlu0 %v921, 32
      %v1569 = vpop.permute.xlu0 %1568
      %1570 = vrot.lane.b32.xlu0 %v923, 32
      %v1571 = vpop.permute.xlu0 %1570
      %1572 = vrot.lane.b32.xlu0 %v926, 32
      %v1573 = vpop.permute.xlu0 %1572
      %1574 = vrot.lane.b32.xlu0 %v928, 32
      %v1575 = vpop.permute.xlu0 %1574
      %1576 = vrot.lane.b32.xlu0 %v931, 32
      %v1577 = vpop.permute.xlu0 %1576
      %1578 = vrot.lane.b32.xlu0 %v933, 32
      %v1579 = vpop.permute.xlu0 %1578
      %1580 = vrot.lane.b32.xlu0 %v936, 32
      %v1581 = vpop.permute.xlu0 %1580
      %1582 = vrot.lane.b32.xlu0 %v938, 32
      %v1583 = vpop.permute.xlu0 %1582
      %1584 = vrot.lane.b32.xlu0 %v941, 32
      %v1585 = vpop.permute.xlu0 %1584
      %1586 = vrot.lane.b32.xlu0 %v943, 32
      %v1587 = vpop.permute.xlu0 %1586
      %1588 = vrot.lane.b32.xlu0 %v1241, 32
      %v1589 = vpop.permute.xlu0 %1588
      %1590 = vrot.lane.b32.xlu0 %v1243, 32
      %v1591 = vpop.permute.xlu0 %1590
      %1592 = vrot.lane.b32.xlu0 %v866, 32
      %v1593 = vpop.permute.xlu0 %1592
      %1594 = vrot.lane.b32.xlu0 %v868, 32
      %v1595 = vpop.permute.xlu0 %1594
      %vm1628 = vcmask 31744
      %v1629 = vsel %vm1628, %v620, %v768
      %v1630 = vsel %vm1628, %v522, %v770
      %v1631 = vsel %vm1628, %v621, %v772
      %v1632 = vsel %vm1628, %v525, %v774
      %v1633 = vsel %vm1628, %v622, %v776
      %v1634 = vsel %vm1628, %v528, %v778
      %v1635 = vsel %vm1628, %v623, %v780
      %v1636 = vsel %vm1628, %v531, %v782
      %v1637 = vsel %vm1628, %v624, %v784
      %v1638 = vsel %vm1628, %v534, %v786
      %v1639 = vsel %vm1628, %v625, %v788
      %v1640 = vsel %vm1628, %v537, %v790
      %v1641 = vsel %vm1628, %v626, %v792
      %v1642 = vsel %vm1628, %v540, %v794
      %v1643 = vsel %vm1628, %v627, %v796
      %v1644 = vsel %vm1628, %v543, %v798
      %v1645 = vsel %vm1628, %v628, %v800
      %v1646 = vsel %vm1628, %v546, %v802
      %v1647 = vsel %vm1628, %v629, %v804
      %v1648 = vsel %vm1628, %v549, %v806
      %v1649 = vsel %vm1628, %v630, %v808
      %v1650 = vsel %vm1628, %v552, %v810
      %v1651 = vsel %vm1628, %v631, %v812
      %v1652 = vsel %vm1628, %v555, %v814
      %v1653 = vsel %vm1628, %v632, %v816
      %v1654 = vsel %vm1628, %v558, %v818
      %v1655 = vsel %vm1628, %v633, %v820
      %v1656 = vsel %vm1628, %v561, %v822
      %v1657 = vsel %vm1628, %v634, %v824
      %v1658 = vsel %vm1628, %v564, %v826
      %v1659 = vsel %vm1628, %v635, %v828
      %v1660 = vsel %vm1628, %v567, %v830
      %vm1661 = vcmask 64512
      %v1662 = vsel %vm1661, %v1629, %v945
      %v1663 = vsel %vm1661, %v1630, %v947
      %v1664 = vsel %vm1661, %v1631, %v949
      %v1665 = vsel %vm1661, %v1632, %v951
      %v1666 = vsel %vm1661, %v1633, %v953
      %v1667 = vsel %vm1661, %v1634, %v955
      %v1668 = vsel %vm1661, %v1635, %v957
      %v1669 = vsel %vm1661, %v1636, %v959
      %v1670 = vsel %vm1661, %v1637, %v961
      %v1671 = vsel %vm1661, %v1638, %v963
      %v1672 = vsel %vm1661, %v1639, %v965
      %v1673 = vsel %vm1661, %v1640, %v967
      %v1674 = vsel %vm1661, %v1641, %v969
      %v1675 = vsel %vm1661, %v1642, %v971
      %v1676 = vsel %vm1661, %v1643, %v973
      %v1677 = vsel %vm1661, %v1644, %v975
      %v1678 = vsel %vm1661, %v1645, %v977
      %v1679 = vsel %vm1661, %v1646, %v979
      %v1680 = vsel %vm1661, %v1647, %v981
      %v1681 = vsel %vm1661, %v1648, %v983
      %v1682 = vsel %vm1661, %v1649, %v985
      %v1683 = vsel %vm1661, %v1650, %v987
      %v1684 = vsel %vm1661, %v1651, %v989
      %v1685 = vsel %vm1661, %v1652, %v991
      %v1686 = vsel %vm1661, %v1653, %v993
      %v1687 = vsel %vm1661, %v1654, %v995
      %v1688 = vsel %vm1661, %v1655, %v997
      %v1689 = vsel %vm1661, %v1656, %v999
      %v1690 = vsel %vm1661, %v1657, %v1001
      %v1691 = vsel %vm1661, %v1658, %v1003
      %v1692 = vsel %vm1661, %v1659, %v1005
      %v1693 = vsel %vm1661, %v1660, %v1007
      %vm1694 = vcmask 97280
      %v1695 = vsel %vm1694, %v1662, %v1042
      %v1696 = vsel %vm1694, %v1663, %v1044
      %v1697 = vsel %vm1694, %v1664, %v1046
      %v1698 = vsel %vm1694, %v1665, %v1048
      %v1699 = vsel %vm1694, %v1666, %v1050
      %v1700 = vsel %vm1694, %v1667, %v1052
      %v1701 = vsel %vm1694, %v1668, %v1054
      %v1702 = vsel %vm1694, %v1669, %v1056
      %v1703 = vsel %vm1694, %v1670, %v1058
      %v1704 = vsel %vm1694, %v1671, %v1060
      %v1705 = vsel %vm1694, %v1672, %v1062
      %v1706 = vsel %vm1694, %v1673, %v1064
      %v1707 = vsel %vm1694, %v1674, %v1066
      %v1708 = vsel %vm1694, %v1675, %v1068
      %v1709 = vsel %vm1694, %v1676, %v1070
      %v1710 = vsel %vm1694, %v1677, %v1072
      %v1711 = vsel %vm1694, %v1678, %v1074
      %v1712 = vsel %vm1694, %v1679, %v1076
      %v1713 = vsel %vm1694, %v1680, %v1078
      %v1714 = vsel %vm1694, %v1681, %v1080
      %v1715 = vsel %vm1694, %v1682, %v1082
      %v1716 = vsel %vm1694, %v1683, %v1084
      %v1717 = vsel %vm1694, %v1684, %v1086
      %v1718 = vsel %vm1694, %v1685, %v1088
      %v1719 = vsel %vm1694, %v1686, %v1090
      %v1720 = vsel %vm1694, %v1687, %v1092
      %v1721 = vsel %vm1694, %v1688, %v1094
      %v1722 = vsel %vm1694, %v1689, %v1096
      %v1723 = vsel %vm1694, %v1690, %v1098
      %v1724 = vsel %vm1694, %v1691, %v1100
      %v1725 = vsel %vm1694, %v1692, %v1102
      %v1726 = vsel %vm1694, %v1693, %v1104
      %vm1727 = vcmask 130048
      %v1728 = vsel %vm1727, %v1695, %v1144
      %v1729 = vsel %vm1727, %v1696, %v1146
      %v1730 = vsel %vm1727, %v1697, %v1148
      %v1731 = vsel %vm1727, %v1698, %v1150
      %v1732 = vsel %vm1727, %v1699, %v1152
      %v1733 = vsel %vm1727, %v1700, %v1154
      %v1734 = vsel %vm1727, %v1701, %v1156
      %v1735 = vsel %vm1727, %v1702, %v1158
      %v1736 = vsel %vm1727, %v1703, %v1160
      %v1737 = vsel %vm1727, %v1704, %v1162
      %v1738 = vsel %vm1727, %v1705, %v1164
      %v1739 = vsel %vm1727, %v1706, %v1166
      %v1740 = vsel %vm1727, %v1707, %v1168
      %v1741 = vsel %vm1727, %v1708, %v1170
      %v1742 = vsel %vm1727, %v1709, %v1172
      %v1743 = vsel %vm1727, %v1710, %v1174
      %v1744 = vsel %vm1727, %v1711, %v1176
      %v1745 = vsel %vm1727, %v1712, %v1178
      %v1746 = vsel %vm1727, %v1713, %v1180
      %v1747 = vsel %vm1727, %v1714, %v1182
      %v1748 = vsel %vm1727, %v1715, %v1184
      %v1749 = vsel %vm1727, %v1716, %v1186
      %v1750 = vsel %vm1727, %v1717, %v1188
      %v1751 = vsel %vm1727, %v1718, %v1190
      %v1752 = vsel %vm1727, %v1719, %v1192
      %v1753 = vsel %vm1727, %v1720, %v1194
      %v1754 = vsel %vm1727, %v1721, %v1196
      %v1755 = vsel %vm1727, %v1722, %v1198
      %v1756 = vsel %vm1727, %v1723, %v1200
      %v1757 = vsel %vm1727, %v1724, %v1202
      %v1758 = vsel %vm1727, %v1725, %v1204
      %v1759 = vsel %vm1727, %v1726, %v1206
      %vm1760 = vcmask 162816
      %v1761 = vsel %vm1760, %v1728, %v1245
      %v1762 = vsel %vm1760, %v1729, %v1247
      %v1763 = vsel %vm1760, %v1730, %v1249
      %v1764 = vsel %vm1760, %v1731, %v1251
      %v1765 = vsel %vm1760, %v1732, %v1253
      %v1766 = vsel %vm1760, %v1733, %v1255
      %v1767 = vsel %vm1760, %v1734, %v1257
      %v1768 = vsel %vm1760, %v1735, %v1259
      %v1769 = vsel %vm1760, %v1736, %v1261
      %v1770 = vsel %vm1760, %v1737, %v1263
      %v1771 = vsel %vm1760, %v1738, %v1265
      %v1772 = vsel %vm1760, %v1739, %v1267
      %v1773 = vsel %vm1760, %v1740, %v1269
      %v1774 = vsel %vm1760, %v1741, %v1271
      %v1775 = vsel %vm1760, %v1742, %v1273
      %v1776 = vsel %vm1760, %v1743, %v1275
      %v1777 = vsel %vm1760, %v1744, %v1277
      %v1778 = vsel %vm1760, %v1745, %v1279
      %v1779 = vsel %vm1760, %v1746, %v1281
      %v1780 = vsel %vm1760, %v1747, %v1283
      %v1781 = vsel %vm1760, %v1748, %v1285
      %v1782 = vsel %vm1760, %v1749, %v1287
      %v1783 = vsel %vm1760, %v1750, %v1289
      %v1784 = vsel %vm1760, %v1751, %v1291
      %v1785 = vsel %vm1760, %v1752, %v1293
      %v1786 = vsel %vm1760, %v1753, %v1295
      %v1787 = vsel %vm1760, %v1754, %v1297
      %v1788 = vsel %vm1760, %v1755, %v1299
      %v1789 = vsel %vm1760, %v1756, %v1301
      %v1790 = vsel %vm1760, %v1757, %v1303
      %v1791 = vsel %vm1760, %v1758, %v1305
      %v1792 = vsel %vm1760, %v1759, %v1307
      %vm1793 = vcmask 195584
      %v1794 = vsel %vm1793, %v1761, %v1341
      %v1795 = vsel %vm1793, %v1762, %v1343
      %v1796 = vsel %vm1793, %v1763, %v1345
      %v1797 = vsel %vm1793, %v1764, %v1347
      %v1798 = vsel %vm1793, %v1765, %v1349
      %v1799 = vsel %vm1793, %v1766, %v1351
      %v1800 = vsel %vm1793, %v1767, %v1353
      %v1801 = vsel %vm1793, %v1768, %v1355
      %v1802 = vsel %vm1793, %v1769, %v1357
      %v1803 = vsel %vm1793, %v1770, %v1359
      %v1804 = vsel %vm1793, %v1771, %v1361
      %v1805 = vsel %vm1793, %v1772, %v1363
      %v1806 = vsel %vm1793, %v1773, %v1365
      %v1807 = vsel %vm1793, %v1774, %v1367
      %v1808 = vsel %vm1793, %v1775, %v1369
      %v1809 = vsel %vm1793, %v1776, %v1371
      %v1810 = vsel %vm1793, %v1777, %v1373
      %v1811 = vsel %vm1793, %v1778, %v1375
      %v1812 = vsel %vm1793, %v1779, %v1377
      %v1813 = vsel %vm1793, %v1780, %v1379
      %v1814 = vsel %vm1793, %v1781, %v1381
      %v1815 = vsel %vm1793, %v1782, %v1383
      %v1816 = vsel %vm1793, %v1783, %v1385
      %v1817 = vsel %vm1793, %v1784, %v1387
      %v1818 = vsel %vm1793, %v1785, %v1389
      %v1819 = vsel %vm1793, %v1786, %v1391
      %v1820 = vsel %vm1793, %v1787, %v1393
      %v1821 = vsel %vm1793, %v1788, %v1395
      %v1822 = vsel %vm1793, %v1789, %v1397
      %v1823 = vsel %vm1793, %v1790, %v1399
      %v1824 = vsel %vm1793, %v1791, %v1401
      %v1825 = vsel %vm1793, %v1792, %v1403
      %vm1826 = vcmask 228352
      %v1827 = vsel %vm1826, %v1794, %v1437
      %v1828 = vsel %vm1826, %v1795, %v1439
      %v1829 = vsel %vm1826, %v1796, %v1441
      %v1830 = vsel %vm1826, %v1797, %v1443
      %v1831 = vsel %vm1826, %v1798, %v1445
      %v1832 = vsel %vm1826, %v1799, %v1447
      %v1833 = vsel %vm1826, %v1800, %v1449
      %v1834 = vsel %vm1826, %v1801, %v1451
      %v1835 = vsel %vm1826, %v1802, %v1453
      %v1836 = vsel %vm1826, %v1803, %v1455
      %v1837 = vsel %vm1826, %v1804, %v1457
      %v1838 = vsel %vm1826, %v1805, %v1459
      %v1839 = vsel %vm1826, %v1806, %v1461
      %v1840 = vsel %vm1826, %v1807, %v1463
      %v1841 = vsel %vm1826, %v1808, %v1465
      %v1842 = vsel %vm1826, %v1809, %v1467
      %v1843 = vsel %vm1826, %v1810, %v1469
      %v1844 = vsel %vm1826, %v1811, %v1471
      %v1845 = vsel %vm1826, %v1812, %v1473
      %v1846 = vsel %vm1826, %v1813, %v1475
      %v1847 = vsel %vm1826, %v1814, %v1477
      %v1848 = vsel %vm1826, %v1815, %v1479
      %v1849 = vsel %vm1826, %v1816, %v1481
      %v1850 = vsel %vm1826, %v1817, %v1483
      %v1851 = vsel %vm1826, %v1818, %v1485
      %v1852 = vsel %vm1826, %v1819, %v1487
      %v1853 = vsel %vm1826, %v1820, %v1489
      %v1854 = vsel %vm1826, %v1821, %v1491
      %v1855 = vsel %vm1826, %v1822, %v1493
      %v1856 = vsel %vm1826, %v1823, %v1495
      %v1857 = vsel %vm1826, %v1824, %v1497
      %v1858 = vsel %vm1826, %v1825, %v1499
      %vm1859 = vcmask 261120
      %v1860 = vsel %vm1859, %v1827, %v1533
      %v1861 = vsel %vm1859, %v1828, %v1535
      %v1862 = vsel %vm1859, %v1829, %v1537
      %v1863 = vsel %vm1859, %v1830, %v1539
      %v1864 = vsel %vm1859, %v1831, %v1541
      %v1865 = vsel %vm1859, %v1832, %v1543
      %v1866 = vsel %vm1859, %v1833, %v1545
      %v1867 = vsel %vm1859, %v1834, %v1547
      %v1868 = vsel %vm1859, %v1835, %v1549
      %v1869 = vsel %vm1859, %v1836, %v1551
      %v1870 = vsel %vm1859, %v1837, %v1553
      %v1871 = vsel %vm1859, %v1838, %v1555
      %v1872 = vsel %vm1859, %v1839, %v1557
      %v1873 = vsel %vm1859, %v1840, %v1559
      %v1874 = vsel %vm1859, %v1841, %v1561
      %v1875 = vsel %vm1859, %v1842, %v1563
      %v1876 = vsel %vm1859, %v1843, %v1565
      %v1877 = vsel %vm1859, %v1844, %v1567
      %v1878 = vsel %vm1859, %v1845, %v1569
      %v1879 = vsel %vm1859, %v1846, %v1571
      %v1880 = vsel %vm1859, %v1847, %v1573
      %v1881 = vsel %vm1859, %v1848, %v1575
      %v1882 = vsel %vm1859, %v1849, %v1577
      %v1883 = vsel %vm1859, %v1850, %v1579
      %v1884 = vsel %vm1859, %v1851, %v1581
      %v1885 = vsel %vm1859, %v1852, %v1583
      %v1886 = vsel %vm1859, %v1853, %v1585
      %v1887 = vsel %vm1859, %v1854, %v1587
      %v1888 = vsel %vm1859, %v1855, %v1589
      %v1889 = vsel %vm1859, %v1856, %v1591
      %v1890 = vsel %vm1859, %v1857, %v1593
      %v1891 = vsel %vm1859, %v1858, %v1595
      %v1892 = vld [vmem:[%s3] sm:$0xff]
      %v1893 = vld [vmem:[%s3 + $0x8] sm:$0xff]
      %v1894 = vld [vmem:[%s3 + $0x10] sm:$0xff]
      %v1895 = vld [vmem:[%s3 + $0x18] sm:$0xff]
      %v1896 = vld [vmem:[%s3 + $0x20] sm:$0xf]
      %v1897 = vld [vmem:[%s4] sm:$0x1]
      %v1899 = vlaneseq
      %v1900 = vshrl.u32 %v1899, 7
      %v1901 = vsub.s32 0, %v1900
      %v1902 = vrot.slane %v1897, %v1901
      %vm1904 = vcmask 293888
      %v1906 = vsel %vm1904, %v1860, 0
      %v1909 = vsel %vm1904, %v1861, 0
      %v1912 = vsel %vm1904, %v1862, 0
      %v1915 = vsel %vm1904, %v1863, 0
      %v1918 = vsel %vm1904, %v1864, 0
      %v1921 = vsel %vm1904, %v1865, 0
      %v1924 = vsel %vm1904, %v1866, 0
      %v1927 = vsel %vm1904, %v1867, 0
      %v1930 = vsel %vm1904, %v1868, 0
      %v1933 = vsel %vm1904, %v1869, 0
      %v1936 = vsel %vm1904, %v1870, 0
      %v1939 = vsel %vm1904, %v1871, 0
      %v1942 = vsel %vm1904, %v1872, 0
      %v1945 = vsel %vm1904, %v1873, 0
      %v1948 = vsel %vm1904, %v1874, 0
      %v1951 = vsel %vm1904, %v1875, 0
      %v1954 = vsel %vm1904, %v1876, 0
      %v1957 = vsel %vm1904, %v1877, 0
      %v1960 = vsel %vm1904, %v1878, 0
      %v1963 = vsel %vm1904, %v1879, 0
      %v1966 = vsel %vm1904, %v1880, 0
      %v1969 = vsel %vm1904, %v1881, 0
      %v1972 = vsel %vm1904, %v1882, 0
      %v1975 = vsel %vm1904, %v1883, 0
      %v1978 = vsel %vm1904, %v1884, 0
      %v1981 = vsel %vm1904, %v1885, 0
      %v1984 = vsel %vm1904, %v1886, 0
      %v1987 = vsel %vm1904, %v1887, 0
      %v1990 = vsel %vm1904, %v1888, 0
      %v1993 = vsel %vm1904, %v1889, 0
      %v1996 = vsel %vm1904, %v1890, 0
      %v1999 = vsel %vm1904, %v1891, 0
      %vm2001 = vcmask 1043456
      %v2003 = vsel %vm2001, %v1896, 0
      %2005 = vmatprep.subr.mxu0 0.0
      %2006 = vmatpush1.msra.mxu0 %v1892
      %2007 = vmatprep.subr.mxu0 0.0
      %2008 = vmatpush1.msra.mxu0 %v1893
      %2009 = vmatprep.subr.mxu0 0.0
      %2010 = vmatpush1.msra.mxu0 %v1894
      %2011 = vmatprep.subr.mxu0 0.0
      %2012 = vmatpush1.msra.mxu0 %v1895
      %2013 = vmatprep.subr.mxu0 0.0
      %2014 = vmatpush1.msra.mxu0 %v2003
      %2015 = vmatprep.subr.mxu0 0.0
      %2016 = vmatpush1.msra.mxu0 0.0
      %2017 = vmatprep.subr.mxu0 0.0
      %2018 = vmatpush1.msra.mxu0 0.0
      %2019 = vmatprep.subr.mxu0 0.0
      %2020 = vmatpush1.msra.mxu0 0.0
      %2021 = vmatprep.subr.mxu0 0.0
      %2022 = vmatpush1.msra.mxu0 0.0
      %2023 = vmatprep.subr.mxu0 0.0
      %2024 = vmatpush1.msra.mxu0 0.0
      %2025 = vmatprep.subr.mxu0 0.0
      %2026 = vmatpush1.msra.mxu0 0.0
      %2027 = vmatprep.subr.mxu0 0.0
      %2028 = vmatpush1.msra.mxu0 0.0
      %2029 = vmatprep.subr.mxu0 0.0
      %2030 = vmatpush1.msra.mxu0 0.0
      %2031 = vmatprep.subr.mxu0 0.0
      %2032 = vmatpush1.msra.mxu0 0.0
      %2033 = vmatprep.subr.mxu0 0.0
      %2034 = vmatpush1.msra.mxu0 0.0
      %2035 = vmatprep.subr.mxu0 0.0
      %2036 = vmatpush1.msra.mxu0 0.0
      %2037 = vmatprep.subr.mxu0 0.0
      %2038 = vmatpush1.msra.mxu0 0.0
      %2039 = vmatprep.subr.mxu0 0.0
      %2040 = vmatpush1.msra.mxu0 0.0
      %2041 = vmatprep.subr.mxu0 0.0
      %2042 = vmatpush1.msra.mxu0 0.0
      %2043 = vmatprep.subr.mxu0 0.0
      %2044 = vmatpush1.msra.mxu0 0.0
      %2045 = vmatprep.subr.mxu0 0.0
      %2046 = vmatpush1.msra.mxu0 0.0
      %2047 = vmatprep.subr.mxu0 0.0
      %2048 = vmatpush1.msra.mxu0 0.0
      %2049 = vmatprep.subr.mxu0 0.0
      %2050 = vmatpush1.msra.mxu0 0.0
      %2051 = vmatprep.subr.mxu0 0.0
      %2052 = vmatpush1.msra.mxu0 0.0
      %2053 = vmatprep.subr.mxu0 0.0
      %2054 = vmatpush1.msra.mxu0 0.0
      %2055 = vmatprep.subr.mxu0 0.0
      %2056 = vmatpush1.msra.mxu0 0.0
      %2057 = vmatprep.subr.mxu0 0.0
      %2058 = vmatpush1.msra.mxu0 0.0
      %2059 = vmatprep.subr.mxu0 0.0
      %2060 = vmatpush1.msra.mxu0 0.0
      %2061 = vmatprep.subr.mxu0 0.0
      %2062 = vmatpush1.msra.mxu0 0.0
      %2063 = vmatprep.subr.mxu0 0.0
      %2064 = vmatpush1.msra.mxu0 0.0
      %2065 = vmatprep.subr.mxu0 0.0
      %2066 = vmatpush1.msra.mxu0 0.0
      %2067 = vmatprep.subr.mxu0 0.0
      %2068 = vmatpush1.msra.mxu0 0.0
      %2069 = vmatprep.mubr.f32.mxu0 0.0
      %2070 = vmatmul.mubr.f32.gmra.mrb[0].mxu0 %v1906
      %v2071 = vpop.f32.mrb[0].mxu0
      %v2072 = vadd.f32 %v1902, %v2071
      %v2073 = vpop.f32.mrb[0].mxu0
      %2074 = vmatprep.mubr.f32.mxu0 0.0
      %2075 = vmatmul.mubr.f32.gmra.mrb[0].mxu0 %v1909
      %v2076 = vpop.f32.mrb[0].mxu0
      %v2077 = vadd.f32 %v1902, %v2076
      %v2078 = vpop.f32.mrb[0].mxu0
      %2079 = vmatprep.mubr.f32.mxu0 0.0
      %2080 = vmatmul.mubr.f32.gmra.mrb[0].mxu0 %v1912
      %v2081 = vpop.f32.mrb[0].mxu0
      %v2082 = vadd.f32 %v1902, %v2081
      %v2083 = vpop.f32.mrb[0].mxu0
      %2084 = vmatprep.mubr.f32.mxu0 0.0
      %2085 = vmatmul.mubr.f32.gmra.mrb[0].mxu0 %v1915
      %v2086 = vpop.f32.mrb[0].mxu0
      %v2087 = vadd.f32 %v1902, %v2086
      %v2088 = vpop.f32.mrb[0].mxu0
      %2089 = vmatprep.mubr.f32.mxu0 0.0
      %2090 = vmatmul.mubr.f32.gmra.mrb[0].mxu0 %v1918
      %v2091 = vpop.f32.mrb[0].mxu0
      %v2092 = vadd.f32 %v1902, %v2091
      %v2093 = vpop.f32.mrb[0].mxu0
      %2094 = vmatprep.mubr.f32.mxu0 0.0
      %2095 = vmatmul.mubr.f32.gmra.mrb[0].mxu0 %v1921
      %v2096 = vpop.f32.mrb[0].mxu0
      %v2097 = vadd.f32 %v1902, %v2096
      %v2098 = vpop.f32.mrb[0].mxu0
      %2099 = vmatprep.mubr.f32.mxu0 0.0
      %2100 = vmatmul.mubr.f32.gmra.mrb[0].mxu0 %v1924
      %v2101 = vpop.f32.mrb[0].mxu0
      %v2102 = vadd.f32 %v1902, %v2101
      %v2103 = vpop.f32.mrb[0].mxu0
      %2104 = vmatprep.mubr.f32.mxu0 0.0
      %2105 = vmatmul.mubr.f32.gmra.mrb[0].mxu0 %v1927
      %v2106 = vpop.f32.mrb[0].mxu0
      %v2107 = vadd.f32 %v1902, %v2106
      %v2108 = vpop.f32.mrb[0].mxu0
      %2109 = vmatprep.mubr.f32.mxu0 0.0
      %2110 = vmatmul.mubr.f32.gmra.mrb[0].mxu0 %v1930
      %v2111 = vpop.f32.mrb[0].mxu0
      %v2112 = vadd.f32 %v1902, %v2111
      %v2113 = vpop.f32.mrb[0].mxu0
      %2114 = vmatprep.mubr.f32.mxu0 0.0
      %2115 = vmatmul.mubr.f32.gmra.mrb[0].mxu0 %v1933
      %v2116 = vpop.f32.mrb[0].mxu0
      %v2117 = vadd.f32 %v1902, %v2116
      %v2118 = vpop.f32.mrb[0].mxu0
      %2119 = vmatprep.mubr.f32.mxu0 0.0
      %2120 = vmatmul.mubr.f32.gmra.mrb[0].mxu0 %v1936
      %v2121 = vpop.f32.mrb[0].mxu0
      %v2122 = vadd.f32 %v1902, %v2121
      %v2123 = vpop.f32.mrb[0].mxu0
      %2124 = vmatprep.mubr.f32.mxu0 0.0
      %2125 = vmatmul.mubr.f32.gmra.mrb[0].mxu0 %v1939
      %v2126 = vpop.f32.mrb[0].mxu0
      %v2127 = vadd.f32 %v1902, %v2126
      %v2128 = vpop.f32.mrb[0].mxu0
      %2129 = vmatprep.mubr.f32.mxu0 0.0
      %2130 = vmatmul.mubr.f32.gmra.mrb[0].mxu0 %v1942
      %v2131 = vpop.f32.mrb[0].mxu0
      %v2132 = vadd.f32 %v1902, %v2131
      %v2133 = vpop.f32.mrb[0].mxu0
      %2134 = vmatprep.mubr.f32.mxu0 0.0
      %2135 = vmatmul.mubr.f32.gmra.mrb[0].mxu0 %v1945
      %v2136 = vpop.f32.mrb[0].mxu0
      %v2137 = vadd.f32 %v1902, %v2136
      %v2138 = vpop.f32.mrb[0].mxu0
      %2139 = vmatprep.mubr.f32.mxu0 0.0
      %2140 = vmatmul.mubr.f32.gmra.mrb[0].mxu0 %v1948
      %v2141 = vpop.f32.mrb[0].mxu0
      %v2142 = vadd.f32 %v1902, %v2141
      %v2143 = vpop.f32.mrb[0].mxu0
      %2144 = vmatprep.mubr.f32.mxu0 0.0
      %2145 = vmatmul.mubr.f32.gmra.mrb[0].mxu0 %v1951
      %v2146 = vpop.f32.mrb[0].mxu0
      %v2147 = vadd.f32 %v1902, %v2146
      %v2148 = vpop.f32.mrb[0].mxu0
      %2149 = vmatprep.mubr.f32.mxu0 0.0
      %2150 = vmatmul.mubr.f32.gmra.mrb[0].mxu0 %v1954
      %v2151 = vpop.f32.mrb[0].mxu0
      %v2152 = vadd.f32 %v1902, %v2151
      %v2153 = vpop.f32.mrb[0].mxu0
      %2154 = vmatprep.mubr.f32.mxu0 0.0
      %2155 = vmatmul.mubr.f32.gmra.mrb[0].mxu0 %v1957
      %v2156 = vpop.f32.mrb[0].mxu0
      %v2157 = vadd.f32 %v1902, %v2156
      %v2158 = vpop.f32.mrb[0].mxu0
      %2159 = vmatprep.mubr.f32.mxu0 0.0
      %2160 = vmatmul.mubr.f32.gmra.mrb[0].mxu0 %v1960
      %v2161 = vpop.f32.mrb[0].mxu0
      %v2162 = vadd.f32 %v1902, %v2161
      %v2163 = vpop.f32.mrb[0].mxu0
      %2164 = vmatprep.mubr.f32.mxu0 0.0
      %2165 = vmatmul.mubr.f32.gmra.mrb[0].mxu0 %v1963
      %v2166 = vpop.f32.mrb[0].mxu0
      %v2167 = vadd.f32 %v1902, %v2166
      %v2168 = vpop.f32.mrb[0].mxu0
      %2169 = vmatprep.mubr.f32.mxu0 0.0
      %2170 = vmatmul.mubr.f32.gmra.mrb[0].mxu0 %v1966
      %v2171 = vpop.f32.mrb[0].mxu0
      %v2172 = vadd.f32 %v1902, %v2171
      %v2173 = vpop.f32.mrb[0].mxu0
      %2174 = vmatprep.mubr.f32.mxu0 0.0
      %2175 = vmatmul.mubr.f32.gmra.mrb[0].mxu0 %v1969
      %v2176 = vpop.f32.mrb[0].mxu0
      %v2177 = vadd.f32 %v1902, %v2176
      %v2178 = vpop.f32.mrb[0].mxu0
      %2179 = vmatprep.mubr.f32.mxu0 0.0
      %2180 = vmatmul.mubr.f32.gmra.mrb[0].mxu0 %v1972
      %v2181 = vpop.f32.mrb[0].mxu0
      %v2182 = vadd.f32 %v1902, %v2181
      %v2183 = vpop.f32.mrb[0].mxu0
      %2184 = vmatprep.mubr.f32.mxu0 0.0
      %2185 = vmatmul.mubr.f32.gmra.mrb[0].mxu0 %v1975
      %v2186 = vpop.f32.mrb[0].mxu0
      %v2187 = vadd.f32 %v1902, %v2186
      %v2188 = vpop.f32.mrb[0].mxu0
      %2189 = vmatprep.mubr.f32.mxu0 0.0
      %2190 = vmatmul.mubr.f32.gmra.mrb[0].mxu0 %v1978
      %v2191 = vpop.f32.mrb[0].mxu0
      %v2192 = vadd.f32 %v1902, %v2191
      %v2193 = vpop.f32.mrb[0].mxu0
      %2194 = vmatprep.mubr.f32.mxu0 0.0
      %2195 = vmatmul.mubr.f32.gmra.mrb[0].mxu0 %v1981
      %v2196 = vpop.f32.mrb[0].mxu0
      %v2197 = vadd.f32 %v1902, %v2196
      %v2198 = vpop.f32.mrb[0].mxu0
      %2199 = vmatprep.mubr.f32.mxu0 0.0
      %2200 = vmatmul.mubr.f32.gmra.mrb[0].mxu0 %v1984
      %v2201 = vpop.f32.mrb[0].mxu0
      %v2202 = vadd.f32 %v1902, %v2201
      %v2203 = vpop.f32.mrb[0].mxu0
      %2204 = vmatprep.mubr.f32.mxu0 0.0
      %2205 = vmatmul.mubr.f32.gmra.mrb[0].mxu0 %v1987
      %v2206 = vpop.f32.mrb[0].mxu0
      %v2207 = vadd.f32 %v1902, %v2206
      %v2208 = vpop.f32.mrb[0].mxu0
      %2209 = vmatprep.mubr.f32.mxu0 0.0
      %2210 = vmatmul.mubr.f32.gmra.mrb[0].mxu0 %v1990
      %v2211 = vpop.f32.mrb[0].mxu0
      %v2212 = vadd.f32 %v1902, %v2211
      %v2213 = vpop.f32.mrb[0].mxu0
      %2214 = vmatprep.mubr.f32.mxu0 0.0
      %2215 = vmatmul.mubr.f32.gmra.mrb[0].mxu0 %v1993
      %v2216 = vpop.f32.mrb[0].mxu0
      %v2217 = vadd.f32 %v1902, %v2216
      %v2218 = vpop.f32.mrb[0].mxu0
      %2219 = vmatprep.mubr.f32.mxu0 0.0
      %2220 = vmatmul.mubr.f32.gmra.mrb[0].mxu0 %v1996
      %v2221 = vpop.f32.mrb[0].mxu0
      %v2222 = vadd.f32 %v1902, %v2221
      %v2223 = vpop.f32.mrb[0].mxu0
      %2224 = vmatprep.mubr.f32.mxu0 0.0
      %2225 = vmatmul.mubr.f32.gmra.mrb[0].mxu0 %v1999
      %v2226 = vpop.f32.mrb[0].mxu0
      %v2227 = vadd.f32 %v1902, %v2226
      %v2228 = vpop.f32.mrb[0].mxu0
      %2229 = vdwg.mxu0
      %2230 = vst.msk [vmem:[%s273] sm:$0xff] %vm1661, %v2072
      %2231 = vst.msk [vmem:[%s273 + $0x8] sm:$0xff] %vm1661, %v2077
      %2232 = vst.msk [vmem:[%s273 + $0x10] sm:$0xff] %vm1661, %v2082
      %2233 = vst.msk [vmem:[%s273 + $0x18] sm:$0xff] %vm1661, %v2087
      %2234 = vst.msk [vmem:[%s273 + $0x20] sm:$0xff] %vm1661, %v2092
      %2235 = vst.msk [vmem:[%s273 + $0x28] sm:$0xff] %vm1661, %v2097
      %2236 = vst.msk [vmem:[%s273 + $0x30] sm:$0xff] %vm1661, %v2102
      %2237 = vst.msk [vmem:[%s273 + $0x38] sm:$0xff] %vm1661, %v2107
      %2238 = vst.msk [vmem:[%s273 + $0x40] sm:$0xff] %vm1661, %v2112
      %2239 = vst.msk [vmem:[%s273 + $0x48] sm:$0xff] %vm1661, %v2117
      %2240 = vst.msk [vmem:[%s273 + $0x50] sm:$0xff] %vm1661, %v2122
      %2241 = vst.msk [vmem:[%s273 + $0x58] sm:$0xff] %vm1661, %v2127
      %2242 = vst.msk [vmem:[%s273 + $0x60] sm:$0xff] %vm1661, %v2132
      %2243 = vst.msk [vmem:[%s273 + $0x68] sm:$0xff] %vm1661, %v2137
      %2244 = vst.msk [vmem:[%s273 + $0x70] sm:$0xff] %vm1661, %v2142
      %2245 = vst.msk [vmem:[%s273 + $0x78] sm:$0xff] %vm1661, %v2147
      %2246 = vst.msk [vmem:[%s273 + $0x80] sm:$0xff] %vm1661, %v2152
      %2247 = vst.msk [vmem:[%s273 + $0x88] sm:$0xff] %vm1661, %v2157
      %2248 = vst.msk [vmem:[%s273 + $0x90] sm:$0xff] %vm1661, %v2162
      %2249 = vst.msk [vmem:[%s273 + $0x98] sm:$0xff] %vm1661, %v2167
      %2250 = vst.msk [vmem:[%s273 + $0xa0] sm:$0xff] %vm1661, %v2172
      %2251 = vst.msk [vmem:[%s273 + $0xa8] sm:$0xff] %vm1661, %v2177
      %2252 = vst.msk [vmem:[%s273 + $0xb0] sm:$0xff] %vm1661, %v2182
      %2253 = vst.msk [vmem:[%s273 + $0xb8] sm:$0xff] %vm1661, %v2187
      %2254 = vst.msk [vmem:[%s273 + $0xc0] sm:$0xff] %vm1661, %v2192
      %2255 = vst.msk [vmem:[%s273 + $0xc8] sm:$0xff] %vm1661, %v2197
      %2256 = vst.msk [vmem:[%s273 + $0xd0] sm:$0xff] %vm1661, %v2202
      %2257 = vst.msk [vmem:[%s273 + $0xd8] sm:$0xff] %vm1661, %v2207
      %2258 = vst.msk [vmem:[%s273 + $0xe0] sm:$0xff] %vm1661, %v2212
      %2259 = vst.msk [vmem:[%s273 + $0xe8] sm:$0xff] %vm1661, %v2217
      %2260 = vst.msk [vmem:[%s273 + $0xf0] sm:$0xff] %vm1661, %v2222
      %2261 = vst.msk [vmem:[%s273 + $0xf8] sm:$0xff] %vm1661, %v2227
      %v2262 = vld [vmem:[%s6] sm:$0x1]
      %v2263 = vsel %vm1661, %v2072, 0.0
      %v2264 = vsel %vm1661, %v2077, 0.0
      %v2265 = vadd.f32 %v2263, %v2264
      %v2266 = vsel %vm1661, %v2082, 0.0
      %v2267 = vadd.f32 %v2265, %v2266
      %v2268 = vsel %vm1661, %v2087, 0.0
      %v2269 = vadd.f32 %v2267, %v2268
      %v2270 = vsel %vm1661, %v2092, 0.0
      %v2271 = vadd.f32 %v2269, %v2270
      %v2272 = vsel %vm1661, %v2097, 0.0
      %v2273 = vadd.f32 %v2271, %v2272
      %v2274 = vsel %vm1661, %v2102, 0.0
      %v2275 = vadd.f32 %v2273, %v2274
      %v2276 = vsel %vm1661, %v2107, 0.0
      %v2277 = vadd.f32 %v2275, %v2276
      %v2278 = vsel %vm1661, %v2112, 0.0
      %v2279 = vadd.f32 %v2277, %v2278
      %v2280 = vsel %vm1661, %v2117, 0.0
      %v2281 = vadd.f32 %v2279, %v2280
      %v2282 = vsel %vm1661, %v2122, 0.0
      %v2283 = vadd.f32 %v2281, %v2282
      %v2284 = vsel %vm1661, %v2127, 0.0
      %v2285 = vadd.f32 %v2283, %v2284
      %v2286 = vsel %vm1661, %v2132, 0.0
      %v2287 = vadd.f32 %v2285, %v2286
      %v2288 = vsel %vm1661, %v2137, 0.0
      %v2289 = vadd.f32 %v2287, %v2288
      %v2290 = vsel %vm1661, %v2142, 0.0
      %v2291 = vadd.f32 %v2289, %v2290
      %v2292 = vsel %vm1661, %v2147, 0.0
      %v2293 = vadd.f32 %v2291, %v2292
      %v2294 = vsel %vm1661, %v2152, 0.0
      %v2295 = vadd.f32 %v2293, %v2294
      %v2296 = vsel %vm1661, %v2157, 0.0
      %v2297 = vadd.f32 %v2295, %v2296
      %v2298 = vsel %vm1661, %v2162, 0.0
      %v2299 = vadd.f32 %v2297, %v2298
      %v2300 = vsel %vm1661, %v2167, 0.0
      %v2301 = vadd.f32 %v2299, %v2300
      %v2302 = vsel %vm1661, %v2172, 0.0
      %v2303 = vadd.f32 %v2301, %v2302
      %v2304 = vsel %vm1661, %v2177, 0.0
      %v2305 = vadd.f32 %v2303, %v2304
      %v2306 = vsel %vm1661, %v2182, 0.0
      %v2307 = vadd.f32 %v2305, %v2306
      %v2308 = vsel %vm1661, %v2187, 0.0
      %v2309 = vadd.f32 %v2307, %v2308
      %v2310 = vsel %vm1661, %v2192, 0.0
      %v2311 = vadd.f32 %v2309, %v2310
      %v2312 = vsel %vm1661, %v2197, 0.0
      %v2313 = vadd.f32 %v2311, %v2312
      %v2314 = vsel %vm1661, %v2202, 0.0
      %v2315 = vadd.f32 %v2313, %v2314
      %v2316 = vsel %vm1661, %v2207, 0.0
      %v2317 = vadd.f32 %v2315, %v2316
      %v2318 = vsel %vm1661, %v2212, 0.0
      %v2319 = vadd.f32 %v2317, %v2318
      %v2320 = vsel %vm1661, %v2217, 0.0
      %v2321 = vadd.f32 %v2319, %v2320
      %v2322 = vsel %vm1661, %v2222, 0.0
      %v2323 = vadd.f32 %v2321, %v2322
      %v2324 = vsel %vm1661, %v2227, 0.0
      %v2325 = vadd.f32 %v2323, %v2324
      %v2326 = vrot.slane %v2325, 4
      %v2327 = vadd.f32 %v2325, %v2326
      %v2328 = vrot.slane %v2327, 2
      %v2329 = vadd.f32 %v2327, %v2328
      %v2330 = vrot.slane %v2329, 1
      %v2331 = vadd.f32 %v2329, %v2330
      %v2332 = vadd.f32 %v2262, %v2331
      %vm2333 = vcmask 57344
      %2334 = vst.msk [vmem:[%s6] sm:$0x1] %vm2333, %v2332
      %v2335 = vld [vmem:[%s7] sm:$0x1]
      %v2336 = vmul.f32 %v2072, %v2072
      %v2337 = vmul.f32 %v2077, %v2077
      %v2338 = vmul.f32 %v2082, %v2082
      %v2339 = vmul.f32 %v2087, %v2087
      %v2340 = vmul.f32 %v2092, %v2092
      %v2341 = vmul.f32 %v2097, %v2097
      %v2342 = vmul.f32 %v2102, %v2102
      %v2343 = vmul.f32 %v2107, %v2107
      %v2344 = vmul.f32 %v2112, %v2112
      %v2345 = vmul.f32 %v2117, %v2117
      %v2346 = vmul.f32 %v2122, %v2122
      %v2347 = vmul.f32 %v2127, %v2127
      %v2348 = vmul.f32 %v2132, %v2132
      %v2349 = vmul.f32 %v2137, %v2137
      %v2350 = vmul.f32 %v2142, %v2142
      %v2351 = vmul.f32 %v2147, %v2147
      %v2352 = vmul.f32 %v2152, %v2152
      %v2353 = vmul.f32 %v2157, %v2157
      %v2354 = vmul.f32 %v2162, %v2162
      %v2355 = vmul.f32 %v2167, %v2167
      %v2356 = vmul.f32 %v2172, %v2172
      %v2357 = vmul.f32 %v2177, %v2177
      %v2358 = vmul.f32 %v2182, %v2182
      %v2359 = vmul.f32 %v2187, %v2187
      %v2360 = vmul.f32 %v2192, %v2192
      %v2361 = vmul.f32 %v2197, %v2197
      %v2362 = vmul.f32 %v2202, %v2202
      %v2363 = vmul.f32 %v2207, %v2207
      %v2364 = vmul.f32 %v2212, %v2212
      %v2365 = vmul.f32 %v2217, %v2217
      %v2366 = vmul.f32 %v2222, %v2222
      %v2367 = vmul.f32 %v2227, %v2227
      %v2368 = vsel %vm1661, %v2336, 0.0
      %v2369 = vsel %vm1661, %v2337, 0.0
      %v2370 = vadd.f32 %v2368, %v2369
      %v2371 = vsel %vm1661, %v2338, 0.0
      %v2372 = vadd.f32 %v2370, %v2371
      %v2373 = vsel %vm1661, %v2339, 0.0
      %v2374 = vadd.f32 %v2372, %v2373
      %v2375 = vsel %vm1661, %v2340, 0.0
      %v2376 = vadd.f32 %v2374, %v2375
      %v2377 = vsel %vm1661, %v2341, 0.0
      %v2378 = vadd.f32 %v2376, %v2377
      %v2379 = vsel %vm1661, %v2342, 0.0
      %v2380 = vadd.f32 %v2378, %v2379
      %v2381 = vsel %vm1661, %v2343, 0.0
      %v2382 = vadd.f32 %v2380, %v2381
      %v2383 = vsel %vm1661, %v2344, 0.0
      %v2384 = vadd.f32 %v2382, %v2383
      %v2385 = vsel %vm1661, %v2345, 0.0
      %v2386 = vadd.f32 %v2384, %v2385
      %v2387 = vsel %vm1661, %v2346, 0.0
      %v2388 = vadd.f32 %v2386, %v2387
      %v2389 = vsel %vm1661, %v2347, 0.0
      %v2390 = vadd.f32 %v2388, %v2389
      %v2391 = vsel %vm1661, %v2348, 0.0
      %v2392 = vadd.f32 %v2390, %v2391
      %v2393 = vsel %vm1661, %v2349, 0.0
      %v2394 = vadd.f32 %v2392, %v2393
      %v2395 = vsel %vm1661, %v2350, 0.0
      %v2396 = vadd.f32 %v2394, %v2395
      %v2397 = vsel %vm1661, %v2351, 0.0
      %v2398 = vadd.f32 %v2396, %v2397
      %v2399 = vsel %vm1661, %v2352, 0.0
      %v2400 = vadd.f32 %v2398, %v2399
      %v2401 = vsel %vm1661, %v2353, 0.0
      %v2402 = vadd.f32 %v2400, %v2401
      %v2403 = vsel %vm1661, %v2354, 0.0
      %v2404 = vadd.f32 %v2402, %v2403
      %v2405 = vsel %vm1661, %v2355, 0.0
      %v2406 = vadd.f32 %v2404, %v2405
      %v2407 = vsel %vm1661, %v2356, 0.0
      %v2408 = vadd.f32 %v2406, %v2407
      %v2409 = vsel %vm1661, %v2357, 0.0
      %v2410 = vadd.f32 %v2408, %v2409
      %v2411 = vsel %vm1661, %v2358, 0.0
      %v2412 = vadd.f32 %v2410, %v2411
      %v2413 = vsel %vm1661, %v2359, 0.0
      %v2414 = vadd.f32 %v2412, %v2413
      %v2415 = vsel %vm1661, %v2360, 0.0
      %v2416 = vadd.f32 %v2414, %v2415
      %v2417 = vsel %vm1661, %v2361, 0.0
      %v2418 = vadd.f32 %v2416, %v2417
      %v2419 = vsel %vm1661, %v2362, 0.0
      %v2420 = vadd.f32 %v2418, %v2419
      %v2421 = vsel %vm1661, %v2363, 0.0
      %v2422 = vadd.f32 %v2420, %v2421
      %v2423 = vsel %vm1661, %v2364, 0.0
      %v2424 = vadd.f32 %v2422, %v2423
      %v2425 = vsel %vm1661, %v2365, 0.0
      %v2426 = vadd.f32 %v2424, %v2425
      %v2427 = vsel %vm1661, %v2366, 0.0
      %v2428 = vadd.f32 %v2426, %v2427
      %v2429 = vsel %vm1661, %v2367, 0.0
      %v2430 = vadd.f32 %v2428, %v2429
      %v2431 = vrot.slane %v2430, 4
      %v2432 = vadd.f32 %v2430, %v2431
      %v2433 = vrot.slane %v2432, 2
      %v2434 = vadd.f32 %v2432, %v2433
      %v2435 = vrot.slane %v2434, 1
      %v2436 = vadd.f32 %v2434, %v2435
      %v2437 = vadd.f32 %v2335, %v2436
      %2438 = vst.msk [vmem:[%s7] sm:$0x1] %vm2333, %v2437
      %p2439 = scmp.lt.s32.totalorder %s19, 1
      %s2440 = scalar_select %p2439, %s19, 1
      %s2441 = smul.addr %s2440, 32
      %s2442 = smul.addr %s2441, 8
      %s2443 = scalar_lea.vmem %s5, %s2442
      // Predicated region
      $region45: #{basic_block_forward.4} parent=39 // pred_check
        %p2444 = pneg %p147
      $region46: #{basic_block_forward.4} parent=39 // pred_check_branch
        %2446 = sbr.rel (%p2444) target = $region48
      $region47: #{basic_block_forward.4} parent=39 // pred_region
        _
      $region48: #{basic_block_forward.4} parent=39 // pred_fallthru
        _
      // Predicated region
      $region49: #{basic_block_forward.4} parent=39 // pred_check
        %p2447 = pneg %p168
      $region50: #{basic_block_forward.4} parent=39 // pred_check_branch
        %2449 = sbr.rel (%p2447) target = $region52
      $region51: #{basic_block_forward.4} parent=39 // pred_region
        _
      $region52: #{basic_block_forward.4} parent=39 // pred_fallthru
        _
      // Predicated region
      $region53: #{basic_block_forward.4} parent=39 // pred_check
        %p2450 = pneg %p189
      $region54: #{basic_block_forward.4} parent=39 // pred_check_branch
        %2452 = sbr.rel (%p2450) target = $region56
      $region55: #{basic_block_forward.4} parent=39 // pred_region
        _
      $region56: #{basic_block_forward.4} parent=39 // pred_fallthru
        _
      // Predicated region
      $region57: #{basic_block_forward.4} parent=39 // pred_check
        %p2453 = pneg %p168
      $region58: #{basic_block_forward.4} parent=39 // pred_check_branch
        %2455 = sbr.rel (%p2453) target = $region60
      $region59: #{basic_block_forward.4} parent=39 // pred_region
        _
      $region60: #{basic_block_forward.4} parent=39 // pred_fallthru
        _
      // Predicated region
      $region61: #{basic_block_forward.4} parent=39 // pred_check
        %p2456 = pneg %p189
      $region62: #{basic_block_forward.4} parent=39 // pred_check_branch
        %2458 = sbr.rel (%p2456) target = $region64
      $region63: #{basic_block_forward.4} parent=39 // pred_region
        _
      $region64: #{basic_block_forward.4} parent=39 // pred_fallthru
        _
    $region40: #{basic_block_forward.4} parent=5 // pred_fallthru
      _
    %p2459 = scmp.le.s32.totalorder 2, %s14
    // Predicated region
    $region65: #{basic_block_forward.4} parent=5 // pred_check
      %p2460 = pneg %p2459
    $region66: #{basic_block_forward.4} parent=5 // pred_check_branch
      %2462 = sbr.rel (%p2460) target = $region68
    $region67: #{basic_block_forward.4} parent=5 // pred_region
      %s2463 = ssub.s32 %s14, 2
      // Predicated region
      $region69: #{basic_block_forward.4} parent=67 // pred_check
        %p2464 = pneg %p153
      $region70: #{basic_block_forward.4} parent=67 // pred_check_branch
        %2466 = sbr.rel (%p2464) target = $region72
      $region71: #{basic_block_forward.4} parent=67 // pred_region
        %p2467 = scmp.lt.s32.totalorder %s20, 1
        %s2468 = scalar_select %p2467, %s20, 1
        %s2469 = smul.addr %s2468, 32
        %s2470 = smul.addr %s2469, 8
        %s2471 = scalar_lea.vmem %s5, %s2470
      $region72: #{basic_block_forward.4} parent=67 // pred_fallthru
        _
    $region68: #{basic_block_forward.4} parent=5 // pred_fallthru
      _
  $region6: #{basic_block_forward.4} parent=0 // loop_footer
    %s18 = sadd.s32 1, %s14
  $region7: #{basic_block_forward.4} parent=0 // loop_footer_branch
    %13 = sbr.rel target = $region3
  $region8: #{basic_block_forward.4} parent=0 // loop_exit
    _

// kernel: basic_block_forward.5
$region0: #{basic_block_forward.5}
  #allocation0 [shape = 'u32[]', space=smem, size = 0x4, offset = 0x4, fixed_abs, tag = 'smem constant byte address 0x4 - core index']
  #allocation1 [shape = 'u32[144,128]{1,0:T(1,128)}', space=vmem, size = 0x12000, scoped, tag = 'internal scratch']
  %s0 = inlined_call_operand.vmem [shape: f32[2,16,16,8], index: 0, kind: input, shape index: {}]
  %s1 = inlined_call_operand.vmem [shape: f32[1,8], index: 1, kind: input, shape index: {}]
  %s2 = inlined_call_operand.vmem [shape: f32[1,8], index: 2, kind: input, shape index: {}]
  %s3 = inlined_call_operand.vmem [shape: f32[72,8], index: 3, kind: input, shape index: {}]
  %s4 = inlined_call_operand.vmem [shape: f32[1,8], index: 4, kind: input, shape index: {}]
  %s5 = inlined_call_operand.vmem [shape: f32[2,16,16,4], index: 5, kind: input, shape index: {}]
  %s6 = inlined_call_operand.vmem [shape: f32[4,8], index: 6, kind: input, shape index: {}]
  %s7 = inlined_call_operand.vmem [shape: f32[1,8], index: 7, kind: input, shape index: {}]
  %s8 = inlined_call_operand.vmem [shape: f32[2,16,16,8], index: 8, kind: output, shape index: {}]
  %s9 = sld [smem:[#allocation0]]
  $region65: #{basic_block_forward.5} parent=0
    _
  %s11 = ssub.s32 1, %s9
  %s12 = scalar_select 0, %s11, %s9
  loop: start=0, step=1, limit=4
  $region2: #{basic_block_forward.5} parent=0 // loop_pre_header
    _
  $region3: #{basic_block_forward.5} parent=0 // loop_header
    %s14 = sphi 0, %s18
    %p15 = scmp.ge.s32.totalorder %s14, 4
    %s24 = sphi 0, %s26
    %s27 = sphi 0, %s24
    %s28 = sphi 0, %s27
    %s44 = sphi 0, %s28
    %s48 = sphi 0, %s48
    %s50 = sphi 0, %s48
    %s51 = sphi 0, %s50
    %s65 = sphi 0, %s51
    %s69 = sphi 0, %s69
    %s71 = sphi 0, %s69
    %s72 = sphi 0, %s71
    %s86 = sphi 0, %s72
    %s90 = sphi 0, %s90
    %s92 = sphi 0, %s90
    %s93 = sphi 0, %s92
    %s107 = sphi 0, %s93
    %s111 = sphi 0, %s111
    %s113 = sphi 0, %s111
    %s114 = sphi 0, %s113
    %s128 = sphi 0, %s114
    %s134 = sphi 0, %s136
    %s137 = sphi 0, %s134
    %s138 = sphi 0, %s137
    %s154 = sphi 0, %s138
    %s158 = sphi 0, %s158
    %s160 = sphi 0, %s158
    %s161 = sphi 0, %s160
    %s175 = sphi 0, %s161
    %s179 = sphi 0, %s179
    %s181 = sphi 0, %s179
    %s182 = sphi 0, %s181
    %s196 = sphi 0, %s182
    %s202 = sphi 0, %s204
    %s205 = sphi 0, %s202
    %s206 = sphi 0, %s205
    %s222 = sphi 0, %s206
  $region4: #{basic_block_forward.5} parent=0 // loop_header_branch
    %17 = sbr.rel (%p15) target = $region8
  $region5: #{basic_block_forward.5} parent=0 // loop_body
    %s19 = ssub.s32 %s14, 1
    %s20 = ssub.s32 %s14, 2
    %s21 = sadd.s32 %s14, 1
    %s22 = ssub.s32 %s14, %s21
    %p23 = scmp.eq.s32.totalorder %s22, 0
    %s25 = sadd.s32 %s24, 1
    %s26 = scalar_select %p23, %s24, %s25
    %p29 = pneg %p23
    %p30 = scmp.eq.s32.totalorder %s14, 1
    %p31 = por %p29, %p30
    %p32 = scmp.ne.s32.totalorder %s24, %s27
    %p33 = scmp.eq.s32.totalorder %s14, 0
    %p34 = por %p32, %p33
    %p35 = scmp.ne.s32.totalorder %s24, %s27
    %p36 = scmp.eq.s32.totalorder %s19, 1
    %p37 = por %p35, %p36
    %p38 = scmp.ne.s32.totalorder %s27, %s28
    %p39 = scmp.eq.s32.totalorder %s19, 0
    %p40 = por %p38, %p39
    %p41 = scmp.ne.s32.totalorder %s27, %s28
    %p42 = scmp.eq.s32.totalorder %s20, 1
    %p43 = por %p41, %p42
    %p45 = scmp.ne.s32.totalorder %s28, %s44
    %p46 = scmp.eq.s32.totalorder %s20, 0
    %p47 = por %p45, %p46
    %s49 = sadd.s32 %s48, 1
    %p52 = scmp.eq.s32.totalorder %s14, 1
    %p53 = scmp.ne.s32.totalorder %s48, %s50
    %p54 = scmp.eq.s32.totalorder %s14, 0
    %p55 = por %p53, %p54
    %p56 = scmp.ne.s32.totalorder %s48, %s50
    %p57 = scmp.eq.s32.totalorder %s19, 1
    %p58 = por %p56, %p57
    %p59 = scmp.ne.s32.totalorder %s50, %s51
    %p60 = scmp.eq.s32.totalorder %s19, 0
    %p61 = por %p59, %p60
    %p62 = scmp.ne.s32.totalorder %s50, %s51
    %p63 = scmp.eq.s32.totalorder %s20, 1
    %p64 = por %p62, %p63
    %p66 = scmp.ne.s32.totalorder %s51, %s65
    %p67 = scmp.eq.s32.totalorder %s20, 0
    %p68 = por %p66, %p67
    %s70 = sadd.s32 %s69, 1
    %p73 = scmp.eq.s32.totalorder %s14, 1
    %p74 = scmp.ne.s32.totalorder %s69, %s71
    %p75 = scmp.eq.s32.totalorder %s14, 0
    %p76 = por %p74, %p75
    %p77 = scmp.ne.s32.totalorder %s69, %s71
    %p78 = scmp.eq.s32.totalorder %s19, 1
    %p79 = por %p77, %p78
    %p80 = scmp.ne.s32.totalorder %s71, %s72
    %p81 = scmp.eq.s32.totalorder %s19, 0
    %p82 = por %p80, %p81
    %p83 = scmp.ne.s32.totalorder %s71, %s72
    %p84 = scmp.eq.s32.totalorder %s20, 1
    %p85 = por %p83, %p84
    %p87 = scmp.ne.s32.totalorder %s72, %s86
    %p88 = scmp.eq.s32.totalorder %s20, 0
    %p89 = por %p87, %p88
    %s91 = sadd.s32 %s90, 1
    %p94 = scmp.eq.s32.totalorder %s14, 1
    %p95 = scmp.ne.s32.totalorder %s90, %s92
    %p96 = scmp.eq.s32.totalorder %s14, 0
    %p97 = por %p95, %p96
    %p98 = scmp.ne.s32.totalorder %s90, %s92
    %p99 = scmp.eq.s32.totalorder %s19, 1
    %p100 = por %p98, %p99
    %p101 = scmp.ne.s32.totalorder %s92, %s93
    %p102 = scmp.eq.s32.totalorder %s19, 0
    %p103 = por %p101, %p102
    %p104 = scmp.ne.s32.totalorder %s92, %s93
    %p105 = scmp.eq.s32.totalorder %s20, 1
    %p106 = por %p104, %p105
    %p108 = scmp.ne.s32.totalorder %s93, %s107
    %p109 = scmp.eq.s32.totalorder %s20, 0
    %p110 = por %p108, %p109
    %s112 = sadd.s32 %s111, 1
    %p115 = scmp.eq.s32.totalorder %s14, 1
    %p116 = scmp.ne.s32.totalorder %s111, %s113
    %p117 = scmp.eq.s32.totalorder %s14, 0
    %p118 = por %p116, %p117
    %p119 = scmp.ne.s32.totalorder %s111, %s113
    %p120 = scmp.eq.s32.totalorder %s19, 1
    %p121 = por %p119, %p120
    %p122 = scmp.ne.s32.totalorder %s113, %s114
    %p123 = scmp.eq.s32.totalorder %s19, 0
    %p124 = por %p122, %p123
    %p125 = scmp.ne.s32.totalorder %s113, %s114
    %p126 = scmp.eq.s32.totalorder %s20, 1
    %p127 = por %p125, %p126
    %p129 = scmp.ne.s32.totalorder %s114, %s128
    %p130 = scmp.eq.s32.totalorder %s20, 0
    %p131 = por %p129, %p130
    %s132 = ssub.s32 %s14, %s21
    %p133 = scmp.eq.s32.totalorder %s132, 0
    %s135 = sadd.s32 %s134, 1
    %s136 = scalar_select %p133, %s134, %s135
    %p139 = pneg %p133
    %p140 = scmp.eq.s32.totalorder %s14, 1
    %p141 = por %p139, %p140
    %p142 = scmp.ne.s32.totalorder %s134, %s137
    %p143 = scmp.eq.s32.totalorder %s14, 0
    %p144 = por %p142, %p143
    %p145 = scmp.ne.s32.totalorder %s134, %s137
    %p146 = scmp.eq.s32.totalorder %s19, 1
    %p147 = por %p145, %p146
    %p148 = scmp.ne.s32.totalorder %s137, %s138
    %p149 = scmp.eq.s32.totalorder %s19, 0
    %p150 = por %p148, %p149
    %p151 = scmp.ne.s32.totalorder %s137, %s138
    %p152 = scmp.eq.s32.totalorder %s20, 1
    %p153 = por %p151, %p152
    %p155 = scmp.ne.s32.totalorder %s138, %s154
    %p156 = scmp.eq.s32.totalorder %s20, 0
    %p157 = por %p155, %p156
    %s159 = sadd.s32 %s158, 1
    %p162 = scmp.eq.s32.totalorder %s14, 1
    %p163 = scmp.ne.s32.totalorder %s158, %s160
    %p164 = scmp.eq.s32.totalorder %s14, 0
    %p165 = por %p163, %p164
    %p166 = scmp.ne.s32.totalorder %s158, %s160
    %p167 = scmp.eq.s32.totalorder %s19, 1
    %p168 = por %p166, %p167
    %p169 = scmp.ne.s32.totalorder %s160, %s161
    %p170 = scmp.eq.s32.totalorder %s19, 0
    %p171 = por %p169, %p170
    %p172 = scmp.ne.s32.totalorder %s160, %s161
    %p173 = scmp.eq.s32.totalorder %s20, 1
    %p174 = por %p172, %p173
    %p176 = scmp.ne.s32.totalorder %s161, %s175
    %p177 = scmp.eq.s32.totalorder %s20, 0
    %p178 = por %p176, %p177
    %s180 = sadd.s32 %s179, 1
    %p183 = scmp.eq.s32.totalorder %s14, 1
    %p184 = scmp.ne.s32.totalorder %s179, %s181
    %p185 = scmp.eq.s32.totalorder %s14, 0
    %p186 = por %p184, %p185
    %p187 = scmp.ne.s32.totalorder %s179, %s181
    %p188 = scmp.eq.s32.totalorder %s19, 1
    %p189 = por %p187, %p188
    %p190 = scmp.ne.s32.totalorder %s181, %s182
    %p191 = scmp.eq.s32.totalorder %s19, 0
    %p192 = por %p190, %p191
    %p193 = scmp.ne.s32.totalorder %s181, %s182
    %p194 = scmp.eq.s32.totalorder %s20, 1
    %p195 = por %p193, %p194
    %p197 = scmp.ne.s32.totalorder %s182, %s196
    %p198 = scmp.eq.s32.totalorder %s20, 0
    %p199 = por %p197, %p198
    %s200 = ssub.s32 %s14, %s21
    %p201 = scmp.eq.s32.totalorder %s200, 0
    %s203 = sadd.s32 %s202, 1
    %s204 = scalar_select %p201, %s202, %s203
    %p207 = pneg %p201
    %p208 = scmp.eq.s32.totalorder %s14, 1
    %p209 = por %p207, %p208
    %p210 = scmp.ne.s32.totalorder %s202, %s205
    %p211 = scmp.eq.s32.totalorder %s14, 0
    %p212 = por %p210, %p211
    %p213 = scmp.ne.s32.totalorder %s202, %s205
    %p214 = scmp.eq.s32.totalorder %s19, 1
    %p215 = por %p213, %p214
    %p216 = scmp.ne.s32.totalorder %s205, %s206
    %p217 = scmp.eq.s32.totalorder %s19, 0
    %p218 = por %p216, %p217
    %p219 = scmp.ne.s32.totalorder %s205, %s206
    %p220 = scmp.eq.s32.totalorder %s20, 1
    %p221 = por %p219, %p220
    %p223 = scmp.ne.s32.totalorder %s206, %s222
    %p224 = scmp.eq.s32.totalorder %s20, 0
    %p225 = por %p223, %p224
    %p226 = scmp.le.s32.totalorder 1, %s14
    %p227 = scmp.lt.s32.totalorder %s14, 3
    %p228 = pnand %p226, %p227
    %p229 = pneg %p228
    // Predicated region
    $region9: #{basic_block_forward.5} parent=5 // pred_check
      _
    $region10: #{basic_block_forward.5} parent=5 // pred_check_branch
      %231 = sbr.rel (%p228) target = $region12
    $region11: #{basic_block_forward.5} parent=5 // pred_region
      %s232 = ssub.s32 %s14, 1
      // Predicated region
      $region13: #{basic_block_forward.5} parent=11 // pred_check
        %p233 = pneg %p61
      $region14: #{basic_block_forward.5} parent=11 // pred_check_branch
        %235 = sbr.rel (%p233) target = $region16
      $region15: #{basic_block_forward.5} parent=11 // pred_region
        _
      $region16: #{basic_block_forward.5} parent=11 // pred_fallthru
        _
      // Predicated region
      $region17: #{basic_block_forward.5} parent=11 // pred_check
        %p236 = pneg %p82
      $region18: #{basic_block_forward.5} parent=11 // pred_check_branch
        %238 = sbr.rel (%p236) target = $region20
      $region19: #{basic_block_forward.5} parent=11 // pred_region
        _
      $region20: #{basic_block_forward.5} parent=11 // pred_fallthru
        _
      // Predicated region
      $region21: #{basic_block_forward.5} parent=11 // pred_check
        %p239 = pneg %p103
      $region22: #{basic_block_forward.5} parent=11 // pred_check_branch
        %241 = sbr.rel (%p239) target = $region24
      $region23: #{basic_block_forward.5} parent=11 // pred_region
        _
      $region24: #{basic_block_forward.5} parent=11 // pred_fallthru
        _
      // Predicated region
      $region25: #{basic_block_forward.5} parent=11 // pred_check
        %p242 = pneg %p124
      $region26: #{basic_block_forward.5} parent=11 // pred_check_branch
        %244 = sbr.rel (%p242) target = $region28
      $region27: #{basic_block_forward.5} parent=11 // pred_region
        _
      $region28: #{basic_block_forward.5} parent=11 // pred_fallthru
        _
      // Predicated region
      $region29: #{basic_block_forward.5} parent=11 // pred_check
        %p245 = pneg %p171
      $region30: #{basic_block_forward.5} parent=11 // pred_check_branch
        %247 = sbr.rel (%p245) target = $region32
      $region31: #{basic_block_forward.5} parent=11 // pred_region
        _
      $region32: #{basic_block_forward.5} parent=11 // pred_fallthru
        _
      // Predicated region
      $region33: #{basic_block_forward.5} parent=11 // pred_check
        %p248 = pneg %p192
      $region34: #{basic_block_forward.5} parent=11 // pred_check_branch
        %250 = sbr.rel (%p248) target = $region36
      $region35: #{basic_block_forward.5} parent=11 // pred_region
        _
      $region36: #{basic_block_forward.5} parent=11 // pred_fallthru
        _
    $region12: #{basic_block_forward.5} parent=5 // pred_fallthru
      _
    %p251 = scmp.lt.s32.totalorder %s14, 2
    // Predicated region
    $region37: #{basic_block_forward.5} parent=5 // pred_check
      %p252 = pneg %p251
    $region38: #{basic_block_forward.5} parent=5 // pred_check_branch
      %254 = sbr.rel (%p252) target = $region40
    $region39: #{basic_block_forward.5} parent=5 // pred_region
      // Predicated region
      $region41: #{basic_block_forward.5} parent=39 // pred_check
        %p255 = pneg %p34
      $region42: #{basic_block_forward.5} parent=39 // pred_check_branch
        %257 = sbr.rel (%p255) target = $region44
      $region43: #{basic_block_forward.5} parent=39 // pred_region
        %p258 = scmp.lt.s32.totalorder %s14, 1
        %s259 = scalar_select %p258, %s14, 1
        %s260 = smul.addr %s259, 32
        %s261 = smul.addr %s260, 8
        %s262 = scalar_lea.vmem %s0, %s261
      $region44: #{basic_block_forward.5} parent=39 // pred_fallthru
        _
      // Predicated region
      $region45: #{basic_block_forward.5} parent=39 // pred_check
        %p263 = pneg %p144
      $region46: #{basic_block_forward.5} parent=39 // pred_check_branch
        %265 = sbr.rel (%p263) target = $region48
      $region47: #{basic_block_forward.5} parent=39 // pred_region
        %p266 = scmp.lt.s32.totalorder %s14, 1
        %s267 = scalar_select %p266, %s14, 1
        %s268 = smul.addr %s267, 32
        %s269 = smul.addr %s268, 8
        %s270 = scalar_lea.vmem %s5, %s269
      $region48: #{basic_block_forward.5} parent=39 // pred_fallthru
        _
    $region40: #{basic_block_forward.5} parent=5 // pred_fallthru
      _
    %p271 = scmp.le.s32.totalorder 1, %s14
    %p272 = scmp.lt.s32.totalorder %s14, 3
    %p273 = pnand %p271, %p272
    %p274 = pneg %p273
    // Predicated region
    $region49: #{basic_block_forward.5} parent=5 // pred_check
      _
    $region50: #{basic_block_forward.5} parent=5 // pred_check_branch
      %276 = sbr.rel (%p273) target = $region52
    $region51: #{basic_block_forward.5} parent=5 // pred_region
      %s277 = ssub.s32 %s14, 1
      %p278 = scmp.lt.s32.totalorder %s19, 1
      %s279 = scalar_select %p278, %s19, 1
      %s280 = smul.addr %s279, 32
      %s281 = smul.addr %s280, 8
      %s282 = scalar_lea.vmem %s0, %s281
      %p283 = pneg %p40
      %p284 = pneg %p37
      %p285 = pneg %p61
      %p286 = pneg %p58
      %p287 = pneg %p82
      %p288 = pneg %p79
      %p289 = pneg %p103
      %p290 = pneg %p100
      %p291 = pneg %p124
      %p292 = pneg %p121
      %p293 = scmp.lt.s32.totalorder %s19, 1
      %s294 = scalar_select %p293, %s19, 1
      %s295 = smul.addr %s294, 32
      %s296 = smul.addr %s295, 8
      %s297 = scalar_lea.vmem %s5, %s296
      %p298 = pneg %p150
      %p299 = pneg %p147
      %p300 = pneg %p171
      %p301 = pneg %p168
      %p302 = pneg %p192
      %p303 = pneg %p189
      %p304 = pneg %p218
      %p305 = pneg %p215
      %p306 = scmp.lt.s32.totalorder %s19, 1
      %s307 = scalar_select %p306, %s19, 1
      %s308 = smul.addr %s307, 32
      %s309 = smul.addr %s308, 8
      %s310 = scalar_lea.vmem %s8, %s309
      %p311 = scmp.lt.s32.totalorder %s19, 1
      %s312 = scalar_select %p311, %s19, 1
      %s313 = smul.addr %s312, 32
      %s314 = smul.addr %s313, 8
      %s315 = scalar_lea.vmem %s0, %s314
      %p316 = scmp.lt.s32.totalorder %s19, 1
      %s317 = scalar_select %p316, %s19, 1
      %s318 = smul.addr %s317, 32
      %s319 = smul.addr %s318, 8
      %s320 = scalar_lea.vmem %s5, %s319
      %p321 = scmp.lt.s32.totalorder %s19, 1
      %s322 = scalar_select %p321, %s19, 1
      %s323 = smul.addr %s322, 32
      %s324 = smul.addr %s323, 8
      %s325 = scalar_lea.vmem %s8, %s324
      %v326 = vld [vmem:[%s315] sm:$0xff]
      %v327 = vld [vmem:[%s315 + $0x8] sm:$0xff]
      %v328 = vld [vmem:[%s315 + $0x10] sm:$0xff]
      %v329 = vld [vmem:[%s315 + $0x18] sm:$0xff]
      %v330 = vld [vmem:[%s315 + $0x20] sm:$0xff]
      %v331 = vld [vmem:[%s315 + $0x28] sm:$0xff]
      %v332 = vld [vmem:[%s315 + $0x30] sm:$0xff]
      %v333 = vld [vmem:[%s315 + $0x38] sm:$0xff]
      %v334 = vld [vmem:[%s315 + $0x40] sm:$0xff]
      %v335 = vld [vmem:[%s315 + $0x48] sm:$0xff]
      %v336 = vld [vmem:[%s315 + $0x50] sm:$0xff]
      %v337 = vld [vmem:[%s315 + $0x58] sm:$0xff]
      %v338 = vld [vmem:[%s315 + $0x60] sm:$0xff]
      %v339 = vld [vmem:[%s315 + $0x68] sm:$0xff]
      %v340 = vld [vmem:[%s315 + $0x70] sm:$0xff]
      %v341 = vld [vmem:[%s315 + $0x78] sm:$0xff]
      %v342 = vld [vmem:[%s315 + $0x80] sm:$0xff]
      %v343 = vld [vmem:[%s315 + $0x88] sm:$0xff]
      %v344 = vld [vmem:[%s315 + $0x90] sm:$0xff]
      %v345 = vld [vmem:[%s315 + $0x98] sm:$0xff]
      %v346 = vld [vmem:[%s315 + $0xa0] sm:$0xff]
      %v347 = vld [vmem:[%s315 + $0xa8] sm:$0xff]
      %v348 = vld [vmem:[%s315 + $0xb0] sm:$0xff]
      %v349 = vld [vmem:[%s315 + $0xb8] sm:$0xff]
      %v350 = vld [vmem:[%s315 + $0xc0] sm:$0xff]
      %v351 = vld [vmem:[%s315 + $0xc8] sm:$0xff]
      %v352 = vld [vmem:[%s315 + $0xd0] sm:$0xff]
      %v353 = vld [vmem:[%s315 + $0xd8] sm:$0xff]
      %v354 = vld [vmem:[%s315 + $0xe0] sm:$0xff]
      %v355 = vld [vmem:[%s315 + $0xe8] sm:$0xff]
      %v356 = vld [vmem:[%s315 + $0xf0] sm:$0xff]
      %v357 = vld [vmem:[%s315 + $0xf8] sm:$0xff]
      %v358 = vld [vmem:[%s1] sm:$0x1]
      %v359 = vld [vmem:[%s2] sm:$0x1]
      %v361 = vlaneseq
      %v362 = vshrl.u32 %v361, 7
      %v363 = vsub.s32 0, %v362
      %v364 = vrot.slane %v358, %v363
      %v366 = vmul.f32 %v326, %v364
      %v367 = vmul.f32 %v327, %v364
      %v368 = vmul.f32 %v328, %v364
      %v369 = vmul.f32 %v329, %v364
      %v370 = vmul.f32 %v330, %v364
      %v371 = vmul.f32 %v331, %v364
      %v372 = vmul.f32 %v332, %v364
      %v373 = vmul.f32 %v333, %v364
      %v374 = vmul.f32 %v334, %v364
      %v375 = vmul.f32 %v335, %v364
      %v376 = vmul.f32 %v336, %v364
      %v377 = vmul.f32 %v337, %v364
      %v378 = vmul.f32 %v338, %v364
      %v379 = vmul.f32 %v339, %v364
      %v380 = vmul.f32 %v340, %v364
      %v381 = vmul.f32 %v341, %v364
      %v382 = vmul.f32 %v342, %v364
      %v383 = vmul.f32 %v343, %v364
      %v384 = vmul.f32 %v344, %v364
      %v385 = vmul.f32 %v345, %v364
      %v386 = vmul.f32 %v346, %v364
      %v387 = vmul.f32 %v347, %v364
      %v388 = vmul.f32 %v348, %v364
      %v389 = vmul.f32 %v349, %v364
      %v390 = vmul.f32 %v350, %v364
      %v391 = vmul.f32 %v351, %v364
      %v392 = vmul.f32 %v352, %v364
      %v393 = vmul.f32 %v353, %v364
      %v394 = vmul.f32 %v354, %v364
      %v395 = vmul.f32 %v355, %v364
      %v396 = vmul.f32 %v356, %v364
      %v397 = vmul.f32 %v357, %v364
      %v399 = vlaneseq
      %v400 = vshrl.u32 %v399, 7
      %v401 = vsub.s32 0, %v400
      %v402 = vrot.slane %v359, %v401
      %v404 = vadd.f32 %v366, %v402
      %v405 = vadd.f32 %v367, %v402
      %v406 = vadd.f32 %v368, %v402
      %v407 = vadd.f32 %v369, %v402
      %v408 = vadd.f32 %v370, %v402
      %v409 = vadd.f32 %v371, %v402
      %v410 = vadd.f32 %v372, %v402
      %v411 = vadd.f32 %v373, %v402
      %v412 = vadd.f32 %v374, %v402
      %v413 = vadd.f32 %v375, %v402
      %v414 = vadd.f32 %v376, %v402
      %v415 = vadd.f32 %v377, %v402
      %v416 = vadd.f32 %v378, %v402
      %v417 = vadd.f32 %v379, %v402
      %v418 = vadd.f32 %v380, %v402
      %v419 = vadd.f32 %v381, %v402
      %v420 = vadd.f32 %v382, %v402
      %v421 = vadd.f32 %v383, %v402
      %v422 = vadd.f32 %v384, %v402
      %v423 = vadd.f32 %v385, %v402
      %v424 = vadd.f32 %v386, %v402
      %v425 = vadd.f32 %v387, %v402
      %v426 = vadd.f32 %v388, %v402
      %v427 = vadd.f32 %v389, %v402
      %v428 = vadd.f32 %v390, %v402
      %v429 = vadd.f32 %v391, %v402
      %v430 = vadd.f32 %v392, %v402
      %v431 = vadd.f32 %v393, %v402
      %v432 = vadd.f32 %v394, %v402
      %v433 = vadd.f32 %v395, %v402
      %v434 = vadd.f32 %v396, %v402
      %v435 = vadd.f32 %v397, %v402
      %vm436 = vcmp.ge.f32.partialorder %v404, 0.0
      %vm437 = vcmp.ge.f32.partialorder %v405, 0.0
      %vm438 = vcmp.ge.f32.partialorder %v406, 0.0
      %vm439 = vcmp.ge.f32.partialorder %v407, 0.0
      %vm440 = vcmp.ge.f32.partialorder %v408, 0.0
      %vm441 = vcmp.ge.f32.partialorder %v409, 0.0
      %vm442 = vcmp.ge.f32.partialorder %v410, 0.0
      %vm443 = vcmp.ge.f32.partialorder %v411, 0.0
      %vm444 = vcmp.ge.f32.partialorder %v412, 0.0
      %vm445 = vcmp.ge.f32.partialorder %v413, 0.0
      %vm446 = vcmp.ge.f32.partialorder %v414, 0.0
      %vm447 = vcmp.ge.f32.partialorder %v415, 0.0
      %vm448 = vcmp.ge.f32.partialorder %v416, 0.0
      %vm449 = vcmp.ge.f32.partialorder %v417, 0.0
      %vm450 = vcmp.ge.f32.partialorder %v418, 0.0
      %vm451 = vcmp.ge.f32.partialorder %v419, 0.0
      %vm452 = vcmp.ge.f32.partialorder %v420, 0.0
      %vm453 = vcmp.ge.f32.partialorder %v421, 0.0
      %vm454 = vcmp.ge.f32.partialorder %v422, 0.0
      %vm455 = vcmp.ge.f32.partialorder %v423, 0.0
      %vm456 = vcmp.ge.f32.partialorder %v424, 0.0
      %vm457 = vcmp.ge.f32.partialorder %v425, 0.0
      %vm458 = vcmp.ge.f32.partialorder %v426, 0.0
      %vm459 = vcmp.ge.f32.partialorder %v427, 0.0
      %vm460 = vcmp.ge.f32.partialorder %v428, 0.0
      %vm461 = vcmp.ge.f32.partialorder %v429, 0.0
      %vm462 = vcmp.ge.f32.partialorder %v430, 0.0
      %vm463 = vcmp.ge.f32.partialorder %v431, 0.0
      %vm464 = vcmp.ge.f32.partialorder %v432, 0.0
      %vm465 = vcmp.ge.f32.partialorder %v433, 0.0
      %vm466 = vcmp.ge.f32.partialorder %v434, 0.0
      %vm467 = vcmp.ge.f32.partialorder %v435, 0.0
      %v468 = vmul.f32 %v404, 0.2
      %v469 = vmul.f32 %v405, 0.2
      %v470 = vmul.f32 %v406, 0.2
      %v471 = vmul.f32 %v407, 0.2
      %v472 = vmul.f32 %v408, 0.2
      %v473 = vmul.f32 %v409, 0.2
      %v474 = vmul.f32 %v410, 0.2
      %v475 = vmul.f32 %v411, 0.2
      %v476 = vmul.f32 %v412, 0.2
      %v477 = vmul.f32 %v413, 0.2
      %v478 = vmul.f32 %v414, 0.2
      %v479 = vmul.f32 %v415, 0.2
      %v480 = vmul.f32 %v416, 0.2
      %v481 = vmul.f32 %v417, 0.2
      %v482 = vmul.f32 %v418, 0.2
      %v483 = vmul.f32 %v419, 0.2
      %v484 = vmul.f32 %v420, 0.2
      %v485 = vmul.f32 %v421, 0.2
      %v486 = vmul.f32 %v422, 0.2
      %v487 = vmul.f32 %v423, 0.2
      %v488 = vmul.f32 %v424, 0.2
      %v489 = vmul.f32 %v425, 0.2
      %v490 = vmul.f32 %v426, 0.2
      %v491 = vmul.f32 %v427, 0.2
      %v492 = vmul.f32 %v428, 0.2
      %v493 = vmul.f32 %v429, 0.2
      %v494 = vmul.f32 %v430, 0.2
      %v495 = vmul.f32 %v431, 0.2
      %v496 = vmul.f32 %v432, 0.2
      %v497 = vmul.f32 %v433, 0.2
      %v498 = vmul.f32 %v434, 0.2
      %v499 = vmul.f32 %v435, 0.2
      %v500 = vsel %vm436, %v404, %v468
      %v501 = vsel %vm437, %v405, %v469
      %v502 = vsel %vm438, %v406, %v470
      %v503 = vsel %vm439, %v407, %v471
      %v504 = vsel %vm440, %v408, %v472
      %v505 = vsel %vm441, %v409, %v473
      %v506 = vsel %vm442, %v410, %v474
      %v507 = vsel %vm443, %v411, %v475
      %v508 = vsel %vm444, %v412, %v476
      %v509 = vsel %vm445, %v413, %v477
      %v510 = vsel %vm446, %v414, %v478
      %v511 = vsel %vm447, %v415, %v479
      %v512 = vsel %vm448, %v416, %v480
      %v513 = vsel %vm449, %v417, %v481
      %v514 = vsel %vm450, %v418, %v482
      %v515 = vsel %vm451, %v419, %v483
      %v516 = vsel %vm452, %v420, %v484
      %v517 = vsel %vm453, %v421, %v485
      %v518 = vsel %vm454, %v422, %v486
      %v519 = vsel %vm455, %v423, %v487
      %v520 = vsel %vm456, %v424, %v488
      %v521 = vsel %vm457, %v425, %v489
      %v522 = vsel %vm458, %v426, %v490
      %v523 = vsel %vm459, %v427, %v491
      %v524 = vsel %vm460, %v428, %v492
      %v525 = vsel %vm461, %v429, %v493
      %v526 = vsel %vm462, %v430, %v494
      %v527 = vsel %vm463, %v431, %v495
      %v528 = vsel %vm464, %v432, %v496
      %v529 = vsel %vm465, %v433, %v497
      %v530 = vsel %vm466, %v434, %v498
      %v531 = vsel %vm467, %v435, %v499
      %vm565 = vcmask 1040384
      %v566 = vrot.slane 0.0, 7
      %v567 = vsel %vm565, %v566, %v566
      %v568 = vrot.slane %v500, 7
      %v569 = vrot.slane %v501, 7
      %v570 = vsel %vm565, %v568, %v569
      %v571 = vrot.slane %v502, 7
      %v572 = vrot.slane %v503, 7
      %v573 = vsel %vm565, %v571, %v572
      %v574 = vrot.slane %v504, 7
      %v575 = vrot.slane %v505, 7
      %v576 = vsel %vm565, %v574, %v575
      %v577 = vrot.slane %v506, 7
      %v578 = vrot.slane %v507, 7
      %v579 = vsel %vm565, %v577, %v578
      %v580 = vrot.slane %v508, 7
      %v581 = vrot.slane %v509, 7
      %v582 = vsel %vm565, %v580, %v581
      %v583 = vrot.slane %v510, 7
      %v584 = vrot.slane %v511, 7
      %v585 = vsel %vm565, %v583, %v584
      %v586 = vrot.slane %v512, 7
      %v587 = vrot.slane %v513, 7
      %v588 = vsel %vm565, %v586, %v587
      %v589 = vrot.slane %v514, 7
      %v590 = vrot.slane %v515, 7
      %v591 = vsel %vm565, %v589, %v590
      %v592 = vrot.slane %v516, 7
      %v593 = vrot.slane %v517, 7
      %v594 = vsel %vm565, %v592, %v593
      %v595 = vrot.slane %v518, 7
      %v596 = vrot.slane %v519, 7
      %v597 = vsel %vm565, %v595, %v596
      %v598 = vrot.slane %v520, 7
      %v599 = vrot.slane %v521, 7
      %v600 = vsel %vm565, %v598, %v599
      %v601 = vrot.slane %v522, 7
      %v602 = vrot.slane %v523, 7
      %v603 = vsel %vm565, %v601, %v602
      %v604 = vrot.slane %v524, 7
      %v605 = vrot.slane %v525, 7
      %v606 = vsel %vm565, %v604, %v605
      %v607 = vrot.slane %v526, 7
      %v608 = vrot.slane %v527, 7
      %v609 = vsel %vm565, %v607, %v608
      %v610 = vrot.slane %v528, 7
      %v611 = vrot.slane %v529, 7
      %v612 = vsel %vm565, %v610, %v611
      %v613 = vrot.slane %v530, 7
      %v614 = vrot.slane %v531, 7
      %v615 = vsel %vm565, %v613, %v614
      %v665 = vsel %vm565, 0.0, %v566
      %v666 = vsel %vm565, 0.0, %v568
      %v667 = vsel %vm565, 0.0, %v571
      %v668 = vsel %vm565, 0.0, %v574
      %v669 = vsel %vm565, 0.0, %v577
      %v670 = vsel %vm565, 0.0, %v580
      %v671 = vsel %vm565, 0.0, %v583
      %v672 = vsel %vm565, 0.0, %v586
      %v673 = vsel %vm565, 0.0, %v589
      %v674 = vsel %vm565, 0.0, %v592
      %v675 = vsel %vm565, 0.0, %v595
      %v676 = vsel %vm565, 0.0, %v598
      %v677 = vsel %vm565, 0.0, %v601
      %v678 = vsel %vm565, 0.0, %v604
      %v679 = vsel %vm565, 0.0, %v607
      %v680 = vsel %vm565, 0.0, %v610
      %v681 = vsel %vm565, 0.0, %v613
      %v682 = vsel %vm565, %v566, 0.0
      %v683 = vsel %vm565, %v569, 0.0
      %v684 = vsel %vm565, %v572, 0.0
      %v685 = vsel %vm565, %v575, 0.0
      %v686 = vsel %vm565, %v578, 0.0
      %v687 = vsel %vm565, %v581, 0.0
      %v688 = vsel %vm565, %v584, 0.0
      %v689 = vsel %vm565, %v587, 0.0
      %v690 = vsel %vm565, %v590, 0.0
      %v691 = vsel %vm565, %v593, 0.0
      %v692 = vsel %vm565, %v596, 0.0
      %v693 = vsel %vm565, %v599, 0.0
      %v694 = vsel %vm565, %v602, 0.0
      %v695 = vsel %vm565, %v605, 0.0
      %v696 = vsel %vm565, %v608, 0.0
      %v697 = vsel %vm565, %v611, 0.0
      %v698 = vsel %vm565, %v614, 0.0
      %vm731 = vcmask 1046528
      %v732 = vrot.slane %v665, 1
      %v733 = vrot.slane %v567, 1
      %v734 = vsel %vm731, %v732, %v733
      %v735 = vrot.slane %v682, 1
      %v736 = vsel %vm731, %v733, %v735
      %v737 = vrot.slane %v666, 1
      %v738 = vrot.slane %v570, 1
      %v739 = vsel %vm731, %v737, %v738
      %v740 = vrot.slane %v683, 1
      %v741 = vsel %vm731, %v738, %v740
      %v742 = vrot.slane %v667, 1
      %v743 = vrot.slane %v573, 1
      %v744 = vsel %vm731, %v742, %v743
      %v745 = vrot.slane %v684, 1
      %v746 = vsel %vm731, %v743, %v745
      %v747 = vrot.slane %v668, 1
      %v748 = vrot.slane %v576, 1
      %v749 = vsel %vm731, %v747, %v748
      %v750 = vrot.slane %v685, 1
      %v751 = vsel %vm731, %v748, %v750
      %v752 = vrot.slane %v669, 1
      %v753 = vrot.slane %v579, 1
      %v754 = vsel %vm731, %v752, %v753
      %v755 = vrot.slane %v686, 1
      %v756 = vsel %vm731, %v753, %v755
      %v757 = vrot.slane %v670, 1
      %v758 = vrot.slane %v582, 1
      %v759 = vsel %vm731, %v757, %v758
      %v760 = vrot.slane %v687, 1
      %v761 = vsel %vm731, %v758, %v760
      %v762 = vrot.slane %v671, 1
      %v763 = vrot.slane %v585, 1
      %v764 = vsel %vm731, %v762, %v763
      %v765 = vrot.slane %v688, 1
      %v766 = vsel %vm731, %v763, %v765
      %v767 = vrot.slane %v672, 1
      %v768 = vrot.slane %v588, 1
      %v769 = vsel %vm731, %v767, %v768
      %v770 = vrot.slane %v689, 1
      %v771 = vsel %vm731, %v768, %v770
      %v772 = vrot.slane %v673, 1
      %v773 = vrot.slane %v591, 1
      %v774 = vsel %vm731, %v772, %v773
      %v775 = vrot.slane %v690, 1
      %v776 = vsel %vm731, %v773, %v775
      %v777 = vrot.slane %v674, 1
      %v778 = vrot.slane %v594, 1
      %v779 = vsel %vm731, %v777, %v778
      %v780 = vrot.slane %v691, 1
      %v781 = vsel %vm731, %v778, %v780
      %v782 = vrot.slane %v675, 1
      %v783 = vrot.slane %v597, 1
      %v784 = vsel %vm731, %v782, %v783
      %v785 = vrot.slane %v692, 1
      %v786 = vsel %vm731, %v783, %v785
      %v787 = vrot.slane %v676, 1
      %v788 = vrot.slane %v600, 1
      %v789 = vsel %vm731, %v787, %v788
      %v790 = vrot.slane %v693, 1
      %v791 = vsel %vm731, %v788, %v790
      %v792 = vrot.slane %v677, 1
      %v793 = vrot.slane %v603, 1
      %v794 = vsel %vm731, %v792, %v793
      %v795 = vrot.slane %v694, 1
      %v796 = vsel %vm731, %v793, %v795
      %v797 = vrot.slane %v678, 1
      %v798 = vrot.slane %v606, 1
      %v799 = vsel %vm731, %v797, %v798
      %v800 = vrot.slane %v695, 1
      %v801 = vsel %vm731, %v798, %v800
      %v802 = vrot.slane %v679, 1
      %v803 = vrot.slane %v609, 1
      %v804 = vsel %vm731, %v802, %v803
      %v805 = vrot.slane %v696, 1
      %v806 = vsel %vm731, %v803, %v805
      %v807 = vrot.slane %v680, 1
      %v808 = vrot.slane %v612, 1
      %v809 = vsel %vm731, %v807, %v808
      %v810 = vrot.slane %v697, 1
      %v811 = vsel %vm731, %v808, %v810
      %812 = vrot.lane.b32.xlu0 %v734, 8
      %v813 = vpop.permute.xlu0 %812
      %814 = vrot.lane.b32.xlu0 %v736, 8
      %v815 = vpop.permute.xlu0 %814
      %816 = vrot.lane.b32.xlu0 %v739, 8
      %v817 = vpop.permute.xlu0 %816
      %818 = vrot.lane.b32.xlu0 %v741, 8
      %v819 = vpop.permute.xlu0 %818
      %820 = vrot.lane.b32.xlu0 %v744, 8
      %v821 = vpop.permute.xlu0 %820
      %822 = vrot.lane.b32.xlu0 %v746, 8
      %v823 = vpop.permute.xlu0 %822
      %824 = vrot.lane.b32.xlu0 %v749, 8
      %v825 = vpop.permute.xlu0 %824
      %826 = vrot.lane.b32.xlu0 %v751, 8
      %v827 = vpop.permute.xlu0 %826
      %828 = vrot.lane.b32.xlu0 %v754, 8
      %v829 = vpop.permute.xlu0 %828
      %830 = vrot.lane.b32.xlu0 %v756, 8
      %v831 = vpop.permute.xlu0 %830
      %832 = vrot.lane.b32.xlu0 %v759, 8
      %v833 = vpop.permute.xlu0 %832
      %834 = vrot.lane.b32.xlu0 %v761, 8
      %v835 = vpop.permute.xlu0 %834
      %836 = vrot.lane.b32.xlu0 %v764, 8
      %v837 = vpop.permute.xlu0 %836
      %838 = vrot.lane.b32.xlu0 %v766, 8
      %v839 = vpop.permute.xlu0 %838
      %840 = vrot.lane.b32.xlu0 %v769, 8
      %v841 = vpop.permute.xlu0 %840
      %842 = vrot.lane.b32.xlu0 %v771, 8
      %v843 = vpop.permute.xlu0 %842
      %844 = vrot.lane.b32.xlu0 %v774, 8
      %v845 = vpop.permute.xlu0 %844
      %846 = vrot.lane.b32.xlu0 %v776, 8
      %v847 = vpop.permute.xlu0 %846
      %848 = vrot.lane.b32.xlu0 %v779, 8
      %v849 = vpop.permute.xlu0 %848
      %850 = vrot.lane.b32.xlu0 %v781, 8
      %v851 = vpop.permute.xlu0 %850
      %852 = vrot.lane.b32.xlu0 %v784, 8
      %v853 = vpop.permute.xlu0 %852
      %854 = vrot.lane.b32.xlu0 %v786, 8
      %v855 = vpop.permute.xlu0 %854
      %856 = vrot.lane.b32.xlu0 %v789, 8
      %v857 = vpop.permute.xlu0 %856
      %858 = vrot.lane.b32.xlu0 %v791, 8
      %v859 = vpop.permute.xlu0 %858
      %860 = vrot.lane.b32.xlu0 %v794, 8
      %v861 = vpop.permute.xlu0 %860
      %862 = vrot.lane.b32.xlu0 %v796, 8
      %v863 = vpop.permute.xlu0 %862
      %864 = vrot.lane.b32.xlu0 %v799, 8
      %v865 = vpop.permute.xlu0 %864
      %866 = vrot.lane.b32.xlu0 %v801, 8
      %v867 = vpop.permute.xlu0 %866
      %868 = vrot.lane.b32.xlu0 %v804, 8
      %v869 = vpop.permute.xlu0 %868
      %870 = vrot.lane.b32.xlu0 %v806, 8
      %v871 = vpop.permute.xlu0 %870
      %872 = vrot.lane.b32.xlu0 %v809, 8
      %v873 = vpop.permute.xlu0 %872
      %874 = vrot.lane.b32.xlu0 %v811, 8
      %v875 = vpop.permute.xlu0 %874
      %vm908 = vcmask 1045504
      %v909 = vrot.slane %v665, 2
      %v910 = vrot.slane %v567, 2
      %v911 = vsel %vm908, %v909, %v910
      %v912 = vrot.slane %v682, 2
      %v913 = vsel %vm908, %v910, %v912
      %v914 = vrot.slane %v666, 2
      %v915 = vrot.slane %v570, 2
      %v916 = vsel %vm908, %v914, %v915
      %v917 = vrot.slane %v683, 2
      %v918 = vsel %vm908, %v915, %v917
      %v919 = vrot.slane %v667, 2
      %v920 = vrot.slane %v573, 2
      %v921 = vsel %vm908, %v919, %v920
      %v922 = vrot.slane %v684, 2
      %v923 = vsel %vm908, %v920, %v922
      %v924 = vrot.slane %v668, 2
      %v925 = vrot.slane %v576, 2
      %v926 = vsel %vm908, %v924, %v925
      %v927 = vrot.slane %v685, 2
      %v928 = vsel %vm908, %v925, %v927
      %v929 = vrot.slane %v669, 2
      %v930 = vrot.slane %v579, 2
      %v931 = vsel %vm908, %v929, %v930
      %v932 = vrot.slane %v686, 2
      %v933 = vsel %vm908, %v930, %v932
      %v934 = vrot.slane %v670, 2
      %v935 = vrot.slane %v582, 2
      %v936 = vsel %vm908, %v934, %v935
      %v937 = vrot.slane %v687, 2
      %v938 = vsel %vm908, %v935, %v937
      %v939 = vrot.slane %v671, 2
      %v940 = vrot.slane %v585, 2
      %v941 = vsel %vm908, %v939, %v940
      %v942 = vrot.slane %v688, 2
      %v943 = vsel %vm908, %v940, %v942
      %v944 = vrot.slane %v672, 2
      %v945 = vrot.slane %v588, 2
      %v946 = vsel %vm908, %v944, %v945
      %v947 = vrot.slane %v689, 2
      %v948 = vsel %vm908, %v945, %v947
      %v949 = vrot.slane %v673, 2
      %v950 = vrot.slane %v591, 2
      %v951 = vsel %vm908, %v949, %v950
      %v952 = vrot.slane %v690, 2
      %v953 = vsel %vm908, %v950, %v952
      %v954 = vrot.slane %v674, 2
      %v955 = vrot.slane %v594, 2
      %v956 = vsel %vm908, %v954, %v955
      %v957 = vrot.slane %v691, 2
      %v958 = vsel %vm908, %v955, %v957
      %v959 = vrot.slane %v675, 2
      %v960 = vrot.slane %v597, 2
      %v961 = vsel %vm908, %v959, %v960
      %v962 = vrot.slane %v692, 2
      %v963 = vsel %vm908, %v960, %v962
      %v964 = vrot.slane %v676, 2
      %v965 = vrot.slane %v600, 2
      %v966 = vsel %vm908, %v964, %v965
      %v967 = vrot.slane %v693, 2
      %v968 = vsel %vm908, %v965, %v967
      %v969 = vrot.slane %v677, 2
      %v970 = vrot.slane %v603, 2
      %v971 = vsel %vm908, %v969, %v970
      %v972 = vrot.slane %v694, 2
      %v973 = vsel %vm908, %v970, %v972
      %v974 = vrot.slane %v678, 2
      %v975 = vrot.slane %v606, 2
      %v976 = vsel %vm908, %v974, %v975
      %v977 = vrot.slane %v695, 2
      %v978 = vsel %vm908, %v975, %v977
      %v979 = vrot.slane %v679, 2
      %v980 = vrot.slane %v609, 2
      %v981 = vsel %vm908, %v979, %v980
      %v982 = vrot.slane %v696, 2
      %v983 = vsel %vm908, %v980, %v982
      %v984 = vrot.slane %v680, 2
      %v985 = vrot.slane %v612, 2
      %v986 = vsel %vm908, %v984, %v985
      %v987 = vrot.slane %v697, 2
      %v988 = vsel %vm908, %v985, %v987
      %989 = vrot.lane.b32.xlu0 %v911, 16
      %v990 = vpop.permute.xlu0 %989
      %991 = vrot.lane.b32.xlu0 %v913, 16
      %v992 = vpop.permute.xlu0 %991
      %993 = vrot.lane.b32.xlu0 %v916, 16
      %v994 = vpop.permute.xlu0 %993
      %995 = vrot.lane.b32.xlu0 %v918, 16
      %v996 = vpop.permute.xlu0 %995
      %997 = vrot.lane.b32.xlu0 %v921, 16
      %v998 = vpop.permute.xlu0 %997
      %999 = vrot.lane.b32.xlu0 %v923, 16
      %v1000 = vpop.permute.xlu0 %999
      %1001 = vrot.lane.b32.xlu0 %v926, 16
      %v1002 = vpop.permute.xlu0 %1001
      %1003 = vrot.lane.b32.xlu0 %v928, 16
      %v1004 = vpop.permute.xlu0 %1003
      %1005 = vrot.lane.b32.xlu0 %v931, 16
      %v1006 = vpop.permute.xlu0 %1005
      %1007 = vrot.lane.b32.xlu0 %v933, 16
      %v1008 = vpop.permute.xlu0 %1007
      %1009 = vrot.lane.b32.xlu0 %v936, 16
      %v1010 = vpop.permute.xlu0 %1009
      %1011 = vrot.lane.b32.xlu0 %v938, 16
      %v1012 = vpop.permute.xlu0 %1011
      %1013 = vrot.lane.b32.xlu0 %v941, 16
      %v1014 = vpop.permute.xlu0 %1013
      %1015 = vrot.lane.b32.xlu0 %v943, 16
      %v1016 = vpop.permute.xlu0 %1015
      %1017 = vrot.lane.b32.xlu0 %v946, 16
      %v1018 = vpop.permute.xlu0 %1017
      %1019 = vrot.lane.b32.xlu0 %v948, 16
      %v1020 = vpop.permute.xlu0 %1019
      %1021 = vrot.lane.b32.xlu0 %v951, 16
      %v1022 = vpop.permute.xlu0 %1021
      %1023 = vrot.lane.b32.xlu0 %v953, 16
      %v1024 = vpop.permute.xlu0 %1023
      %1025 = vrot.lane.b32.xlu0 %v956, 16
      %v1026 = vpop.permute.xlu0 %1025
      %1027 = vrot.lane.b32.xlu0 %v958, 16
      %v1028 = vpop.permute.xlu0 %1027
      %1029 = vrot.lane.b32.xlu0 %v961, 16
      %v1030 = vpop.permute.xlu0 %1029
      %1031 = vrot.lane.b32.xlu0 %v963, 16
      %v1032 = vpop.permute.xlu0 %1031
      %1033 = vrot.lane.b32.xlu0 %v966, 16
      %v1034 = vpop.permute.xlu0 %1033
      %1035 = vrot.lane.b32.xlu0 %v968, 16
      %v1036 = vpop.permute.xlu0 %1035
      %1037 = vrot.lane.b32.xlu0 %v971, 16
      %v1038 = vpop.permute.xlu0 %1037
      %1039 = vrot.lane.b32.xlu0 %v973, 16
      %v1040 = vpop.permute.xlu0 %1039
      %1041 = vrot.lane.b32.xlu0 %v976, 16
      %v1042 = vpop.permute.xlu0 %1041
      %1043 = vrot.lane.b32.xlu0 %v978, 16
      %v1044 = vpop.permute.xlu0 %1043
      %1045 = vrot.lane.b32.xlu0 %v981, 16
      %v1046 = vpop.permute.xlu0 %1045
      %1047 = vrot.lane.b32.xlu0 %v983, 16
      %v1048 = vpop.permute.xlu0 %1047
      %1049 = vrot.lane.b32.xlu0 %v986, 16
      %v1050 = vpop.permute.xlu0 %1049
      %1051 = vrot.lane.b32.xlu0 %v988, 16
      %v1052 = vpop.permute.xlu0 %1051
      %1086 = vrot.lane.b32.xlu0 %v666, 24
      %v1087 = vpop.permute.xlu0 %1086
      %1088 = vrot.lane.b32.xlu0 %v570, 24
      %v1089 = vpop.permute.xlu0 %1088
      %1090 = vrot.lane.b32.xlu0 %v667, 24
      %v1091 = vpop.permute.xlu0 %1090
      %1092 = vrot.lane.b32.xlu0 %v573, 24
      %v1093 = vpop.permute.xlu0 %1092
      %1094 = vrot.lane.b32.xlu0 %v668, 24
      %v1095 = vpop.permute.xlu0 %1094
      %1096 = vrot.lane.b32.xlu0 %v576, 24
      %v1097 = vpop.permute.xlu0 %1096
      %1098 = vrot.lane.b32.xlu0 %v669, 24
      %v1099 = vpop.permute.xlu0 %1098
      %1100 = vrot.lane.b32.xlu0 %v579, 24
      %v1101 = vpop.permute.xlu0 %1100
      %1102 = vrot.lane.b32.xlu0 %v670, 24
      %v1103 = vpop.permute.xlu0 %1102
      %1104 = vrot.lane.b32.xlu0 %v582, 24
      %v1105 = vpop.permute.xlu0 %1104
      %1106 = vrot.lane.b32.xlu0 %v671, 24
      %v1107 = vpop.permute.xlu0 %1106
      %1108 = vrot.lane.b32.xlu0 %v585, 24
      %v1109 = vpop.permute.xlu0 %1108
      %1110 = vrot.lane.b32.xlu0 %v672, 24
      %v1111 = vpop.permute.xlu0 %1110
      %1112 = vrot.lane.b32.xlu0 %v588, 24
      %v1113 = vpop.permute.xlu0 %1112
      %1114 = vrot.lane.b32.xlu0 %v673, 24
      %v1115 = vpop.permute.xlu0 %1114
      %1116 = vrot.lane.b32.xlu0 %v591, 24
      %v1117 = vpop.permute.xlu0 %1116
      %1118 = vrot.lane.b32.xlu0 %v674, 24
      %v1119 = vpop.permute.xlu0 %1118
      %1120 = vrot.lane.b32.xlu0 %v594, 24
      %v1121 = vpop.permute.xlu0 %1120
      %1122 = vrot.lane.b32.xlu0 %v675, 24
      %v1123 = vpop.permute.xlu0 %1122
      %1124 = vrot.lane.b32.xlu0 %v597, 24
      %v1125 = vpop.permute.xlu0 %1124
      %1126 = vrot.lane.b32.xlu0 %v676, 24
      %v1127 = vpop.permute.xlu0 %1126
      %1128 = vrot.lane.b32.xlu0 %v600, 24
      %v1129 = vpop.permute.xlu0 %1128
      %1130 = vrot.lane.b32.xlu0 %v677, 24
      %v1131 = vpop.permute.xlu0 %1130
      %1132 = vrot.lane.b32.xlu0 %v603, 24
      %v1133 = vpop.permute.xlu0 %1132
      %1134 = vrot.lane.b32.xlu0 %v678, 24
      %v1135 = vpop.permute.xlu0 %1134
      %1136 = vrot.lane.b32.xlu0 %v606, 24
      %v1137 = vpop.permute.xlu0 %1136
      %1138 = vrot.lane.b32.xlu0 %v679, 24
      %v1139 = vpop.permute.xlu0 %1138
      %1140 = vrot.lane.b32.xlu0 %v609, 24
      %v1141 = vpop.permute.xlu0 %1140
      %1142 = vrot.lane.b32.xlu0 %v680, 24
      %v1143 = vpop.permute.xlu0 %1142
      %1144 = vrot.lane.b32.xlu0 %v612, 24
      %v1145 = vpop.permute.xlu0 %1144
      %1146 = vrot.lane.b32.xlu0 %v681, 24
      %v1147 = vpop.permute.xlu0 %1146
      %1148 = vrot.lane.b32.xlu0 %v615, 24
      %v1149 = vpop.permute.xlu0 %1148
      %v1183 = vrot.slane %v681, 1
      %v1184 = vrot.slane %v615, 1
      %v1185 = vsel %vm731, %v1183, %v1184
      %v1186 = vrot.slane %v698, 1
      %v1187 = vsel %vm731, %v1184, %v1186
      %1188 = vrot.lane.b32.xlu0 %v739, 32
      %v1189 = vpop.permute.xlu0 %1188
      %1190 = vrot.lane.b32.xlu0 %v741, 32
      %v1191 = vpop.permute.xlu0 %1190
      %1192 = vrot.lane.b32.xlu0 %v744, 32
      %v1193 = vpop.permute.xlu0 %1192
      %1194 = vrot.lane.b32.xlu0 %v746, 32
      %v1195 = vpop.permute.xlu0 %1194
      %1196 = vrot.lane.b32.xlu0 %v749, 32
      %v1197 = vpop.permute.xlu0 %1196
      %1198 = vrot.lane.b32.xlu0 %v751, 32
      %v1199 = vpop.permute.xlu0 %1198
      %1200 = vrot.lane.b32.xlu0 %v754, 32
      %v1201 = vpop.permute.xlu0 %1200
      %1202 = vrot.lane.b32.xlu0 %v756, 32
      %v1203 = vpop.permute.xlu0 %1202
      %1204 = vrot.lane.b32.xlu0 %v759, 32
      %v1205 = vpop.permute.xlu0 %1204
      %1206 = vrot.lane.b32.xlu0 %v761, 32
      %v1207 = vpop.permute.xlu0 %1206
      %1208 = vrot.lane.b32.xlu0 %v764, 32
      %v1209 = vpop.permute.xlu0 %1208
      %1210 = vrot.lane.b32.xlu0 %v766, 32
      %v1211 = vpop.permute.xlu0 %1210
      %1212 = vrot.lane.b32.xlu0 %v769, 32
      %v1213 = vpop.permute.xlu0 %1212
      %1214 = vrot.lane.b32.xlu0 %v771, 32
      %v1215 = vpop.permute.xlu0 %1214
      %1216 = vrot.lane.b32.xlu0 %v774, 32
      %v1217 = vpop.permute.xlu0 %1216
      %1218 = vrot.lane.b32.xlu0 %v776, 32
      %v1219 = vpop.permute.xlu0 %1218
      %1220 = vrot.lane.b32.xlu0 %v779, 32
      %v1221 = vpop.permute.xlu0 %1220
      %1222 = vrot.lane.b32.xlu0 %v781, 32
      %v1223 = vpop.permute.xlu0 %1222
      %1224 = vrot.lane.b32.xlu0 %v784, 32
      %v1225 = vpop.permute.xlu0 %1224
      %1226 = vrot.lane.b32.xlu0 %v786, 32
      %v1227 = vpop.permute.xlu0 %1226
      %1228 = vrot.lane.b32.xlu0 %v789, 32
      %v1229 = vpop.permute.xlu0 %1228
      %1230 = vrot.lane.b32.xlu0 %v791, 32
      %v1231 = vpop.permute.xlu0 %1230
      %1232 = vrot.lane.b32.xlu0 %v794, 32
      %v1233 = vpop.permute.xlu0 %1232
      %1234 = vrot.lane.b32.xlu0 %v796, 32
      %v1235 = vpop.permute.xlu0 %1234
      %1236 = vrot.lane.b32.xlu0 %v799, 32
      %v1237 = vpop.permute.xlu0 %1236
      %1238 = vrot.lane.b32.xlu0 %v801, 32
      %v1239 = vpop.permute.xlu0 %1238
      %1240 = vrot.lane.b32.xlu0 %v804, 32
      %v1241 = vpop.permute.xlu0 %1240
      %1242 = vrot.lane.b32.xlu0 %v806, 32
      %v1243 = vpop.permute.xlu0 %1242
      %1244 = vrot.lane.b32.xlu0 %v809, 32
      %v1245 = vpop.permute.xlu0 %1244
      %1246 = vrot.lane.b32.xlu0 %v811, 32
      %v1247 = vpop.permute.xlu0 %1246
      %1248 = vrot.lane.b32.xlu0 %v1185, 32
      %v1249 = vpop.permute.xlu0 %1248
      %1250 = vrot.lane.b32.xlu0 %v1187, 32
      %v1251 = vpop.permute.xlu0 %1250
      %v1284 = vrot.slane %v681, 2
      %v1285 = vrot.slane %v615, 2
      %v1286 = vsel %vm908, %v1284, %v1285
      %v1287 = vrot.slane %v698, 2
      %v1288 = vsel %vm908, %v1285, %v1287
      %1289 = vrot.lane.b32.xlu0 %v916, 40
      %v1290 = vpop.permute.xlu0 %1289
      %1291 = vrot.lane.b32.xlu0 %v918, 40
      %v1292 = vpop.permute.xlu0 %1291
      %1293 = vrot.lane.b32.xlu0 %v921, 40
      %v1294 = vpop.permute.xlu0 %1293
      %1295 = vrot.lane.b32.xlu0 %v923, 40
      %v1296 = vpop.permute.xlu0 %1295
      %1297 = vrot.lane.b32.xlu0 %v926, 40
      %v1298 = vpop.permute.xlu0 %1297
      %1299 = vrot.lane.b32.xlu0 %v928, 40
      %v1300 = vpop.permute.xlu0 %1299
      %1301 = vrot.lane.b32.xlu0 %v931, 40
      %v1302 = vpop.permute.xlu0 %1301
      %1303 = vrot.lane.b32.xlu0 %v933, 40
      %v1304 = vpop.permute.xlu0 %1303
      %1305 = vrot.lane.b32.xlu0 %v936, 40
      %v1306 = vpop.permute.xlu0 %1305
      %1307 = vrot.lane.b32.xlu0 %v938, 40
      %v1308 = vpop.permute.xlu0 %1307
      %1309 = vrot.lane.b32.xlu0 %v941, 40
      %v1310 = vpop.permute.xlu0 %1309
      %1311 = vrot.lane.b32.xlu0 %v943, 40
      %v1312 = vpop.permute.xlu0 %1311
      %1313 = vrot.lane.b32.xlu0 %v946, 40
      %v1314 = vpop.permute.xlu0 %1313
      %1315 = vrot.lane.b32.xlu0 %v948, 40
      %v1316 = vpop.permute.xlu0 %1315
      %1317 = vrot.lane.b32.xlu0 %v951, 40
      %v1318 = vpop.permute.xlu0 %1317
      %1319 = vrot.lane.b32.xlu0 %v953, 40
      %v1320 = vpop.permute.xlu0 %1319
      %1321 = vrot.lane.b32.xlu0 %v956, 40
      %v1322 = vpop.permute.xlu0 %1321
      %1323 = vrot.lane.b32.xlu0 %v958, 40
      %v1324 = vpop.permute.xlu0 %1323
      %1325 = vrot.lane.b32.xlu0 %v961, 40
      %v1326 = vpop.permute.xlu0 %1325
      %1327 = vrot.lane.b32.xlu0 %v963, 40
      %v1328 = vpop.permute.xlu0 %1327
      %1329 = vrot.lane.b32.xlu0 %v966, 40
      %v1330 = vpop.permute.xlu0 %1329
      %1331 = vrot.lane.b32.xlu0 %v968, 40
      %v1332 = vpop.permute.xlu0 %1331
      %1333 = vrot.lane.b32.xlu0 %v971, 40
      %v1334 = vpop.permute.xlu0 %1333
      %1335 = vrot.lane.b32.xlu0 %v973, 40
      %v1336 = vpop.permute.xlu0 %1335
      %1337 = vrot.lane.b32.xlu0 %v976, 40
      %v1338 = vpop.permute.xlu0 %1337
      %1339 = vrot.lane.b32.xlu0 %v978, 40
      %v1340 = vpop.permute.xlu0 %1339
      %1341 = vrot.lane.b32.xlu0 %v981, 40
      %v1342 = vpop.permute.xlu0 %1341
      %1343 = vrot.lane.b32.xlu0 %v983, 40
      %v1344 = vpop.permute.xlu0 %1343
      %1345 = vrot.lane.b32.xlu0 %v986, 40
      %v1346 = vpop.permute.xlu0 %1345
      %1347 = vrot.lane.b32.xlu0 %v988, 40
      %v1348 = vpop.permute.xlu0 %1347
      %1349 = vrot.lane.b32.xlu0 %v1286, 40
      %v1350 = vpop.permute.xlu0 %1349
      %1351 = vrot.lane.b32.xlu0 %v1288, 40
      %v1352 = vpop.permute.xlu0 %1351
      %1385 = vrot.lane.b32.xlu0 %v667, 48
      %v1386 = vpop.permute.xlu0 %1385
      %1387 = vrot.lane.b32.xlu0 %v573, 48
      %v1388 = vpop.permute.xlu0 %1387
      %1389 = vrot.lane.b32.xlu0 %v668, 48
      %v1390 = vpop.permute.xlu0 %1389
      %1391 = vrot.lane.b32.xlu0 %v576, 48
      %v1392 = vpop.permute.xlu0 %1391
      %1393 = vrot.lane.b32.xlu0 %v669, 48
      %v1394 = vpop.permute.xlu0 %1393
      %1395 = vrot.lane.b32.xlu0 %v579, 48
      %v1396 = vpop.permute.xlu0 %1395
      %1397 = vrot.lane.b32.xlu0 %v670, 48
      %v1398 = vpop.permute.xlu0 %1397
      %1399 = vrot.lane.b32.xlu0 %v582, 48
      %v1400 = vpop.permute.xlu0 %1399
      %1401 = vrot.lane.b32.xlu0 %v671, 48
      %v1402 = vpop.permute.xlu0 %1401
      %1403 = vrot.lane.b32.xlu0 %v585, 48
      %v1404 = vpop.permute.xlu0 %1403
      %1405 = vrot.lane.b32.xlu0 %v672, 48
      %v1406 = vpop.permute.xlu0 %1405
      %1407 = vrot.lane.b32.xlu0 %v588, 48
      %v1408 = vpop.permute.xlu0 %1407
      %1409 = vrot.lane.b32.xlu0 %v673, 48
      %v1410 = vpop.permute.xlu0 %1409
      %1411 = vrot.lane.b32.xlu0 %v591, 48
      %v1412 = vpop.permute.xlu0 %1411
      %1413 = vrot.lane.b32.xlu0 %v674, 48
      %v1414 = vpop.permute.xlu0 %1413
      %1415 = vrot.lane.b32.xlu0 %v594, 48
      %v1416 = vpop.permute.xlu0 %1415
      %1417 = vrot.lane.b32.xlu0 %v675, 48
      %v1418 = vpop.permute.xlu0 %1417
      %1419 = vrot.lane.b32.xlu0 %v597, 48
      %v1420 = vpop.permute.xlu0 %1419
      %1421 = vrot.lane.b32.xlu0 %v676, 48
      %v1422 = vpop.permute.xlu0 %1421
      %1423 = vrot.lane.b32.xlu0 %v600, 48
      %v1424 = vpop.permute.xlu0 %1423
      %1425 = vrot.lane.b32.xlu0 %v677, 48
      %v1426 = vpop.permute.xlu0 %1425
      %1427 = vrot.lane.b32.xlu0 %v603, 48
      %v1428 = vpop.permute.xlu0 %1427
      %1429 = vrot.lane.b32.xlu0 %v678, 48
      %v1430 = vpop.permute.xlu0 %1429
      %1431 = vrot.lane.b32.xlu0 %v606, 48
      %v1432 = vpop.permute.xlu0 %1431
      %1433 = vrot.lane.b32.xlu0 %v679, 48
      %v1434 = vpop.permute.xlu0 %1433
      %1435 = vrot.lane.b32.xlu0 %v609, 48
      %v1436 = vpop.permute.xlu0 %1435
      %1437 = vrot.lane.b32.xlu0 %v680, 48
      %v1438 = vpop.permute.xlu0 %1437
      %1439 = vrot.lane.b32.xlu0 %v612, 48
      %v1440 = vpop.permute.xlu0 %1439
      %1441 = vrot.lane.b32.xlu0 %v681, 48
      %v1442 = vpop.permute.xlu0 %1441
      %1443 = vrot.lane.b32.xlu0 %v615, 48
      %v1444 = vpop.permute.xlu0 %1443
      %1445 = vrot.lane.b32.xlu0 %v665, 48
      %v1446 = vpop.permute.xlu0 %1445
      %1447 = vrot.lane.b32.xlu0 %v567, 48
      %v1448 = vpop.permute.xlu0 %1447
      %1481 = vrot.lane.b32.xlu0 %v744, 56
      %v1482 = vpop.permute.xlu0 %1481
      %1483 = vrot.lane.b32.xlu0 %v746, 56
      %v1484 = vpop.permute.xlu0 %1483
      %1485 = vrot.lane.b32.xlu0 %v749, 56
      %v1486 = vpop.permute.xlu0 %1485
      %1487 = vrot.lane.b32.xlu0 %v751, 56
      %v1488 = vpop.permute.xlu0 %1487
      %1489 = vrot.lane.b32.xlu0 %v754, 56
      %v1490 = vpop.permute.xlu0 %1489
      %1491 = vrot.lane.b32.xlu0 %v756, 56
      %v1492 = vpop.permute.xlu0 %1491
      %1493 = vrot.lane.b32.xlu0 %v759, 56
      %v1494 = vpop.permute.xlu0 %1493
      %1495 = vrot.lane.b32.xlu0 %v761, 56
      %v1496 = vpop.permute.xlu0 %1495
      %1497 = vrot.lane.b32.xlu0 %v764, 56
      %v1498 = vpop.permute.xlu0 %1497
      %1499 = vrot.lane.b32.xlu0 %v766, 56
      %v1500 = vpop.permute.xlu0 %1499
      %1501 = vrot.lane.b32.xlu0 %v769, 56
      %v1502 = vpop.permute.xlu0 %1501
      %1503 = vrot.lane.b32.xlu0 %v771, 56
      %v1504 = vpop.permute.xlu0 %1503
      %1505 = vrot.lane.b32.xlu0 %v774, 56
      %v1506 = vpop.permute.xlu0 %1505
      %1507 = vrot.lane.b32.xlu0 %v776, 56
      %v1508 = vpop.permute.xlu0 %1507
      %1509 = vrot.lane.b32.xlu0 %v779, 56
      %v1510 = vpop.permute.xlu0 %1509
      %1511 = vrot.lane.b32.xlu0 %v781, 56
      %v1512 = vpop.permute.xlu0 %1511
      %1513 = vrot.lane.b32.xlu0 %v784, 56
      %v1514 = vpop.permute.xlu0 %1513
      %1515 = vrot.lane.b32.xlu0 %v786, 56
      %v1516 = vpop.permute.xlu0 %1515
      %1517 = vrot.lane.b32.xlu0 %v789, 56
      %v1518 = vpop.permute.xlu0 %1517
      %1519 = vrot.lane.b32.xlu0 %v791, 56
      %v1520 = vpop.permute.xlu0 %1519
      %1521 = vrot.lane.b32.xlu0 %v794, 56
      %v1522 = vpop.permute.xlu0 %1521
      %1523 = vrot.lane.b32.xlu0 %v796, 56
      %v1524 = vpop.permute.xlu0 %1523
      %1525 = vrot.lane.b32.xlu0 %v799, 56
      %v1526 = vpop.permute.xlu0 %1525
      %1527 = vrot.lane.b32.xlu0 %v801, 56
      %v1528 = vpop.permute.xlu0 %1527
      %1529 = vrot.lane.b32.xlu0 %v804, 56
      %v1530 = vpop.permute.xlu0 %1529
      %1531 = vrot.lane.b32.xlu0 %v806, 56
      %v1532 = vpop.permute.xlu0 %1531
      %1533 = vrot.lane.b32.xlu0 %v809, 56
      %v1534 = vpop.permute.xlu0 %1533
      %1535 = vrot.lane.b32.xlu0 %v811, 56
      %v1536 = vpop.permute.xlu0 %1535
      %1537 = vrot.lane.b32.xlu0 %v1185, 56
      %v1538 = vpop.permute.xlu0 %1537
      %1539 = vrot.lane.b32.xlu0 %v1187, 56
      %v1540 = vpop.permute.xlu0 %1539
      %1541 = vrot.lane.b32.xlu0 %v734, 56
      %v1542 = vpop.permute.xlu0 %1541
      %1543 = vrot.lane.b32.xlu0 %v736, 56
      %v1544 = vpop.permute.xlu0 %1543
      %1577 = vrot.lane.b32.xlu0 %v921, 64
      %v1578 = vpop.permute.xlu0 %1577
      %1579 = vrot.lane.b32.xlu0 %v923, 64
      %v1580 = vpop.permute.xlu0 %1579
      %1581 = vrot.lane.b32.xlu0 %v926, 64
      %v1582 = vpop.permute.xlu0 %1581
      %1583 = vrot.lane.b32.xlu0 %v928, 64
      %v1584 = vpop.permute.xlu0 %1583
      %1585 = vrot.lane.b32.xlu0 %v931, 64
      %v1586 = vpop.permute.xlu0 %1585
      %1587 = vrot.lane.b32.xlu0 %v933, 64
      %v1588 = vpop.permute.xlu0 %1587
      %1589 = vrot.lane.b32.xlu0 %v936, 64
      %v1590 = vpop.permute.xlu0 %1589
      %1591 = vrot.lane.b32.xlu0 %v938, 64
      %v1592 = vpop.permute.xlu0 %1591
      %1593 = vrot.lane.b32.xlu0 %v941, 64
      %v1594 = vpop.permute.xlu0 %1593
      %1595 = vrot.lane.b32.xlu0 %v943, 64
      %v1596 = vpop.permute.xlu0 %1595
      %1597 = vrot.lane.b32.xlu0 %v946, 64
      %v1598 = vpop.permute.xlu0 %1597
      %1599 = vrot.lane.b32.xlu0 %v948, 64
      %v1600 = vpop.permute.xlu0 %1599
      %1601 = vrot.lane.b32.xlu0 %v951, 64
      %v1602 = vpop.permute.xlu0 %1601
      %1603 = vrot.lane.b32.xlu0 %v953, 64
      %v1604 = vpop.permute.xlu0 %1603
      %1605 = vrot.lane.b32.xlu0 %v956, 64
      %v1606 = vpop.permute.xlu0 %1605
      %1607 = vrot.lane.b32.xlu0 %v958, 64
      %v1608 = vpop.permute.xlu0 %1607
      %1609 = vrot.lane.b32.xlu0 %v961, 64
      %v1610 = vpop.permute.xlu0 %1609
      %1611 = vrot.lane.b32.xlu0 %v963, 64
      %v1612 = vpop.permute.xlu0 %1611
      %1613 = vrot.lane.b32.xlu0 %v966, 64
      %v1614 = vpop.permute.xlu0 %1613
      %1615 = vrot.lane.b32.xlu0 %v968, 64
      %v1616 = vpop.permute.xlu0 %1615
      %1617 = vrot.lane.b32.xlu0 %v971, 64
      %v1618 = vpop.permute.xlu0 %1617
      %1619 = vrot.lane.b32.xlu0 %v973, 64
      %v1620 = vpop.permute.xlu0 %1619
      %1621 = vrot.lane.b32.xlu0 %v976, 64
      %v1622 = vpop.permute.xlu0 %1621
      %1623 = vrot.lane.b32.xlu0 %v978, 64
      %v1624 = vpop.permute.xlu0 %1623
      %1625 = vrot.lane.b32.xlu0 %v981, 64
      %v1626 = vpop.permute.xlu0 %1625
      %1627 = vrot.lane.b32.xlu0 %v983, 64
      %v1628 = vpop.permute.xlu0 %1627
      %1629 = vrot.lane.b32.xlu0 %v986, 64
      %v1630 = vpop.permute.xlu0 %1629
      %1631 = vrot.lane.b32.xlu0 %v988, 64
      %v1632 = vpop.permute.xlu0 %1631
      %1633 = vrot.lane.b32.xlu0 %v1286, 64
      %v1634 = vpop.permute.xlu0 %1633
      %1635 = vrot.lane.b32.xlu0 %v1288, 64
      %v1636 = vpop.permute.xlu0 %1635
      %1637 = vrot.lane.b32.xlu0 %v911, 64
      %v1638 = vpop.permute.xlu0 %1637
      %1639 = vrot.lane.b32.xlu0 %v913, 64
      %v1640 = vpop.permute.xlu0 %1639
      %vm1673 = vcmask 64512
      %v1674 = vsel %vm1673, %v665, %v813
      %v1675 = vsel %vm1673, %v567, %v815
      %v1676 = vsel %vm1673, %v666, %v817
      %v1677 = vsel %vm1673, %v570, %v819
      %v1678 = vsel %vm1673, %v667, %v821
      %v1679 = vsel %vm1673, %v573, %v823
      %v1680 = vsel %vm1673, %v668, %v825
      %v1681 = vsel %vm1673, %v576, %v827
      %v1682 = vsel %vm1673, %v669, %v829
      %v1683 = vsel %vm1673, %v579, %v831
      %v1684 = vsel %vm1673, %v670, %v833
      %v1685 = vsel %vm1673, %v582, %v835
      %v1686 = vsel %vm1673, %v671, %v837
      %v1687 = vsel %vm1673, %v585, %v839
      %v1688 = vsel %vm1673, %v672, %v841
      %v1689 = vsel %vm1673, %v588, %v843
      %v1690 = vsel %vm1673, %v673, %v845
      %v1691 = vsel %vm1673, %v591, %v847
      %v1692 = vsel %vm1673, %v674, %v849
      %v1693 = vsel %vm1673, %v594, %v851
      %v1694 = vsel %vm1673, %v675, %v853
      %v1695 = vsel %vm1673, %v597, %v855
      %v1696 = vsel %vm1673, %v676, %v857
      %v1697 = vsel %vm1673, %v600, %v859
      %v1698 = vsel %vm1673, %v677, %v861
      %v1699 = vsel %vm1673, %v603, %v863
      %v1700 = vsel %vm1673, %v678, %v865
      %v1701 = vsel %vm1673, %v606, %v867
      %v1702 = vsel %vm1673, %v679, %v869
      %v1703 = vsel %vm1673, %v609, %v871
      %v1704 = vsel %vm1673, %v680, %v873
      %v1705 = vsel %vm1673, %v612, %v875
      %vm1706 = vcmask 130048
      %v1707 = vsel %vm1706, %v1674, %v990
      %v1708 = vsel %vm1706, %v1675, %v992
      %v1709 = vsel %vm1706, %v1676, %v994
      %v1710 = vsel %vm1706, %v1677, %v996
      %v1711 = vsel %vm1706, %v1678, %v998
      %v1712 = vsel %vm1706, %v1679, %v1000
      %v1713 = vsel %vm1706, %v1680, %v1002
      %v1714 = vsel %vm1706, %v1681, %v1004
      %v1715 = vsel %vm1706, %v1682, %v1006
      %v1716 = vsel %vm1706, %v1683, %v1008
      %v1717 = vsel %vm1706, %v1684, %v1010
      %v1718 = vsel %vm1706, %v1685, %v1012
      %v1719 = vsel %vm1706, %v1686, %v1014
      %v1720 = vsel %vm1706, %v1687, %v1016
      %v1721 = vsel %vm1706, %v1688, %v1018
      %v1722 = vsel %vm1706, %v1689, %v1020
      %v1723 = vsel %vm1706, %v1690, %v1022
      %v1724 = vsel %vm1706, %v1691, %v1024
      %v1725 = vsel %vm1706, %v1692, %v1026
      %v1726 = vsel %vm1706, %v1693, %v1028
      %v1727 = vsel %vm1706, %v1694, %v1030
      %v1728 = vsel %vm1706, %v1695, %v1032
      %v1729 = vsel %vm1706, %v1696, %v1034
      %v1730 = vsel %vm1706, %v1697, %v1036
      %v1731 = vsel %vm1706, %v1698, %v1038
      %v1732 = vsel %vm1706, %v1699, %v1040
      %v1733 = vsel %vm1706, %v1700, %v1042
      %v1734 = vsel %vm1706, %v1701, %v1044
      %v1735 = vsel %vm1706, %v1702, %v1046
      %v1736 = vsel %vm1706, %v1703, %v1048
      %v1737 = vsel %vm1706, %v1704, %v1050
      %v1738 = vsel %vm1706, %v1705, %v1052
      %vm1739 = vcmask 195584
      %v1740 = vsel %vm1739, %v1707, %v1087
      %v1741 = vsel %vm1739, %v1708, %v1089
      %v1742 = vsel %vm1739, %v1709, %v1091
      %v1743 = vsel %vm1739, %v1710, %v1093
      %v1744 = vsel %vm1739, %v1711, %v1095
      %v1745 = vsel %vm1739, %v1712, %v1097
      %v1746 = vsel %vm1739, %v1713, %v1099
      %v1747 = vsel %vm1739, %v1714, %v1101
      %v1748 = vsel %vm1739, %v1715, %v1103
      %v1749 = vsel %vm1739, %v1716, %v1105
      %v1750 = vsel %vm1739, %v1717, %v1107
      %v1751 = vsel %vm1739, %v1718, %v1109
      %v1752 = vsel %vm1739, %v1719, %v1111
      %v1753 = vsel %vm1739, %v1720, %v1113
      %v1754 = vsel %vm1739, %v1721, %v1115
      %v1755 = vsel %vm1739, %v1722, %v1117
      %v1756 = vsel %vm1739, %v1723, %v1119
      %v1757 = vsel %vm1739, %v1724, %v1121
      %v1758 = vsel %vm1739, %v1725, %v1123
      %v1759 = vsel %vm1739, %v1726, %v1125
      %v1760 = vsel %vm1739, %v1727, %v1127
      %v1761 = vsel %vm1739, %v1728, %v1129
      %v1762 = vsel %vm1739, %v1729, %v1131
      %v1763 = vsel %vm1739, %v1730, %v1133
      %v1764 = vsel %vm1739, %v1731, %v1135
      %v1765 = vsel %vm1739, %v1732, %v1137
      %v1766 = vsel %vm1739, %v1733, %v1139
      %v1767 = vsel %vm1739, %v1734, %v1141
      %v1768 = vsel %vm1739, %v1735, %v1143
      %v1769 = vsel %vm1739, %v1736, %v1145
      %v1770 = vsel %vm1739, %v1737, %v1147
      %v1771 = vsel %vm1739, %v1738, %v1149
      %vm1772 = vcmask 261120
      %v1773 = vsel %vm1772, %v1740, %v1189
      %v1774 = vsel %vm1772, %v1741, %v1191
      %v1775 = vsel %vm1772, %v1742, %v1193
      %v1776 = vsel %vm1772, %v1743, %v1195
      %v1777 = vsel %vm1772, %v1744, %v1197
      %v1778 = vsel %vm1772, %v1745, %v1199
      %v1779 = vsel %vm1772, %v1746, %v1201
      %v1780 = vsel %vm1772, %v1747, %v1203
      %v1781 = vsel %vm1772, %v1748, %v1205
      %v1782 = vsel %vm1772, %v1749, %v1207
      %v1783 = vsel %vm1772, %v1750, %v1209
      %v1784 = vsel %vm1772, %v1751, %v1211
      %v1785 = vsel %vm1772, %v1752, %v1213
      %v1786 = vsel %vm1772, %v1753, %v1215
      %v1787 = vsel %vm1772, %v1754, %v1217
      %v1788 = vsel %vm1772, %v1755, %v1219
      %v1789 = vsel %vm1772, %v1756, %v1221
      %v1790 = vsel %vm1772, %v1757, %v1223
      %v1791 = vsel %vm1772, %v1758, %v1225
      %v1792 = vsel %vm1772, %v1759, %v1227
      %v1793 = vsel %vm1772, %v1760, %v1229
      %v1794 = vsel %vm1772, %v1761, %v1231
      %v1795 = vsel %vm1772, %v1762, %v1233
      %v1796 = vsel %vm1772, %v1763, %v1235
      %v1797 = vsel %vm1772, %v1764, %v1237
      %v1798 = vsel %vm1772, %v1765, %v1239
      %v1799 = vsel %vm1772, %v1766, %v1241
      %v1800 = vsel %vm1772, %v1767, %v1243
      %v1801 = vsel %vm1772, %v1768, %v1245
      %v1802 = vsel %vm1772, %v1769, %v1247
      %v1803 = vsel %vm1772, %v1770, %v1249
      %v1804 = vsel %vm1772, %v1771, %v1251
      %vm1805 = vcmask 326656
      %v1806 = vsel %vm1805, %v1773, %v1290
      %v1807 = vsel %vm1805, %v1774, %v1292
      %v1808 = vsel %vm1805, %v1775, %v1294
      %v1809 = vsel %vm1805, %v1776, %v1296
      %v1810 = vsel %vm1805, %v1777, %v1298
      %v1811 = vsel %vm1805, %v1778, %v1300
      %v1812 = vsel %vm1805, %v1779, %v1302
      %v1813 = vsel %vm1805, %v1780, %v1304
      %v1814 = vsel %vm1805, %v1781, %v1306
      %v1815 = vsel %vm1805, %v1782, %v1308
      %v1816 = vsel %vm1805, %v1783, %v1310
      %v1817 = vsel %vm1805, %v1784, %v1312
      %v1818 = vsel %vm1805, %v1785, %v1314
      %v1819 = vsel %vm1805, %v1786, %v1316
      %v1820 = vsel %vm1805, %v1787, %v1318
      %v1821 = vsel %vm1805, %v1788, %v1320
      %v1822 = vsel %vm1805, %v1789, %v1322
      %v1823 = vsel %vm1805, %v1790, %v1324
      %v1824 = vsel %vm1805, %v1791, %v1326
      %v1825 = vsel %vm1805, %v1792, %v1328
      %v1826 = vsel %vm1805, %v1793, %v1330
      %v1827 = vsel %vm1805, %v1794, %v1332
      %v1828 = vsel %vm1805, %v1795, %v1334
      %v1829 = vsel %vm1805, %v1796, %v1336
      %v1830 = vsel %vm1805, %v1797, %v1338
      %v1831 = vsel %vm1805, %v1798, %v1340
      %v1832 = vsel %vm1805, %v1799, %v1342
      %v1833 = vsel %vm1805, %v1800, %v1344
      %v1834 = vsel %vm1805, %v1801, %v1346
      %v1835 = vsel %vm1805, %v1802, %v1348
      %v1836 = vsel %vm1805, %v1803, %v1350
      %v1837 = vsel %vm1805, %v1804, %v1352
      %vm1838 = vcmask 392192
      %v1839 = vsel %vm1838, %v1806, %v1386
      %v1840 = vsel %vm1838, %v1807, %v1388
      %v1841 = vsel %vm1838, %v1808, %v1390
      %v1842 = vsel %vm1838, %v1809, %v1392
      %v1843 = vsel %vm1838, %v1810, %v1394
      %v1844 = vsel %vm1838, %v1811, %v1396
      %v1845 = vsel %vm1838, %v1812, %v1398
      %v1846 = vsel %vm1838, %v1813, %v1400
      %v1847 = vsel %vm1838, %v1814, %v1402
      %v1848 = vsel %vm1838, %v1815, %v1404
      %v1849 = vsel %vm1838, %v1816, %v1406
      %v1850 = vsel %vm1838, %v1817, %v1408
      %v1851 = vsel %vm1838, %v1818, %v1410
      %v1852 = vsel %vm1838, %v1819, %v1412
      %v1853 = vsel %vm1838, %v1820, %v1414
      %v1854 = vsel %vm1838, %v1821, %v1416
      %v1855 = vsel %vm1838, %v1822, %v1418
      %v1856 = vsel %vm1838, %v1823, %v1420
      %v1857 = vsel %vm1838, %v1824, %v1422
      %v1858 = vsel %vm1838, %v1825, %v1424
      %v1859 = vsel %vm1838, %v1826, %v1426
      %v1860 = vsel %vm1838, %v1827, %v1428
      %v1861 = vsel %vm1838, %v1828, %v1430
      %v1862 = vsel %vm1838, %v1829, %v1432
      %v1863 = vsel %vm1838, %v1830, %v1434
      %v1864 = vsel %vm1838, %v1831, %v1436
      %v1865 = vsel %vm1838, %v1832, %v1438
      %v1866 = vsel %vm1838, %v1833, %v1440
      %v1867 = vsel %vm1838, %v1834, %v1442
      %v1868 = vsel %vm1838, %v1835, %v1444
      %v1869 = vsel %vm1838, %v1836, %v1446
      %v1870 = vsel %vm1838, %v1837, %v1448
      %vm1871 = vcmask 457728
      %v1872 = vsel %vm1871, %v1839, %v1482
      %v1873 = vsel %vm1871, %v1840, %v1484
      %v1874 = vsel %vm1871, %v1841, %v1486
      %v1875 = vsel %vm1871, %v1842, %v1488
      %v1876 = vsel %vm1871, %v1843, %v1490
      %v1877 = vsel %vm1871, %v1844, %v1492
      %v1878 = vsel %vm1871, %v1845, %v1494
      %v1879 = vsel %vm1871, %v1846, %v1496
      %v1880 = vsel %vm1871, %v1847, %v1498
      %v1881 = vsel %vm1871, %v1848, %v1500
      %v1882 = vsel %vm1871, %v1849, %v1502
      %v1883 = vsel %vm1871, %v1850, %v1504
      %v1884 = vsel %vm1871, %v1851, %v1506
      %v1885 = vsel %vm1871, %v1852, %v1508
      %v1886 = vsel %vm1871, %v1853, %v1510
      %v1887 = vsel %vm1871, %v1854, %v1512
      %v1888 = vsel %vm1871, %v1855, %v1514
      %v1889 = vsel %vm1871, %v1856, %v1516
      %v1890 = vsel %vm1871, %v1857, %v1518
      %v1891 = vsel %vm1871, %v1858, %v1520
      %v1892 = vsel %vm1871, %v1859, %v1522
      %v1893 = vsel %vm1871, %v1860, %v1524
      %v1894 = vsel %vm1871, %v1861, %v1526
      %v1895 = vsel %vm1871, %v1862, %v1528
      %v1896 = vsel %vm1871, %v1863, %v1530
      %v1897 = vsel %vm1871, %v1864, %v1532
      %v1898 = vsel %vm1871, %v1865, %v1534
      %v1899 = vsel %vm1871, %v1866, %v1536
      %v1900 = vsel %vm1871, %v1867, %v1538
      %v1901 = vsel %vm1871, %v1868, %v1540
      %v1902 = vsel %vm1871, %v1869, %v1542
      %v1903 = vsel %vm1871, %v1870, %v1544
      %vm1904 = vcmask 523264
      %v1905 = vsel %vm1904, %v1872, %v1578
      %v1906 = vsel %vm1904, %v1873, %v1580
      %v1907 = vsel %vm1904, %v1874, %v1582
      %v1908 = vsel %vm1904, %v1875, %v1584
      %v1909 = vsel %vm1904, %v1876, %v1586
      %v1910 = vsel %vm1904, %v1877, %v1588
      %v1911 = vsel %vm1904, %v1878, %v1590
      %v1912 = vsel %vm1904, %v1879, %v1592
      %v1913 = vsel %vm1904, %v1880, %v1594
      %v1914 = vsel %vm1904, %v1881, %v1596
      %v1915 = vsel %vm1904, %v1882, %v1598
      %v1916 = vsel %vm1904, %v1883, %v1600
      %v1917 = vsel %vm1904, %v1884, %v1602
      %v1918 = vsel %vm1904, %v1885, %v1604
      %v1919 = vsel %vm1904, %v1886, %v1606
      %v1920 = vsel %vm1904, %v1887, %v1608
      %v1921 = vsel %vm1904, %v1888, %v1610
      %v1922 = vsel %vm1904, %v1889, %v1612
      %v1923 = vsel %vm1904, %v1890, %v1614
      %v1924 = vsel %vm1904, %v1891, %v1616
      %v1925 = vsel %vm1904, %v1892, %v1618
      %v1926 = vsel %vm1904, %v1893, %v1620
      %v1927 = vsel %vm1904, %v1894, %v1622
      %v1928 = vsel %vm1904, %v1895, %v1624
      %v1929 = vsel %vm1904, %v1896, %v1626
      %v1930 = vsel %vm1904, %v1897, %v1628
      %v1931 = vsel %vm1904, %v1898, %v1630
      %v1932 = vsel %vm1904, %v1899, %v1632
      %v1933 = vsel %vm1904, %v1900, %v1634
      %v1934 = vsel %vm1904, %v1901, %v1636
      %v1935 = vsel %vm1904, %v1902, %v1638
      %v1936 = vsel %vm1904, %v1903, %v1640
      %v1937 = vld [vmem:[%s3] sm:$0xff]
      %v1938 = vld [vmem:[%s3 + $0x8] sm:$0xff]
      %v1939 = vld [vmem:[%s3 + $0x10] sm:$0xff]
      %v1940 = vld [vmem:[%s3 + $0x18] sm:$0xff]
      %v1941 = vld [vmem:[%s3 + $0x20] sm:$0xff]
      %v1942 = vld [vmem:[%s3 + $0x28] sm:$0xff]
      %v1943 = vld [vmem:[%s3 + $0x30] sm:$0xff]
      %v1944 = vld [vmem:[%s3 + $0x38] sm:$0xff]
      %v1945 = vld [vmem:[%s3 + $0x40] sm:$0xff]
      %v1946 = vld [vmem:[%s4] sm:$0x1]
      %v1948 = vlaneseq
      %v1949 = vshrl.u32 %v1948, 7
      %v1950 = vsub.s32 0, %v1949
      %v1951 = vrot.slane %v1946, %v1950
      %vm1953 = vcmask 588800
      %v1955 = vsel %vm1953, %v1905, 0
      %v1958 = vsel %vm1953, %v1906, 0
      %v1961 = vsel %vm1953, %v1907, 0
      %v1964 = vsel %vm1953, %v1908, 0
      %v1967 = vsel %vm1953, %v1909, 0
      %v1970 = vsel %vm1953, %v1910, 0
      %v1973 = vsel %vm1953, %v1911, 0
      %v1976 = vsel %vm1953, %v1912, 0
      %v1979 = vsel %vm1953, %v1913, 0
      %v1982 = vsel %vm1953, %v1914, 0
      %v1985 = vsel %vm1953, %v1915, 0
      %v1988 = vsel %vm1953, %v1916, 0
      %v1991 = vsel %vm1953, %v1917, 0
      %v1994 = vsel %vm1953, %v1918, 0
      %v1997 = vsel %vm1953, %v1919, 0
      %v2000 = vsel %vm1953, %v1920, 0
      %v2003 = vsel %vm1953, %v1921, 0
      %v2006 = vsel %vm1953, %v1922, 0
      %v2009 = vsel %vm1953, %v1923, 0
      %v2012 = vsel %vm1953, %v1924, 0
      %v2015 = vsel %vm1953, %v1925, 0
      %v2018 = vsel %vm1953, %v1926, 0
      %v2021 = vsel %vm1953, %v1927, 0
      %v2024 = vsel %vm1953, %v1928, 0
      %v2027 = vsel %vm1953, %v1929, 0
      %v2030 = vsel %vm1953, %v1930, 0
      %v2033 = vsel %vm1953, %v1931, 0
      %v2036 = vsel %vm1953, %v1932, 0
      %v2039 = vsel %vm1953, %v1933, 0
      %v2042 = vsel %vm1953, %v1934, 0
      %v2045 = vsel %vm1953, %v1935, 0
      %v2048 = vsel %vm1953, %v1936, 0
      %2050 = vmatprep.subr.mxu0 0.0
      %2051 = vmatpush1.msra.mxu0 %v1937
      %2052 = vmatprep.subr.mxu0 0.0
      %2053 = vmatpush1.msra.mxu0 %v1938
      %2054 = vmatprep.subr.mxu0 0.0
      %2055 = vmatpush1.msra.mxu0 %v1939
      %2056 = vmatprep.subr.mxu0 0.0
      %2057 = vmatpush1.msra.mxu0 %v1940
      %2058 = vmatprep.subr.mxu0 0.0
      %2059 = vmatpush1.msra.mxu0 %v1941
      %2060 = vmatprep.subr.mxu0 0.0
      %2061 = vmatpush1.msra.mxu0 %v1942
      %2062 = vmatprep.subr.mxu0 0.0
      %2063 = vmatpush1.msra.mxu0 %v1943
      %2064 = vmatprep.subr.mxu0 0.0
      %2065 = vmatpush1.msra.mxu0 %v1944
      %2066 = vmatprep.subr.mxu0 0.0
      %2067 = vmatpush1.msra.mxu0 %v1945
      %2068 = vmatprep.subr.mxu0 0.0
      %2069 = vmatpush1.msra.mxu0 0.0
      %2070 = vmatprep.subr.mxu0 0.0
      %2071 = vmatpush1.msra.mxu0 0.0
      %2072 = vmatprep.subr.mxu0 0.0
      %2073 = vmatpush1.msra.mxu0 0.0
      %2074 = vmatprep.subr.mxu0 0.0
      %2075 = vmatpush1.msra.mxu0 0.0
      %2076 = vmatprep.subr.mxu0 0.0
      %2077 = vmatpush1.msra.mxu0 0.0
      %2078 = vmatprep.subr.mxu0 0.0
      %2079 = vmatpush1.msra.mxu0 0.0
      %2080 = vmatprep.subr.mxu0 0.0
      %2081 = vmatpush1.msra.mxu0 0.0
      %2082 = vmatprep.subr.mxu0 0.0
      %2083 = vmatpush1.msra.mxu0 0.0
      %2084 = vmatprep.subr.mxu0 0.0
      %2085 = vmatpush1.msra.mxu0 0.0
      %2086 = vmatprep.subr.mxu0 0.0
      %2087 = vmatpush1.msra.mxu0 0.0
      %2088 = vmatprep.subr.mxu0 0.0
      %2089 = vmatpush1.msra.mxu0 0.0
      %2090 = vmatprep.subr.mxu0 0.0
      %2091 = vmatpush1.msra.mxu0 0.0
      %2092 = vmatprep.subr.mxu0 0.0
      %2093 = vmatpush1.msra.mxu0 0.0
      %2094 = vmatprep.subr.mxu0 0.0
      %2095 = vmatpush1.msra.mxu0 0.0
      %2096 = vmatprep.subr.mxu0 0.0
      %2097 = vmatpush1.msra.mxu0 0.0
      %2098 = vmatprep.subr.mxu0 0.0
      %2099 = vmatpush1.msra.mxu0 0.0
      %2100 = vmatprep.subr.mxu0 0.0
      %2101 = vmatpush1.msra.mxu0 0.0
      %2102 = vmatprep.subr.mxu0 0.0
      %2103 = vmatpush1.msra.mxu0 0.0
      %2104 = vmatprep.subr.mxu0 0.0
      %2105 = vmatpush1.msra.mxu0 0.0
      %2106 = vmatprep.subr.mxu0 0.0
      %2107 = vmatpush1.msra.mxu0 0.0
      %2108 = vmatprep.subr.mxu0 0.0
      %2109 = vmatpush1.msra.mxu0 0.0
      %2110 = vmatprep.subr.mxu0 0.0
      %2111 = vmatpush1.msra.mxu0 0.0
      %2112 = vmatprep.subr.mxu0 0.0
      %2113 = vmatpush1.msra.mxu0 0.0
      %2114 = vmatprep.mubr.f32.mxu0 0.0
      %2115 = vmatmul.mubr.f32.gmra.mrb[0].mxu0 %v1955
      %v2116 = vpop.f32.mrb[0].mxu0
      %v2117 = vadd.f32 %v1951, %v2116
      %v2118 = vpop.f32.mrb[0].mxu0
      %2119 = vmatprep.mubr.f32.mxu0 0.0
      %2120 = vmatmul.mubr.f32.gmra.mrb[0].mxu0 %v1958
      %v2121 = vpop.f32.mrb[0].mxu0
      %v2122 = vadd.f32 %v1951, %v2121
      %v2123 = vpop.f32.mrb[0].mxu0
      %2124 = vmatprep.mubr.f32.mxu0 0.0
      %2125 = vmatmul.mubr.f32.gmra.mrb[0].mxu0 %v1961
      %v2126 = vpop.f32.mrb[0].mxu0
      %v2127 = vadd.f32 %v1951, %v2126
      %v2128 = vpop.f32.mrb[0].mxu0
      %2129 = vmatprep.mubr.f32.mxu0 0.0
      %2130 = vmatmul.mubr.f32.gmra.mrb[0].mxu0 %v1964
      %v2131 = vpop.f32.mrb[0].mxu0
      %v2132 = vadd.f32 %v1951, %v2131
      %v2133 = vpop.f32.mrb[0].mxu0
      %2134 = vmatprep.mubr.f32.mxu0 0.0
      %2135 = vmatmul.mubr.f32.gmra.mrb[0].mxu0 %v1967
      %v2136 = vpop.f32.mrb[0].mxu0
      %v2137 = vadd.f32 %v1951, %v2136
      %v2138 = vpop.f32.mrb[0].mxu0
      %2139 = vmatprep.mubr.f32.mxu0 0.0
      %2140 = vmatmul.mubr.f32.gmra.mrb[0].mxu0 %v1970
      %v2141 = vpop.f32.mrb[0].mxu0
      %v2142 = vadd.f32 %v1951, %v2141
      %v2143 = vpop.f32.mrb[0].mxu0
      %2144 = vmatprep.mubr.f32.mxu0 0.0
      %2145 = vmatmul.mubr.f32.gmra.mrb[0].mxu0 %v1973
      %v2146 = vpop.f32.mrb[0].mxu0
      %v2147 = vadd.f32 %v1951, %v2146
      %v2148 = vpop.f32.mrb[0].mxu0
      %2149 = vmatprep.mubr.f32.mxu0 0.0
      %2150 = vmatmul.mubr.f32.gmra.mrb[0].mxu0 %v1976
      %v2151 = vpop.f32.mrb[0].mxu0
      %v2152 = vadd.f32 %v1951, %v2151
      %v2153 = vpop.f32.mrb[0].mxu0
      %2154 = vmatprep.mubr.f32.mxu0 0.0
      %2155 = vmatmul.mubr.f32.gmra.mrb[0].mxu0 %v1979
      %v2156 = vpop.f32.mrb[0].mxu0
      %v2157 = vadd.f32 %v1951, %v2156
      %v2158 = vpop.f32.mrb[0].mxu0
      %2159 = vmatprep.mubr.f32.mxu0 0.0
      %2160 = vmatmul.mubr.f32.gmra.mrb[0].mxu0 %v1982
      %v2161 = vpop.f32.mrb[0].mxu0
      %v2162 = vadd.f32 %v1951, %v2161
      %v2163 = vpop.f32.mrb[0].mxu0
      %2164 = vmatprep.mubr.f32.mxu0 0.0
      %2165 = vmatmul.mubr.f32.gmra.mrb[0].mxu0 %v1985
      %v2166 = vpop.f32.mrb[0].mxu0
      %v2167 = vadd.f32 %v1951, %v2166
      %v2168 = vpop.f32.mrb[0].mxu0
      %2169 = vmatprep.mubr.f32.mxu0 0.0
      %2170 = vmatmul.mubr.f32.gmra.mrb[0].mxu0 %v1988
      %v2171 = vpop.f32.mrb[0].mxu0
      %v2172 = vadd.f32 %v1951, %v2171
      %v2173 = vpop.f32.mrb[0].mxu0
      %2174 = vmatprep.mubr.f32.mxu0 0.0
      %2175 = vmatmul.mubr.f32.gmra.mrb[0].mxu0 %v1991
      %v2176 = vpop.f32.mrb[0].mxu0
      %v2177 = vadd.f32 %v1951, %v2176
      %v2178 = vpop.f32.mrb[0].mxu0
      %2179 = vmatprep.mubr.f32.mxu0 0.0
      %2180 = vmatmul.mubr.f32.gmra.mrb[0].mxu0 %v1994
      %v2181 = vpop.f32.mrb[0].mxu0
      %v2182 = vadd.f32 %v1951, %v2181
      %v2183 = vpop.f32.mrb[0].mxu0
      %2184 = vmatprep.mubr.f32.mxu0 0.0
      %2185 = vmatmul.mubr.f32.gmra.mrb[0].mxu0 %v1997
      %v2186 = vpop.f32.mrb[0].mxu0
      %v2187 = vadd.f32 %v1951, %v2186
      %v2188 = vpop.f32.mrb[0].mxu0
      %2189 = vmatprep.mubr.f32.mxu0 0.0
      %2190 = vmatmul.mubr.f32.gmra.mrb[0].mxu0 %v2000
      %v2191 = vpop.f32.mrb[0].mxu0
      %v2192 = vadd.f32 %v1951, %v2191
      %v2193 = vpop.f32.mrb[0].mxu0
      %2194 = vmatprep.mubr.f32.mxu0 0.0
      %2195 = vmatmul.mubr.f32.gmra.mrb[0].mxu0 %v2003
      %v2196 = vpop.f32.mrb[0].mxu0
      %v2197 = vadd.f32 %v1951, %v2196
      %v2198 = vpop.f32.mrb[0].mxu0
      %2199 = vmatprep.mubr.f32.mxu0 0.0
      %2200 = vmatmul.mubr.f32.gmra.mrb[0].mxu0 %v2006
      %v2201 = vpop.f32.mrb[0].mxu0
      %v2202 = vadd.f32 %v1951, %v2201
      %v2203 = vpop.f32.mrb[0].mxu0
      %2204 = vmatprep.mubr.f32.mxu0 0.0
      %2205 = vmatmul.mubr.f32.gmra.mrb[0].mxu0 %v2009
      %v2206 = vpop.f32.mrb[0].mxu0
      %v2207 = vadd.f32 %v1951, %v2206
      %v2208 = vpop.f32.mrb[0].mxu0
      %2209 = vmatprep.mubr.f32.mxu0 0.0
      %2210 = vmatmul.mubr.f32.gmra.mrb[0].mxu0 %v2012
      %v2211 = vpop.f32.mrb[0].mxu0
      %v2212 = vadd.f32 %v1951, %v2211
      %v2213 = vpop.f32.mrb[0].mxu0
      %2214 = vmatprep.mubr.f32.mxu0 0.0
      %2215 = vmatmul.mubr.f32.gmra.mrb[0].mxu0 %v2015
      %v2216 = vpop.f32.mrb[0].mxu0
      %v2217 = vadd.f32 %v1951, %v2216
      %v2218 = vpop.f32.mrb[0].mxu0
      %2219 = vmatprep.mubr.f32.mxu0 0.0
      %2220 = vmatmul.mubr.f32.gmra.mrb[0].mxu0 %v2018
      %v2221 = vpop.f32.mrb[0].mxu0
      %v2222 = vadd.f32 %v1951, %v2221
      %v2223 = vpop.f32.mrb[0].mxu0
      %2224 = vmatprep.mubr.f32.mxu0 0.0
      %2225 = vmatmul.mubr.f32.gmra.mrb[0].mxu0 %v2021
      %v2226 = vpop.f32.mrb[0].mxu0
      %v2227 = vadd.f32 %v1951, %v2226
      %v2228 = vpop.f32.mrb[0].mxu0
      %2229 = vmatprep.mubr.f32.mxu0 0.0
      %2230 = vmatmul.mubr.f32.gmra.mrb[0].mxu0 %v2024
      %v2231 = vpop.f32.mrb[0].mxu0
      %v2232 = vadd.f32 %v1951, %v2231
      %v2233 = vpop.f32.mrb[0].mxu0
      %2234 = vmatprep.mubr.f32.mxu0 0.0
      %2235 = vmatmul.mubr.f32.gmra.mrb[0].mxu0 %v2027
      %v2236 = vpop.f32.mrb[0].mxu0
      %v2237 = vadd.f32 %v1951, %v2236
      %v2238 = vpop.f32.mrb[0].mxu0
      %2239 = vmatprep.mubr.f32.mxu0 0.0
      %2240 = vmatmul.mubr.f32.gmra.mrb[0].mxu0 %v2030
      %v2241 = vpop.f32.mrb[0].mxu0
      %v2242 = vadd.f32 %v1951, %v2241
      %v2243 = vpop.f32.mrb[0].mxu0
      %2244 = vmatprep.mubr.f32.mxu0 0.0
      %2245 = vmatmul.mubr.f32.gmra.mrb[0].mxu0 %v2033
      %v2246 = vpop.f32.mrb[0].mxu0
      %v2247 = vadd.f32 %v1951, %v2246
      %v2248 = vpop.f32.mrb[0].mxu0
      %2249 = vmatprep.mubr.f32.mxu0 0.0
      %2250 = vmatmul.mubr.f32.gmra.mrb[0].mxu0 %v2036
      %v2251 = vpop.f32.mrb[0].mxu0
      %v2252 = vadd.f32 %v1951, %v2251
      %v2253 = vpop.f32.mrb[0].mxu0
      %2254 = vmatprep.mubr.f32.mxu0 0.0
      %2255 = vmatmul.mubr.f32.gmra.mrb[0].mxu0 %v2039
      %v2256 = vpop.f32.mrb[0].mxu0
      %v2257 = vadd.f32 %v1951, %v2256
      %v2258 = vpop.f32.mrb[0].mxu0
      %2259 = vmatprep.mubr.f32.mxu0 0.0
      %2260 = vmatmul.mubr.f32.gmra.mrb[0].mxu0 %v2042
      %v2261 = vpop.f32.mrb[0].mxu0
      %v2262 = vadd.f32 %v1951, %v2261
      %v2263 = vpop.f32.mrb[0].mxu0
      %2264 = vmatprep.mubr.f32.mxu0 0.0
      %2265 = vmatmul.mubr.f32.gmra.mrb[0].mxu0 %v2045
      %v2266 = vpop.f32.mrb[0].mxu0
      %v2267 = vadd.f32 %v1951, %v2266
      %v2268 = vpop.f32.mrb[0].mxu0
      %2269 = vmatprep.mubr.f32.mxu0 0.0
      %2270 = vmatmul.mubr.f32.gmra.mrb[0].mxu0 %v2048
      %v2271 = vpop.f32.mrb[0].mxu0
      %v2272 = vadd.f32 %v1951, %v2271
      %v2273 = vpop.f32.mrb[0].mxu0
      %2274 = vdwg.mxu0
      %v2275 = vld [vmem:[%s320] sm:$0xff]
      %v2276 = vld [vmem:[%s320 + $0x8] sm:$0xff]
      %v2277 = vld [vmem:[%s320 + $0x10] sm:$0xff]
      %v2278 = vld [vmem:[%s320 + $0x18] sm:$0xff]
      %v2279 = vld [vmem:[%s320 + $0x20] sm:$0xff]
      %v2280 = vld [vmem:[%s320 + $0x28] sm:$0xff]
      %v2281 = vld [vmem:[%s320 + $0x30] sm:$0xff]
      %v2282 = vld [vmem:[%s320 + $0x38] sm:$0xff]
      %v2283 = vld [vmem:[%s320 + $0x40] sm:$0xff]
      %v2284 = vld [vmem:[%s320 + $0x48] sm:$0xff]
      %v2285 = vld [vmem:[%s320 + $0x50] sm:$0xff]
      %v2286 = vld [vmem:[%s320 + $0x58] sm:$0xff]
      %v2287 = vld [vmem:[%s320 + $0x60] sm:$0xff]
      %v2288 = vld [vmem:[%s320 + $0x68] sm:$0xff]
      %v2289 = vld [vmem:[%s320 + $0x70] sm:$0xff]
      %v2290 = vld [vmem:[%s320 + $0x78] sm:$0xff]
      %v2291 = vld [vmem:[%s320 + $0x80] sm:$0xff]
      %v2292 = vld [vmem:[%s320 + $0x88] sm:$0xff]
      %v2293 = vld [vmem:[%s320 + $0x90] sm:$0xff]
      %v2294 = vld [vmem:[%s320 + $0x98] sm:$0xff]
      %v2295 = vld [vmem:[%s320 + $0xa0] sm:$0xff]
      %v2296 = vld [vmem:[%s320 + $0xa8] sm:$0xff]
      %v2297 = vld [vmem:[%s320 + $0xb0] sm:$0xff]
      %v2298 = vld [vmem:[%s320 + $0xb8] sm:$0xff]
      %v2299 = vld [vmem:[%s320 + $0xc0] sm:$0xff]
      %v2300 = vld [vmem:[%s320 + $0xc8] sm:$0xff]
      %v2301 = vld [vmem:[%s320 + $0xd0] sm:$0xff]
      %v2302 = vld [vmem:[%s320 + $0xd8] sm:$0xff]
      %v2303 = vld [vmem:[%s320 + $0xe0] sm:$0xff]
      %v2304 = vld [vmem:[%s320 + $0xe8] sm:$0xff]
      %v2305 = vld [vmem:[%s320 + $0xf0] sm:$0xff]
      %v2306 = vld [vmem:[%s320 + $0xf8] sm:$0xff]
      %v2307 = vld [vmem:[%s6] sm:$0xf]
      %vm2308 = vcmask 31744
      %v2310 = vsel %vm2308, %v2275, 0
      %v2313 = vsel %vm2308, %v2276, 0
      %v2316 = vsel %vm2308, %v2277, 0
      %v2319 = vsel %vm2308, %v2278, 0
      %v2322 = vsel %vm2308, %v2279, 0
      %v2325 = vsel %vm2308, %v2280, 0
      %v2328 = vsel %vm2308, %v2281, 0
      %v2331 = vsel %vm2308, %v2282, 0
      %v2334 = vsel %vm2308, %v2283, 0
      %v2337 = vsel %vm2308, %v2284, 0
      %v2340 = vsel %vm2308, %v2285, 0
      %v2343 = vsel %vm2308, %v2286, 0
      %v2346 = vsel %vm2308, %v2287, 0
      %v2349 = vsel %vm2308, %v2288, 0
      %v2352 = vsel %vm2308, %v2289, 0
      %v2355 = vsel %vm2308, %v2290, 0
      %v2358 = vsel %vm2308, %v2291, 0
      %v2361 = vsel %vm2308, %v2292, 0
      %v2364 = vsel %vm2308, %v2293, 0
      %v2367 = vsel %vm2308, %v2294, 0
      %v2370 = vsel %vm2308, %v2295, 0
      %v2373 = vsel %vm2308, %v2296, 0
      %v2376 = vsel %vm2308, %v2297, 0
      %v2379 = vsel %vm2308, %v2298, 0
      %v2382 = vsel %vm2308, %v2299, 0
      %v2385 = vsel %vm2308, %v2300, 0
      %v2388 = vsel %vm2308, %v2301, 0
      %v2391 = vsel %vm2308, %v2302, 0
      %v2394 = vsel %vm2308, %v2303, 0
      %v2397 = vsel %vm2308, %v2304, 0
      %v2400 = vsel %vm2308, %v2305, 0
      %v2403 = vsel %vm2308, %v2306, 0
      %vm2405 = vcmask 1043456
      %v2407 = vsel %vm2405, %v2307, 0
      %2409 = vmatprep.subr.mxu0 0.0
      %2410 = vmatpush1.msra.mxu0 %v2407
      %2411 = vmatprep.subr.mxu0 0.0
      %2412 = vmatpush1.msra.mxu0 0.0
      %2413 = vmatprep.subr.mxu0 0.0
      %2414 = vmatpush1.msra.mxu0 0.0
      %2415 = vmatprep.subr.mxu0 0.0
      %2416 = vmatpush1.msra.mxu0 0.0
      %2417 = vmatprep.subr.mxu0 0.0
      %2418 = vmatpush1.msra.mxu0 0.0
      %2419 = vmatprep.subr.mxu0 0.0
      %2420 = vmatpush1.msra.mxu0 0.0
      %2421 = vmatprep.subr.mxu0 0.0
      %2422 = vmatpush1.msra.mxu0 0.0
      %2423 = vmatprep.subr.mxu0 0.0
      %2424 = vmatpush1.msra.mxu0 0.0
      %2425 = vmatprep.subr.mxu0 0.0
      %2426 = vmatpush1.msra.mxu0 0.0
      %2427 = vmatprep.subr.mxu0 0.0
      %2428 = vmatpush1.msra.mxu0 0.0
      %2429 = vmatprep.subr.mxu0 0.0
      %2430 = vmatpush1.msra.mxu0 0.0
      %2431 = vmatprep.subr.mxu0 0.0
      %2432 = vmatpush1.msra.mxu0 0.0
      %2433 = vmatprep.subr.mxu0 0.0
      %2434 = vmatpush1.msra.mxu0 0.0
      %2435 = vmatprep.subr.mxu0 0.0
      %2436 = vmatpush1.msra.mxu0 0.0
      %2437 = vmatprep.subr.mxu0 0.0
      %2438 = vmatpush1.msra.mxu0 0.0
      %2439 = vmatprep.subr.mxu0 0.0
      %2440 = vmatpush1.msra.mxu0 0.0
      %2441 = vmatprep.subr.mxu0 0.0
      %2442 = vmatpush1.msra.mxu0 0.0
      %2443 = vmatprep.subr.mxu0 0.0
      %2444 = vmatpush1.msra.mxu0 0.0
      %2445 = vmatprep.subr.mxu0 0.0
      %2446 = vmatpush1.msra.mxu0 0.0
      %2447 = vmatprep.subr.mxu0 0.0
      %2448 = vmatpush1.msra.mxu0 0.0
      %2449 = vmatprep.subr.mxu0 0.0
      %2450 = vmatpush1.msra.mxu0 0.0
      %2451 = vmatprep.subr.mxu0 0.0
      %2452 = vmatpush1.msra.mxu0 0.0
      %2453 = vmatprep.subr.mxu0 0.0
      %2454 = vmatpush1.msra.mxu0 0.0
      %2455 = vmatprep.subr.mxu0 0.0
      %2456 = vmatpush1.msra.mxu0 0.0
      %2457 = vmatprep.subr.mxu0 0.0
      %2458 = vmatpush1.msra.mxu0 0.0
      %2459 = vmatprep.subr.mxu0 0.0
      %2460 = vmatpush1.msra.mxu0 0.0
      %2461 = vmatprep.subr.mxu0 0.0
      %2462 = vmatpush1.msra.mxu0 0.0
      %2463 = vmatprep.subr.mxu0 0.0
      %2464 = vmatpush1.msra.mxu0 0.0
      %2465 = vmatprep.subr.mxu0 0.0
      %2466 = vmatpush1.msra.mxu0 0.0
      %2467 = vmatprep.subr.mxu0 0.0
      %2468 = vmatpush1.msra.mxu0 0.0
      %2469 = vmatprep.subr.mxu0 0.0
      %2470 = vmatpush1.msra.mxu0 0.0
      %2471 = vmatprep.subr.mxu0 0.0
      %2472 = vmatpush1.msra.mxu0 0.0
      %2473 = vmatprep.mubr.f32.mxu0 0.0
      %2474 = vmatmul.mubr.f32.gmra.mrb[0].mxu0 %v2310
      %v2475 = vpop.f32.mrb[0].mxu0
      %v2476 = vadd.f32 0.0, %v2475
      %v2477 = vpop.f32.mrb[0].mxu0
      %2478 = vmatprep.mubr.f32.mxu0 0.0
      %2479 = vmatmul.mubr.f32.gmra.mrb[0].mxu0 %v2313
      %v2480 = vpop.f32.mrb[0].mxu0
      %v2481 = vadd.f32 0.0, %v2480
      %v2482 = vpop.f32.mrb[0].mxu0
      %2483 = vmatprep.mubr.f32.mxu0 0.0
      %2484 = vmatmul.mubr.f32.gmra.mrb[0].mxu0 %v2316
      %v2485 = vpop.f32.mrb[0].mxu0
      %v2486 = vadd.f32 0.0, %v2485
      %v2487 = vpop.f32.mrb[0].mxu0
      %2488 = vmatprep.mubr.f32.mxu0 0.0
      %2489 = vmatmul.mubr.f32.gmra.mrb[0].mxu0 %v2319
      %v2490 = vpop.f32.mrb[0].mxu0
      %v2491 = vadd.f32 0.0, %v2490
      %v2492 = vpop.f32.mrb[0].mxu0
      %2493 = vmatprep.mubr.f32.mxu0 0.0
      %2494 = vmatmul.mubr.f32.gmra.mrb[0].mxu0 %v2322
      %v2495 = vpop.f32.mrb[0].mxu0
      %v2496 = vadd.f32 0.0, %v2495
      %v2497 = vpop.f32.mrb[0].mxu0
      %2498 = vmatprep.mubr.f32.mxu0 0.0
      %2499 = vmatmul.mubr.f32.gmra.mrb[0].mxu0 %v2325
      %v2500 = vpop.f32.mrb[0].mxu0
      %v2501 = vadd.f32 0.0, %v2500
      %v2502 = vpop.f32.mrb[0].mxu0
      %2503 = vmatprep.mubr.f32.mxu0 0.0
      %2504 = vmatmul.mubr.f32.gmra.mrb[0].mxu0 %v2328
      %v2505 = vpop.f32.mrb[0].mxu0
      %v2506 = vadd.f32 0.0, %v2505
      %v2507 = vpop.f32.mrb[0].mxu0
      %2508 = vmatprep.mubr.f32.mxu0 0.0
      %2509 = vmatmul.mubr.f32.gmra.mrb[0].mxu0 %v2331
      %v2510 = vpop.f32.mrb[0].mxu0
      %v2511 = vadd.f32 0.0, %v2510
      %v2512 = vpop.f32.mrb[0].mxu0
      %2513 = vmatprep.mubr.f32.mxu0 0.0
      %2514 = vmatmul.mubr.f32.gmra.mrb[0].mxu0 %v2334
      %v2515 = vpop.f32.mrb[0].mxu0
      %v2516 = vadd.f32 0.0, %v2515
      %v2517 = vpop.f32.mrb[0].mxu0
      %2518 = vmatprep.mubr.f32.mxu0 0.0
      %2519 = vmatmul.mubr.f32.gmra.mrb[0].mxu0 %v2337
      %v2520 = vpop.f32.mrb[0].mxu0
      %v2521 = vadd.f32 0.0, %v2520
      %v2522 = vpop.f32.mrb[0].mxu0
      %2523 = vmatprep.mubr.f32.mxu0 0.0
      %2524 = vmatmul.mubr.f32.gmra.mrb[0].mxu0 %v2340
      %v2525 = vpop.f32.mrb[0].mxu0
      %v2526 = vadd.f32 0.0, %v2525
      %v2527 = vpop.f32.mrb[0].mxu0
      %2528 = vmatprep.mubr.f32.mxu0 0.0
      %2529 = vmatmul.mubr.f32.gmra.mrb[0].mxu0 %v2343
      %v2530 = vpop.f32.mrb[0].mxu0
      %v2531 = vadd.f32 0.0, %v2530
      %v2532 = vpop.f32.mrb[0].mxu0
      %2533 = vmatprep.mubr.f32.mxu0 0.0
      %2534 = vmatmul.mubr.f32.gmra.mrb[0].mxu0 %v2346
      %v2535 = vpop.f32.mrb[0].mxu0
      %v2536 = vadd.f32 0.0, %v2535
      %v2537 = vpop.f32.mrb[0].mxu0
      %2538 = vmatprep.mubr.f32.mxu0 0.0
      %2539 = vmatmul.mubr.f32.gmra.mrb[0].mxu0 %v2349
      %v2540 = vpop.f32.mrb[0].mxu0
      %v2541 = vadd.f32 0.0, %v2540
      %v2542 = vpop.f32.mrb[0].mxu0
      %2543 = vmatprep.mubr.f32.mxu0 0.0
      %2544 = vmatmul.mubr.f32.gmra.mrb[0].mxu0 %v2352
      %v2545 = vpop.f32.mrb[0].mxu0
      %v2546 = vadd.f32 0.0, %v2545
      %v2547 = vpop.f32.mrb[0].mxu0
      %2548 = vmatprep.mubr.f32.mxu0 0.0
      %2549 = vmatmul.mubr.f32.gmra.mrb[0].mxu0 %v2355
      %v2550 = vpop.f32.mrb[0].mxu0
      %v2551 = vadd.f32 0.0, %v2550
      %v2552 = vpop.f32.mrb[0].mxu0
      %2553 = vmatprep.mubr.f32.mxu0 0.0
      %2554 = vmatmul.mubr.f32.gmra.mrb[0].mxu0 %v2358
      %v2555 = vpop.f32.mrb[0].mxu0
      %v2556 = vadd.f32 0.0, %v2555
      %v2557 = vpop.f32.mrb[0].mxu0
      %2558 = vmatprep.mubr.f32.mxu0 0.0
      %2559 = vmatmul.mubr.f32.gmra.mrb[0].mxu0 %v2361
      %v2560 = vpop.f32.mrb[0].mxu0
      %v2561 = vadd.f32 0.0, %v2560
      %v2562 = vpop.f32.mrb[0].mxu0
      %2563 = vmatprep.mubr.f32.mxu0 0.0
      %2564 = vmatmul.mubr.f32.gmra.mrb[0].mxu0 %v2364
      %v2565 = vpop.f32.mrb[0].mxu0
      %v2566 = vadd.f32 0.0, %v2565
      %v2567 = vpop.f32.mrb[0].mxu0
      %2568 = vmatprep.mubr.f32.mxu0 0.0
      %2569 = vmatmul.mubr.f32.gmra.mrb[0].mxu0 %v2367
      %v2570 = vpop.f32.mrb[0].mxu0
      %v2571 = vadd.f32 0.0, %v2570
      %v2572 = vpop.f32.mrb[0].mxu0
      %2573 = vmatprep.mubr.f32.mxu0 0.0
      %2574 = vmatmul.mubr.f32.gmra.mrb[0].mxu0 %v2370
      %v2575 = vpop.f32.mrb[0].mxu0
      %v2576 = vadd.f32 0.0, %v2575
      %v2577 = vpop.f32.mrb[0].mxu0
      %2578 = vmatprep.mubr.f32.mxu0 0.0
      %2579 = vmatmul.mubr.f32.gmra.mrb[0].mxu0 %v2373
      %v2580 = vpop.f32.mrb[0].mxu0
      %v2581 = vadd.f32 0.0, %v2580
      %v2582 = vpop.f32.mrb[0].mxu0
      %2583 = vmatprep.mubr.f32.mxu0 0.0
      %2584 = vmatmul.mubr.f32.gmra.mrb[0].mxu0 %v2376
      %v2585 = vpop.f32.mrb[0].mxu0
      %v2586 = vadd.f32 0.0, %v2585
      %v2587 = vpop.f32.mrb[0].mxu0
      %2588 = vmatprep.mubr.f32.mxu0 0.0
      %2589 = vmatmul.mubr.f32.gmra.mrb[0].mxu0 %v2379
      %v2590 = vpop.f32.mrb[0].mxu0
      %v2591 = vadd.f32 0.0, %v2590
      %v2592 = vpop.f32.mrb[0].mxu0
      %2593 = vmatprep.mubr.f32.mxu0 0.0
      %2594 = vmatmul.mubr.f32.gmra.mrb[0].mxu0 %v2382
      %v2595 = vpop.f32.mrb[0].mxu0
      %v2596 = vadd.f32 0.0, %v2595
      %v2597 = vpop.f32.mrb[0].mxu0
      %2598 = vmatprep.mubr.f32.mxu0 0.0
      %2599 = vmatmul.mubr.f32.gmra.mrb[0].mxu0 %v2385
      %v2600 = vpop.f32.mrb[0].mxu0
      %v2601 = vadd.f32 0.0, %v2600
      %v2602 = vpop.f32.mrb[0].mxu0
      %2603 = vmatprep.mubr.f32.mxu0 0.0
      %2604 = vmatmul.mubr.f32.gmra.mrb[0].mxu0 %v2388
      %v2605 = vpop.f32.mrb[0].mxu0
      %v2606 = vadd.f32 0.0, %v2605
      %v2607 = vpop.f32.mrb[0].mxu0
      %2608 = vmatprep.mubr.f32.mxu0 0.0
      %2609 = vmatmul.mubr.f32.gmra.mrb[0].mxu0 %v2391
      %v2610 = vpop.f32.mrb[0].mxu0
      %v2611 = vadd.f32 0.0, %v2610
      %v2612 = vpop.f32.mrb[0].mxu0
      %2613 = vmatprep.mubr.f32.mxu0 0.0
      %2614 = vmatmul.mubr.f32.gmra.mrb[0].mxu0 %v2394
      %v2615 = vpop.f32.mrb[0].mxu0
      %v2616 = vadd.f32 0.0, %v2615
      %v2617 = vpop.f32.mrb[0].mxu0
      %2618 = vmatprep.mubr.f32.mxu0 0.0
      %2619 = vmatmul.mubr.f32.gmra.mrb[0].mxu0 %v2397
      %v2620 = vpop.f32.mrb[0].mxu0
      %v2621 = vadd.f32 0.0, %v2620
      %v2622 = vpop.f32.mrb[0].mxu0
      %2623 = vmatprep.mubr.f32.mxu0 0.0
      %2624 = vmatmul.mubr.f32.gmra.mrb[0].mxu0 %v2400
      %v2625 = vpop.f32.mrb[0].mxu0
      %v2626 = vadd.f32 0.0, %v2625
      %v2627 = vpop.f32.mrb[0].mxu0
      %2628 = vmatprep.mubr.f32.mxu0 0.0
      %2629 = vmatmul.mubr.f32.gmra.mrb[0].mxu0 %v2403
      %v2630 = vpop.f32.mrb[0].mxu0
      %v2631 = vadd.f32 0.0, %v2630
      %v2632 = vpop.f32.mrb[0].mxu0
      %2633 = vdwg.mxu0
      %v2634 = vadd.f32 %v2117, %v2476
      %v2635 = vadd.f32 %v2122, %v2481
      %v2636 = vadd.f32 %v2127, %v2486
      %v2637 = vadd.f32 %v2132, %v2491
      %v2638 = vadd.f32 %v2137, %v2496
      %v2639 = vadd.f32 %v2142, %v2501
      %v2640 = vadd.f32 %v2147, %v2506
      %v2641 = vadd.f32 %v2152, %v2511
      %v2642 = vadd.f32 %v2157, %v2516
      %v2643 = vadd.f32 %v2162, %v2521
      %v2644 = vadd.f32 %v2167, %v2526
      %v2645 = vadd.f32 %v2172, %v2531
      %v2646 = vadd.f32 %v2177, %v2536
      %v2647 = vadd.f32 %v2182, %v2541
      %v2648 = vadd.f32 %v2187, %v2546
      %v2649 = vadd.f32 %v2192, %v2551
      %v2650 = vadd.f32 %v2197, %v2556
      %v2651 = vadd.f32 %v2202, %v2561
      %v2652 = vadd.f32 %v2207, %v2566
      %v2653 = vadd.f32 %v2212, %v2571
      %v2654 = vadd.f32 %v2217, %v2576
      %v2655 = vadd.f32 %v2222, %v2581
      %v2656 = vadd.f32 %v2227, %v2586
      %v2657 = vadd.f32 %v2232, %v2591
      %v2658 = vadd.f32 %v2237, %v2596
      %v2659 = vadd.f32 %v2242, %v2601
      %v2660 = vadd.f32 %v2247, %v2606
      %v2661 = vadd.f32 %v2252, %v2611
      %v2662 = vadd.f32 %v2257, %v2616
      %v2663 = vadd.f32 %v2262, %v2621
      %v2664 = vadd.f32 %v2267, %v2626
      %v2665 = vadd.f32 %v2272, %v2631
      %v2666 = vld [vmem:[%s7] sm:$0x1]
      %v2668 = vlaneseq
      %v2669 = vshrl.u32 %v2668, 7
      %v2670 = vsub.s32 0, %v2669
      %v2671 = vrot.slane %v2666, %v2670
      %v2673 = vadd.f32 %v2634, %v2671
      %v2674 = vadd.f32 %v2635, %v2671
      %v2675 = vadd.f32 %v2636, %v2671
      %v2676 = vadd.f32 %v2637, %v2671
      %v2677 = vadd.f32 %v2638, %v2671
      %v2678 = vadd.f32 %v2639, %v2671
      %v2679 = vadd.f32 %v2640, %v2671
      %v2680 = vadd.f32 %v2641, %v2671
      %v2681 = vadd.f32 %v2642, %v2671
      %v2682 = vadd.f32 %v2643, %v2671
      %v2683 = vadd.f32 %v2644, %v2671
      %v2684 = vadd.f32 %v2645, %v2671
      %v2685 = vadd.f32 %v2646, %v2671
      %v2686 = vadd.f32 %v2647, %v2671
      %v2687 = vadd.f32 %v2648, %v2671
      %v2688 = vadd.f32 %v2649, %v2671
      %v2689 = vadd.f32 %v2650, %v2671
      %v2690 = vadd.f32 %v2651, %v2671
      %v2691 = vadd.f32 %v2652, %v2671
      %v2692 = vadd.f32 %v2653, %v2671
      %v2693 = vadd.f32 %v2654, %v2671
      %v2694 = vadd.f32 %v2655, %v2671
      %v2695 = vadd.f32 %v2656, %v2671
      %v2696 = vadd.f32 %v2657, %v2671
      %v2697 = vadd.f32 %v2658, %v2671
      %v2698 = vadd.f32 %v2659, %v2671
      %v2699 = vadd.f32 %v2660, %v2671
      %v2700 = vadd.f32 %v2661, %v2671
      %v2701 = vadd.f32 %v2662, %v2671
      %v2702 = vadd.f32 %v2663, %v2671
      %v2703 = vadd.f32 %v2664, %v2671
      %v2704 = vadd.f32 %v2665, %v2671
      %2705 = vst.msk [vmem:[%s325] sm:$0xff] %vm1673, %v2673
      %2706 = vst.msk [vmem:[%s325 + $0x8] sm:$0xff] %vm1673, %v2674
      %2707 = vst.msk [vmem:[%s325 + $0x10] sm:$0xff] %vm1673, %v2675
      %2708 = vst.msk [vmem:[%s325 + $0x18] sm:$0xff] %vm1673, %v2676
      %2709 = vst.msk [vmem:[%s325 + $0x20] sm:$0xff] %vm1673, %v2677
      %2710 = vst.msk [vmem:[%s325 + $0x28] sm:$0xff] %vm1673, %v2678
      %2711 = vst.msk [vmem:[%s325 + $0x30] sm:$0xff] %vm1673, %v2679
      %2712 = vst.msk [vmem:[%s325 + $0x38] sm:$0xff] %vm1673, %v2680
      %2713 = vst.msk [vmem:[%s325 + $0x40] sm:$0xff] %vm1673, %v2681
      %2714 = vst.msk [vmem:[%s325 + $0x48] sm:$0xff] %vm1673, %v2682
      %2715 = vst.msk [vmem:[%s325 + $0x50] sm:$0xff] %vm1673, %v2683
      %2716 = vst.msk [vmem:[%s325 + $0x58] sm:$0xff] %vm1673, %v2684
      %2717 = vst.msk [vmem:[%s325 + $0x60] sm:$0xff] %vm1673, %v2685
      %2718 = vst.msk [vmem:[%s325 + $0x68] sm:$0xff] %vm1673, %v2686
      %2719 = vst.msk [vmem:[%s325 + $0x70] sm:$0xff] %vm1673, %v2687
      %2720 = vst.msk [vmem:[%s325 + $0x78] sm:$0xff] %vm1673, %v2688
      %2721 = vst.msk [vmem:[%s325 + $0x80] sm:$0xff] %vm1673, %v2689
      %2722 = vst.msk [vmem:[%s325 + $0x88] sm:$0xff] %vm1673, %v2690
      %2723 = vst.msk [vmem:[%s325 + $0x90] sm:$0xff] %vm1673, %v2691
      %2724 = vst.msk [vmem:[%s325 + $0x98] sm:$0xff] %vm1673, %v2692
      %2725 = vst.msk [vmem:[%s325 + $0xa0] sm:$0xff] %vm1673, %v2693
      %2726 = vst.msk [vmem:[%s325 + $0xa8] sm:$0xff] %vm1673, %v2694
      %2727 = vst.msk [vmem:[%s325 + $0xb0] sm:$0xff] %vm1673, %v2695
      %2728 = vst.msk [vmem:[%s325 + $0xb8] sm:$0xff] %vm1673, %v2696
      %2729 = vst.msk [vmem:[%s325 + $0xc0] sm:$0xff] %vm1673, %v2697
      %2730 = vst.msk [vmem:[%s325 + $0xc8] sm:$0xff] %vm1673, %v2698
      %2731 = vst.msk [vmem:[%s325 + $0xd0] sm:$0xff] %vm1673, %v2699
      %2732 = vst.msk [vmem:[%s325 + $0xd8] sm:$0xff] %vm1673, %v2700
      %2733 = vst.msk [vmem:[%s325 + $0xe0] sm:$0xff] %vm1673, %v2701
      %2734 = vst.msk [vmem:[%s325 + $0xe8] sm:$0xff] %vm1673, %v2702
      %2735 = vst.msk [vmem:[%s325 + $0xf0] sm:$0xff] %vm1673, %v2703
      %2736 = vst.msk [vmem:[%s325 + $0xf8] sm:$0xff] %vm1673, %v2704
      %p2737 = scmp.lt.s32.totalorder %s19, 1
      %s2738 = scalar_select %p2737, %s19, 1
      %s2739 = smul.addr %s2738, 32
      %s2740 = smul.addr %s2739, 8
      %s2741 = scalar_lea.vmem %s8, %s2740
      // Predicated region
      $region53: #{basic_block_forward.5} parent=51 // pred_check
        %p2742 = pneg %p215
      $region54: #{basic_block_forward.5} parent=51 // pred_check_branch
        %2744 = sbr.rel (%p2742) target = $region56
      $region55: #{basic_block_forward.5} parent=51 // pred_region
        _
      $region56: #{basic_block_forward.5} parent=51 // pred_fallthru
        _
    $region52: #{basic_block_forward.5} parent=5 // pred_fallthru
      _
    %p2745 = scmp.le.s32.totalorder 2, %s14
    // Predicated region
    $region57: #{basic_block_forward.5} parent=5 // pred_check
      %p2746 = pneg %p2745
    $region58: #{basic_block_forward.5} parent=5 // pred_check_branch
      %2748 = sbr.rel (%p2746) target = $region60
    $region59: #{basic_block_forward.5} parent=5 // pred_region
      %s2749 = ssub.s32 %s14, 2
      // Predicated region
      $region61: #{basic_block_forward.5} parent=59 // pred_check
        %p2750 = pneg %p221
      $region62: #{basic_block_forward.5} parent=59 // pred_check_branch
        %2752 = sbr.rel (%p2750) target = $region64
      $region63: #{basic_block_forward.5} parent=59 // pred_region
        %p2753 = scmp.lt.s32.totalorder %s20, 1
        %s2754 = scalar_select %p2753, %s20, 1
        %s2755 = smul.addr %s2754, 32
        %s2756 = smul.addr %s2755, 8
        %s2757 = scalar_lea.vmem %s8, %s2756
      $region64: #{basic_block_forward.5} parent=59 // pred_fallthru
        _
    $region60: #{basic_block_forward.5} parent=5 // pred_fallthru
      _
  $region6: #{basic_block_forward.5} parent=0 // loop_footer
    %s18 = sadd.s32 1, %s14
  $region7: #{basic_block_forward.5} parent=0 // loop_footer_branch
    %13 = sbr.rel target = $region3
  $region8: #{basic_block_forward.5} parent=0 // loop_exit
    _

</llo_original>
